<compile_context>
chip_gen: v7x
topology: tpu7x:2x2x1
jax: 0.10.0
libtpu: 0.0.40
codegen_flags: <defaults>
</compile_context>

<pallas_src>
import functools

import jax
import jax.numpy as jnp
from jax.experimental import pallas as pl
from jax.experimental.pallas import tpu as pltpu


# ----------------------------------------------------------------------------
# Fused kernel: layer-0 input projection + T-step multi-layer LSTM + fc2
# ----------------------------------------------------------------------------
def _fused_kernel(*refs, num_layers, hidden, seq_len, batch, compute_dtype):
    H = hidden
    L = num_layers
    # ---- parse refs: inputs ..., outputs ..., scratch ----
    w0_ref, b0_ref, whh0_ref = refs[0], refs[1], refs[2]
    p = 3
    upper = []                                   # layers 1..L-1: (wih, whh, b)
    for _ in range(L - 1):
        upper.append((refs[p], refs[p + 1], refs[p + 2]))
        p += 3
    h0_ref, c0_ref, x_ref, fc2w_ref, fc2b_ref = refs[p:p + 5]
    p += 5
    logits_ref, hn_ref, cn_ref = refs[p:p + 3]
    p += 3
    xproj_ref = refs[p]                          # VMEM scratch (T*Bp, 4H) f32

    # Layer-0 input projection for all timesteps at once (fc1 and biases folded
    # in).  Staged in VMEM scratch so it does not pin vregs across the unrolled
    # recurrence.
    xproj_ref[...] = (
        jnp.dot(x_ref[...], w0_ref[...], preferred_element_type=jnp.float32)
        + b0_ref[...]
    )

    # Recurrent state: f32 master copies + compute-dtype copies for the MXU.
    h = [h0_ref[l] for l in range(L)]            # each (Bp, H) f32
    c = [c0_ref[l] for l in range(L)]
    hb = [h[l].astype(compute_dtype) for l in range(L)]

    def gate_update(gates, c_prev):
        # gate columns pre-permuted to [i, f, o, g]:
        # one sigmoid over (Bp, 3H), one tanh over (Bp, H).
        ifo = jax.nn.sigmoid(gates[:, :3 * H])
        g = jnp.tanh(gates[:, 3 * H:])
        i = ifo[:, 0 * H:1 * H]
        f = ifo[:, 1 * H:2 * H]
        o = ifo[:, 2 * H:3 * H]
        c_new = f * c_prev + i * g
        h_new = o * jnp.tanh(c_new)
        return h_new, c_new

    # Whole recurrence unrolled inside one kernel invocation (T, L are small).
    for t in range(seq_len):
        # layer 0: input contribution precomputed; one recurrent matmul.
        gates0 = xproj_ref[pl.ds(t * batch, batch), :] + jnp.dot(
            hb[0], whh0_ref[...], preferred_element_type=jnp.float32)
        h[0], c[0] = gate_update(gates0, c[0])
        hb[0] = h[0].astype(compute_dtype)
        # layers 1..L-1: two (H,4H) matmuls + add (no per-step concat).
        for l in range(1, L):
            wih_ref, whh_ref, bl_ref = upper[l - 1]
            gates = (
                jnp.dot(hb[l - 1], wih_ref[...],
                        preferred_element_type=jnp.float32)
                + jnp.dot(hb[l], whh_ref[...],
                          preferred_element_type=jnp.float32)
                + bl_ref[...]
            )
            h[l], c[l] = gate_update(gates, c[l])
            hb[l] = h[l].astype(compute_dtype)

    for l in range(L):
        hn_ref[l] = h[l]
        cn_ref[l] = c[l]

    # fc2 on the last timestep's last-layer hidden state (lane-padded output).
    logits_ref[...] = (
        jnp.dot(hb[L - 1], fc2w_ref[...], preferred_element_type=jnp.float32)
        + fc2b_ref[...]
    )


# ----------------------------------------------------------------------------
# One-time weight preparation (hoisted out of the per-call forward path)
# ----------------------------------------------------------------------------
def prepare_params(params, compute_dtype=jnp.bfloat16):
    """Fold fc1 into layer 0, transpose/permute/pad all weights, cast matmul
    operands to `compute_dtype`.  Call once; reuse the result every forward."""
    H = params["fc1_w"].shape[0]
    D = params["fc1_w"].shape[1]
    L = params["w_ih"].shape[0]
    A = params["fc2_w"].shape[0]
    Ap = ((A + 127) // 128) * 128

    # gate-column permutation: PyTorch order [i, f, g, o] -> [i, f, o, g]
    perm = jnp.concatenate([
        jnp.arange(0, H), jnp.arange(H, 2 * H),
        jnp.arange(3 * H, 4 * H), jnp.arange(2 * H, 3 * H)])

    # fold fc1 into the layer-0 input projection (valid: no activation between)
    w0eff = jnp.transpose(params["w_ih"][0] @ params["fc1_w"])[:, perm]      # (D,4H)
    b0eff = (params["b"][0]
             + params["w_ih"][0] @ params["fc1_b"])[perm].reshape(1, 4 * H)  # (1,4H)
    whh0_t = jnp.transpose(params["w_hh"][0])[:, perm]                       # (H,4H)

    layer_args = []
    for l in range(1, L):
        wih_t = jnp.transpose(params["w_ih"][l])[:, perm]                    # (H,4H)
        whh_t = jnp.transpose(params["w_hh"][l])[:, perm]                    # (H,4H)
        bl = params["b"][l][perm].reshape(1, 4 * H)
        layer_args += [wih_t.astype(compute_dtype),
                       whh_t.astype(compute_dtype),
                       bl.astype(jnp.float32)]

    fc2_wt = jnp.zeros((H, Ap), jnp.float32).at[:, :A].set(
        jnp.transpose(params["fc2_w"]))
    fc2_b = jnp.zeros((1, Ap), jnp.float32).at[0, :A].set(params["fc2_b"])

    return {
        "L": L, "H": H, "D": D, "A": A, "Ap": Ap,
        "w0eff": w0eff.astype(compute_dtype),
        "b0eff": b0eff.astype(jnp.float32),
        "whh0_t": whh0_t.astype(compute_dtype),
        "layer_args": tuple(layer_args),
        "fc2_wt": fc2_wt.astype(compute_dtype),
        "fc2_b": fc2_b,
    }


# ----------------------------------------------------------------------------
# Wrapper: MyRecurrent.forward  (takes prepared params)
# ----------------------------------------------------------------------------
def my_recurrent_forward(prep, obs, state=None):
    """obs: (B, D) or (B, T, D).  Returns (logits (B, A),
    {'hidden','cell'} each (B, L, H)) — same semantics as the PyTorch module."""
    obs = jnp.asarray(obs, jnp.float32)
    if obs.ndim == 2:
        obs = obs[:, None, :]                    # unsqueeze(-2)
    B, T, D = obs.shape
    H, L, A, Ap = prep["H"], prep["L"], prep["A"], prep["Ap"]
    cdt = prep["whh0_t"].dtype                   # MXU operand dtype

    Bp = ((B + 7) // 8) * 8                      # pad batch to sublane multiple

    # pad batch and go time-major-flat: row index = t*Bp + b
    obs_p = jnp.zeros((Bp, T, D), jnp.float32).at[:B].set(obs)
    obs_tm = jnp.transpose(obs_p, (1, 0, 2)).reshape(T * Bp, D).astype(cdt)

    if state is None:
        h0 = jnp.zeros((L, Bp, H), jnp.float32)
        c0 = jnp.zeros((L, Bp, H), jnp.float32)
    else:
        h0 = jnp.zeros((L, Bp, H), jnp.float32).at[:, :B].set(
            jnp.transpose(jnp.asarray(state["hidden"], jnp.float32), (1, 0, 2)))
        c0 = jnp.zeros((L, Bp, H), jnp.float32).at[:, :B].set(
            jnp.transpose(jnp.asarray(state["cell"], jnp.float32), (1, 0, 2)))

    kernel = functools.partial(
        _fused_kernel, num_layers=L, hidden=H, seq_len=T, batch=Bp,
        compute_dtype=cdt)

    base = 3 + 3 * (L - 1)                       # input index of h0 (then c0)
    logits_p, h_n, c_n = pl.pallas_call(
        kernel,
        out_shape=(
            jax.ShapeDtypeStruct((Bp, Ap), jnp.float32),
            jax.ShapeDtypeStruct((L, Bp, H), jnp.float32),
            jax.ShapeDtypeStruct((L, Bp, H), jnp.float32),
        ),
        scratch_shapes=[pltpu.VMEM((T * Bp, 4 * H), jnp.float32)],
        input_output_aliases={base: 1, base + 1: 2},   # h0->h_n, c0->c_n
    )(prep["w0eff"], prep["b0eff"], prep["whh0_t"], *prep["layer_args"],
      h0, c0, obs_tm, prep["fc2_wt"], prep["fc2_b"])

    logits = logits_p[:B, :A]
    hidden = jnp.transpose(h_n[:, :B], (1, 0, 2))   # (B, L, H)
    cell = jnp.transpose(c_n[:, :B], (1, 0, 2))
    return logits, {"hidden": hidden, "cell": cell}


# ----------------------------------------------------------------------------
# Deterministic parameter init (shapes follow nn.Linear / nn.LSTM)
# ----------------------------------------------------------------------------
def init_params(key, layer_num, state_dim, action_dim, hidden):
    ks = jax.random.split(key, 8)
    scale = 0.1
    fc1_w = scale * jax.random.normal(ks[0], (hidden, state_dim), jnp.float32)
    fc1_b = scale * jax.random.normal(ks[1], (hidden,), jnp.float32)
    fc2_w = scale * jax.random.normal(ks[2], (action_dim, hidden), jnp.float32)
    fc2_b = scale * jax.random.normal(ks[3], (action_dim,), jnp.float32)
    w_ih = scale * jax.random.normal(ks[4], (layer_num, 4 * hidden, hidden), jnp.float32)
    w_hh = scale * jax.random.normal(ks[5], (layer_num, 4 * hidden, hidden), jnp.float32)
    b_ih = scale * jax.random.normal(ks[6], (layer_num, 4 * hidden), jnp.float32)
    b_hh = scale * jax.random.normal(ks[7], (layer_num, 4 * hidden), jnp.float32)
    return {
        "fc1_w": fc1_w, "fc1_b": fc1_b,
        "fc2_w": fc2_w, "fc2_b": fc2_b,
        "w_ih": w_ih, "w_hh": w_hh, "b": b_ih + b_hh,
    }


# ----------------------------------------------------------------------------
# Pure-JAX reference (mirrors the PyTorch module exactly, f32)
# ----------------------------------------------------------------------------
def reference_forward(params, obs, state=None):
    obs = jnp.asarray(obs, jnp.float32)
    if obs.ndim == 2:
        obs = obs[:, None, :]
    B, T, D = obs.shape
    H = params["fc1_w"].shape[0]
    L = params["w_ih"].shape[0]
    x = obs @ params["fc1_w"].T + params["fc1_b"]
    if state is None:
        h = jnp.zeros((L, B, H), jnp.float32)
        c = jnp.zeros((L, B, H), jnp.float32)
    else:
        h = jnp.transpose(state["hidden"], (1, 0, 2))
        c = jnp.transpose(state["cell"], (1, 0, 2))
    last = None
    for t in range(T):
        xt = x[:, t]
        h_list, c_list = [], []
        for l in range(L):
            gates = xt @ params["w_ih"][l].T + h[l] @ params["w_hh"][l].T + params["b"][l]
            i = jax.nn.sigmoid(gates[:, 0 * H:1 * H])
            f = jax.nn.sigmoid(gates[:, 1 * H:2 * H])
            g = jnp.tanh(gates[:, 2 * H:3 * H])
            o = jax.nn.sigmoid(gates[:, 3 * H:4 * H])
            cn = f * c[l] + i * g
            hn = o * jnp.tanh(cn)
            h_list.append(hn)
            c_list.append(cn)
            xt = hn
        h = jnp.stack(h_list)
        c = jnp.stack(c_list)
        last = xt
    logits = last @ params["fc2_w"].T + params["fc2_b"]
    return logits, {"hidden": jnp.transpose(h, (1, 0, 2)),
                    "cell": jnp.transpose(c, (1, 0, 2))}


if __name__ == "__main__":
    layer_num = 2
    state_dim = 16       # int(np.prod(state_shape)) with state_shape=16
    action_dim = 4       # int(np.prod(action_shape)) with action_shape=4
    hidden = 128         # module default hidden_layer_size
    B, T = 2, 8

    key = jax.random.PRNGKey(0)
    pkey, okey, okey2 = jax.random.split(key, 3)
    params = init_params(pkey, layer_num, state_dim, action_dim, hidden)

    obs = jax.random.normal(okey, (B, T, state_dim), jnp.float32)     # training mode
    obs2 = jax.random.normal(okey2, (B, state_dim), jnp.float32)      # eval mode

    ref_logits, ref_st = reference_forward(params, obs)
    ref_logits2, ref_st2 = reference_forward(params, obs2, state=ref_st)

    # ---- f32 MXU path: strict check of kernel structure / weight folding ----
    prep32 = prepare_params(params, compute_dtype=jnp.float32)
    logits32, st32 = my_recurrent_forward(prep32, obs, state=None)
    jax.block_until_ready((logits32, st32))
    assert logits32.shape == (B, action_dim)
    assert st32["hidden"].shape == (B, layer_num, hidden)
    assert st32["cell"].shape == (B, layer_num, hidden)
    assert jnp.allclose(logits32, ref_logits, atol=1e-4, rtol=1e-4)
    assert jnp.allclose(st32["hidden"], ref_st["hidden"], atol=1e-4, rtol=1e-4)
    assert jnp.allclose(st32["cell"], ref_st["cell"], atol=1e-4, rtol=1e-4)

    # eval-mode call (obs (B, D)) with carried state — f32 path, strict check
    logits32b, st32b = my_recurrent_forward(prep32, obs2, state=ref_st)
    jax.block_until_ready((logits32b, st32b))
    assert jnp.allclose(logits32b, ref_logits2, atol=1e-4, rtol=1e-4)
    assert jnp.allclose(st32b["hidden"], ref_st2["hidden"], atol=1e-4, rtol=1e-4)
    assert jnp.allclose(st32b["cell"], ref_st2["cell"], atol=1e-4, rtol=1e-4)

    # ---- bf16 MXU path (default / fast): tolerance relaxed per perf review
    #      (bf16 operand rounding accumulated over a 2-layer x 8-step recurrence)
    prepbf = prepare_params(params)                       # bfloat16 operands
    logitsbf, stbf = my_recurrent_forward(prepbf, obs, state=None)
    jax.block_until_ready((logitsbf, stbf))
    assert jnp.allclose(logitsbf, ref_logits, atol=5e-2, rtol=5e-2)
    assert jnp.allclose(stbf["hidden"], ref_st["hidden"], atol=5e-2, rtol=5e-2)
    assert jnp.allclose(stbf["cell"], ref_st["cell"], atol=5e-2, rtol=5e-2)

    print("KERNEL_OK")
</pallas_src>

<mosaic_0001>
module attributes {stable_mosaic.version = 11 : i64} {
  func.func @_fused_kernel(%arg0: memref<16x512xf32, #tpu.memory_space<vmem>>, %arg1: memref<1x512xf32, #tpu.memory_space<vmem>>, %arg2: memref<128x512xf32, #tpu.memory_space<vmem>>, %arg3: memref<128x512xf32, #tpu.memory_space<vmem>>, %arg4: memref<128x512xf32, #tpu.memory_space<vmem>>, %arg5: memref<1x512xf32, #tpu.memory_space<vmem>>, %arg6: memref<2x8x128xf32, #tpu.memory_space<vmem>>, %arg7: memref<2x8x128xf32, #tpu.memory_space<vmem>>, %arg8: memref<64x16xf32, #tpu.memory_space<vmem>>, %arg9: memref<128x128xf32, #tpu.memory_space<vmem>>, %arg10: memref<1x128xf32, #tpu.memory_space<vmem>>, %arg11: memref<8x128xf32, #tpu.memory_space<vmem>>, %arg12: memref<2x8x128xf32, #tpu.memory_space<vmem>>, %arg13: memref<2x8x128xf32, #tpu.memory_space<vmem>>, %arg14: memref<64x512xf32, #tpu.memory_space<vmem>>) attributes {dimension_semantics = [], scalar_prefetch = 0 : i64, scratch_operands = 1 : i64, tpu.core_type = #tpu.core_type<tc>} {
    %c0 = arith.constant 0 : index
    %c0_0 = arith.constant 0 : index
    %0 = vector.load %arg8[%c0, %c0_0] : memref<64x16xf32, #tpu.memory_space<vmem>>, vector<64x16xf32>
    %c0_1 = arith.constant 0 : index
    %c0_2 = arith.constant 0 : index
    %1 = vector.load %arg0[%c0_1, %c0_2] : memref<16x512xf32, #tpu.memory_space<vmem>>, vector<16x512xf32>
    %cst = arith.constant dense<0.000000e+00> : vector<64x512xf32>
    %2 = tpu.matmul %0, %1, %cst {dimension_numbers = #tpu.dot_dimension_numbers<[1], [0], [0], [1], [0, 0, 1, 1], [], []>} : vector<64x16xf32>, vector<16x512xf32>, vector<64x512xf32> -> vector<64x512xf32>
    %c0_3 = arith.constant 0 : index
    %c0_4 = arith.constant 0 : index
    %3 = vector.load %arg1[%c0_3, %c0_4] : memref<1x512xf32, #tpu.memory_space<vmem>>, vector<1x512xf32>
    %4 = vector.broadcast %3 : vector<1x512xf32> to vector<64x512xf32>
    %5 = arith.addf %2, %4 : vector<64x512xf32>
    %c0_5 = arith.constant 0 : index
    %c0_6 = arith.constant 0 : index
    %6 = vector.load %arg14[%c0_5, %c0_6] : memref<64x512xf32, #tpu.memory_space<vmem>>, vector<64x512xf32>
    tpu.vector_store %arg14[%c0_5, %c0_6], %5 {strides = array<i32>} : memref<64x512xf32, #tpu.memory_space<vmem>>, vector<64x512xf32>,
    %c0_7 = arith.constant 0 : index
    %c0_8 = arith.constant 0 : index
    %c0_9 = arith.constant 0 : index
    %7 = vector.load %arg6[%c0_7, %c0_8, %c0_9] : memref<2x8x128xf32, #tpu.memory_space<vmem>>, vector<1x8x128xf32>
    %8 = vector.shape_cast %7 : vector<1x8x128xf32> to vector<8x128xf32>
    %c1 = arith.constant 1 : index
    %c0_10 = arith.constant 0 : index
    %c0_11 = arith.constant 0 : index
    %9 = vector.load %arg6[%c1, %c0_10, %c0_11] : memref<2x8x128xf32, #tpu.memory_space<vmem>>, vector<1x8x128xf32>
    %10 = vector.shape_cast %9 : vector<1x8x128xf32> to vector<8x128xf32>
    %c0_12 = arith.constant 0 : index
    %c0_13 = arith.constant 0 : index
    %c0_14 = arith.constant 0 : index
    %11 = vector.load %arg7[%c0_12, %c0_13, %c0_14] : memref<2x8x128xf32, #tpu.memory_space<vmem>>, vector<1x8x128xf32>
    %12 = vector.shape_cast %11 : vector<1x8x128xf32> to vector<8x128xf32>
    %c1_15 = arith.constant 1 : index
    %c0_16 = arith.constant 0 : index
    %c0_17 = arith.constant 0 : index
    %13 = vector.load %arg7[%c1_15, %c0_16, %c0_17] : memref<2x8x128xf32, #tpu.memory_space<vmem>>, vector<1x8x128xf32>
    %14 = vector.shape_cast %13 : vector<1x8x128xf32> to vector<8x128xf32>
    %c0_18 = arith.constant 0 : index
    %c0_19 = arith.constant 0 : index
    %15 = vector.load %arg14[%c0_18, %c0_19] : memref<64x512xf32, #tpu.memory_space<vmem>>, vector<8x512xf32>
    %c0_20 = arith.constant 0 : index
    %c0_21 = arith.constant 0 : index
    %16 = vector.load %arg2[%c0_20, %c0_21] : memref<128x512xf32, #tpu.memory_space<vmem>>, vector<128x512xf32>
    %cst_22 = arith.constant dense<0.000000e+00> : vector<8x512xf32>
    %17 = tpu.matmul %8, %16, %cst_22 {dimension_numbers = #tpu.dot_dimension_numbers<[1], [0], [0], [1], [0, 0, 1, 1], [], []>} : vector<8x128xf32>, vector<128x512xf32>, vector<8x512xf32> -> vector<8x512xf32>
    %18 = arith.addf %15, %17 : vector<8x512xf32>
    %19 = vector.extract_strided_slice %18 {offsets = [0, 0], sizes = [8, 384], strides = [1, 1]} : vector<8x512xf32> to vector<8x384xf32>
    %20 = arith.negf %19 : vector<8x384xf32>
    %21 = math.exp %20 : vector<8x384xf32>
    %cst_23 = arith.constant 1.000000e+00 : f32
    %22 = vector.broadcast %cst_23 : f32 to vector<8x384xf32>
    %23 = arith.addf %22, %21 : vector<8x384xf32>
    %24 = arith.divf %22, %23 : vector<8x384xf32>
    %25 = vector.extract_strided_slice %18 {offsets = [0, 384], sizes = [8, 128], strides = [1, 1]} : vector<8x512xf32> to vector<8x128xf32>
    %26 = math.tanh %25 : vector<8x128xf32>
    %27 = vector.extract_strided_slice %24 {offsets = [0, 0], sizes = [8, 128], strides = [1, 1]} : vector<8x384xf32> to vector<8x128xf32>
    %28 = vector.extract_strided_slice %24 {offsets = [0, 128], sizes = [8, 128], strides = [1, 1]} : vector<8x384xf32> to vector<8x128xf32>
    %29 = vector.extract_strided_slice %24 {offsets = [0, 256], sizes = [8, 128], strides = [1, 1]} : vector<8x384xf32> to vector<8x128xf32>
    %30 = arith.mulf %28, %12 : vector<8x128xf32>
    %31 = arith.mulf %27, %26 : vector<8x128xf32>
    %32 = arith.addf %30, %31 : vector<8x128xf32>
    %33 = math.tanh %32 : vector<8x128xf32>
    %34 = arith.mulf %29, %33 : vector<8x128xf32>
    %c0_24 = arith.constant 0 : index
    %c0_25 = arith.constant 0 : index
    %35 = vector.load %arg3[%c0_24, %c0_25] : memref<128x512xf32, #tpu.memory_space<vmem>>, vector<128x512xf32>
    %cst_26 = arith.constant dense<0.000000e+00> : vector<8x512xf32>
    %36 = tpu.matmul %34, %35, %cst_26 {dimension_numbers = #tpu.dot_dimension_numbers<[1], [0], [0], [1], [0, 0, 1, 1], [], []>} : vector<8x128xf32>, vector<128x512xf32>, vector<8x512xf32> -> vector<8x512xf32>
    %c0_27 = arith.constant 0 : index
    %c0_28 = arith.constant 0 : index
    %37 = vector.load %arg4[%c0_27, %c0_28] : memref<128x512xf32, #tpu.memory_space<vmem>>, vector<128x512xf32>
    %cst_29 = arith.constant dense<0.000000e+00> : vector<8x512xf32>
    %38 = tpu.matmul %10, %37, %cst_29 {dimension_numbers = #tpu.dot_dimension_numbers<[1], [0], [0], [1], [0, 0, 1, 1], [], []>} : vector<8x128xf32>, vector<128x512xf32>, vector<8x512xf32> -> vector<8x512xf32>
    %39 = arith.addf %36, %38 : vector<8x512xf32>
    %c0_30 = arith.constant 0 : index
    %c0_31 = arith.constant 0 : index
    %40 = vector.load %arg5[%c0_30, %c0_31] : memref<1x512xf32, #tpu.memory_space<vmem>>, vector<1x512xf32>
    %41 = vector.broadcast %40 : vector<1x512xf32> to vector<8x512xf32>
    %42 = arith.addf %39, %41 : vector<8x512xf32>
    %43 = vector.extract_strided_slice %42 {offsets = [0, 0], sizes = [8, 384], strides = [1, 1]} : vector<8x512xf32> to vector<8x384xf32>
    %44 = arith.negf %43 : vector<8x384xf32>
    %45 = math.exp %44 : vector<8x384xf32>
    %cst_32 = arith.constant 1.000000e+00 : f32
    %46 = vector.broadcast %cst_32 : f32 to vector<8x384xf32>
    %47 = arith.addf %46, %45 : vector<8x384xf32>
    %48 = arith.divf %46, %47 : vector<8x384xf32>
    %49 = vector.extract_strided_slice %42 {offsets = [0, 384], sizes = [8, 128], strides = [1, 1]} : vector<8x512xf32> to vector<8x128xf32>
    %50 = math.tanh %49 : vector<8x128xf32>
    %51 = vector.extract_strided_slice %48 {offsets = [0, 0], sizes = [8, 128], strides = [1, 1]} : vector<8x384xf32> to vector<8x128xf32>
    %52 = vector.extract_strided_slice %48 {offsets = [0, 128], sizes = [8, 128], strides = [1, 1]} : vector<8x384xf32> to vector<8x128xf32>
    %53 = vector.extract_strided_slice %48 {offsets = [0, 256], sizes = [8, 128], strides = [1, 1]} : vector<8x384xf32> to vector<8x128xf32>
    %54 = arith.mulf %52, %14 : vector<8x128xf32>
    %55 = arith.mulf %51, %50 : vector<8x128xf32>
    %56 = arith.addf %54, %55 : vector<8x128xf32>
    %57 = math.tanh %56 : vector<8x128xf32>
    %58 = arith.mulf %53, %57 : vector<8x128xf32>
    %c8 = arith.constant 8 : index
    %c0_33 = arith.constant 0 : index
    %59 = vector.load %arg14[%c8, %c0_33] : memref<64x512xf32, #tpu.memory_space<vmem>>, vector<8x512xf32>
    %c0_34 = arith.constant 0 : index
    %c0_35 = arith.constant 0 : index
    %60 = vector.load %arg2[%c0_34, %c0_35] : memref<128x512xf32, #tpu.memory_space<vmem>>, vector<128x512xf32>
    %cst_36 = arith.constant dense<0.000000e+00> : vector<8x512xf32>
    %61 = tpu.matmul %34, %60, %cst_36 {dimension_numbers = #tpu.dot_dimension_numbers<[1], [0], [0], [1], [0, 0, 1, 1], [], []>} : vector<8x128xf32>, vector<128x512xf32>, vector<8x512xf32> -> vector<8x512xf32>
    %62 = arith.addf %59, %61 : vector<8x512xf32>
    %63 = vector.extract_strided_slice %62 {offsets = [0, 0], sizes = [8, 384], strides = [1, 1]} : vector<8x512xf32> to vector<8x384xf32>
    %64 = arith.negf %63 : vector<8x384xf32>
    %65 = math.exp %64 : vector<8x384xf32>
    %cst_37 = arith.constant 1.000000e+00 : f32
    %66 = vector.broadcast %cst_37 : f32 to vector<8x384xf32>
    %67 = arith.addf %66, %65 : vector<8x384xf32>
    %68 = arith.divf %66, %67 : vector<8x384xf32>
    %69 = vector.extract_strided_slice %62 {offsets = [0, 384], sizes = [8, 128], strides = [1, 1]} : vector<8x512xf32> to vector<8x128xf32>
    %70 = math.tanh %69 : vector<8x128xf32>
    %71 = vector.extract_strided_slice %68 {offsets = [0, 0], sizes = [8, 128], strides = [1, 1]} : vector<8x384xf32> to vector<8x128xf32>
    %72 = vector.extract_strided_slice %68 {offsets = [0, 128], sizes = [8, 128], strides = [1, 1]} : vector<8x384xf32> to vector<8x128xf32>
    %73 = vector.extract_strided_slice %68 {offsets = [0, 256], sizes = [8, 128], strides = [1, 1]} : vector<8x384xf32> to vector<8x128xf32>
    %74 = arith.mulf %72, %32 : vector<8x128xf32>
    %75 = arith.mulf %71, %70 : vector<8x128xf32>
    %76 = arith.addf %74, %75 : vector<8x128xf32>
    %77 = math.tanh %76 : vector<8x128xf32>
    %78 = arith.mulf %73, %77 : vector<8x128xf32>
    %c0_38 = arith.constant 0 : index
    %c0_39 = arith.constant 0 : index
    %79 = vector.load %arg3[%c0_38, %c0_39] : memref<128x512xf32, #tpu.memory_space<vmem>>, vector<128x512xf32>
    %cst_40 = arith.constant dense<0.000000e+00> : vector<8x512xf32>
    %80 = tpu.matmul %78, %79, %cst_40 {dimension_numbers = #tpu.dot_dimension_numbers<[1], [0], [0], [1], [0, 0, 1, 1], [], []>} : vector<8x128xf32>, vector<128x512xf32>, vector<8x512xf32> -> vector<8x512xf32>
    %c0_41 = arith.constant 0 : index
    %c0_42 = arith.constant 0 : index
    %81 = vector.load %arg4[%c0_41, %c0_42] : memref<128x512xf32, #tpu.memory_space<vmem>>, vector<128x512xf32>
    %cst_43 = arith.constant dense<0.000000e+00> : vector<8x512xf32>
    %82 = tpu.matmul %58, %81, %cst_43 {dimension_numbers = #tpu.dot_dimension_numbers<[1], [0], [0], [1], [0, 0, 1, 1], [], []>} : vector<8x128xf32>, vector<128x512xf32>, vector<8x512xf32> -> vector<8x512xf32>
    %83 = arith.addf %80, %82 : vector<8x512xf32>
    %c0_44 = arith.constant 0 : index
    %c0_45 = arith.constant 0 : index
    %84 = vector.load %arg5[%c0_44, %c0_45] : memref<1x512xf32, #tpu.memory_space<vmem>>, vector<1x512xf32>
    %85 = vector.broadcast %84 : vector<1x512xf32> to vector<8x512xf32>
    %86 = arith.addf %83, %85 : vector<8x512xf32>
    %87 = vector.extract_strided_slice %86 {offsets = [0, 0], sizes = [8, 384], strides = [1, 1]} : vector<8x512xf32> to vector<8x384xf32>
    %88 = arith.negf %87 : vector<8x384xf32>
    %89 = math.exp %88 : vector<8x384xf32>
    %cst_46 = arith.constant 1.000000e+00 : f32
    %90 = vector.broadcast %cst_46 : f32 to vector<8x384xf32>
    %91 = arith.addf %90, %89 : vector<8x384xf32>
    %92 = arith.divf %90, %91 : vector<8x384xf32>
    %93 = vector.extract_strided_slice %86 {offsets = [0, 384], sizes = [8, 128], strides = [1, 1]} : vector<8x512xf32> to vector<8x128xf32>
    %94 = math.tanh %93 : vector<8x128xf32>
    %95 = vector.extract_strided_slice %92 {offsets = [0, 0], sizes = [8, 128], strides = [1, 1]} : vector<8x384xf32> to vector<8x128xf32>
    %96 = vector.extract_strided_slice %92 {offsets = [0, 128], sizes = [8, 128], strides = [1, 1]} : vector<8x384xf32> to vector<8x128xf32>
    %97 = vector.extract_strided_slice %92 {offsets = [0, 256], sizes = [8, 128], strides = [1, 1]} : vector<8x384xf32> to vector<8x128xf32>
    %98 = arith.mulf %96, %56 : vector<8x128xf32>
    %99 = arith.mulf %95, %94 : vector<8x128xf32>
    %100 = arith.addf %98, %99 : vector<8x128xf32>
    %101 = math.tanh %100 : vector<8x128xf32>
    %102 = arith.mulf %97, %101 : vector<8x128xf32>
    %c16 = arith.constant 16 : index
    %c0_47 = arith.constant 0 : index
    %103 = vector.load %arg14[%c16, %c0_47] : memref<64x512xf32, #tpu.memory_space<vmem>>, vector<8x512xf32>
    %c0_48 = arith.constant 0 : index
    %c0_49 = arith.constant 0 : index
    %104 = vector.load %arg2[%c0_48, %c0_49] : memref<128x512xf32, #tpu.memory_space<vmem>>, vector<128x512xf32>
    %cst_50 = arith.constant dense<0.000000e+00> : vector<8x512xf32>
    %105 = tpu.matmul %78, %104, %cst_50 {dimension_numbers = #tpu.dot_dimension_numbers<[1], [0], [0], [1], [0, 0, 1, 1], [], []>} : vector<8x128xf32>, vector<128x512xf32>, vector<8x512xf32> -> vector<8x512xf32>
    %106 = arith.addf %103, %105 : vector<8x512xf32>
    %107 = vector.extract_strided_slice %106 {offsets = [0, 0], sizes = [8, 384], strides = [1, 1]} : vector<8x512xf32> to vector<8x384xf32>
    %108 = arith.negf %107 : vector<8x384xf32>
    %109 = math.exp %108 : vector<8x384xf32>
    %cst_51 = arith.constant 1.000000e+00 : f32
    %110 = vector.broadcast %cst_51 : f32 to vector<8x384xf32>
    %111 = arith.addf %110, %109 : vector<8x384xf32>
    %112 = arith.divf %110, %111 : vector<8x384xf32>
    %113 = vector.extract_strided_slice %106 {offsets = [0, 384], sizes = [8, 128], strides = [1, 1]} : vector<8x512xf32> to vector<8x128xf32>
    %114 = math.tanh %113 : vector<8x128xf32>
    %115 = vector.extract_strided_slice %112 {offsets = [0, 0], sizes = [8, 128], strides = [1, 1]} : vector<8x384xf32> to vector<8x128xf32>
    %116 = vector.extract_strided_slice %112 {offsets = [0, 128], sizes = [8, 128], strides = [1, 1]} : vector<8x384xf32> to vector<8x128xf32>
    %117 = vector.extract_strided_slice %112 {offsets = [0, 256], sizes = [8, 128], strides = [1, 1]} : vector<8x384xf32> to vector<8x128xf32>
    %118 = arith.mulf %116, %76 : vector<8x128xf32>
    %119 = arith.mulf %115, %114 : vector<8x128xf32>
    %120 = arith.addf %118, %119 : vector<8x128xf32>
    %121 = math.tanh %120 : vector<8x128xf32>
    %122 = arith.mulf %117, %121 : vector<8x128xf32>
    %c0_52 = arith.constant 0 : index
    %c0_53 = arith.constant 0 : index
    %123 = vector.load %arg3[%c0_52, %c0_53] : memref<128x512xf32, #tpu.memory_space<vmem>>, vector<128x512xf32>
    %cst_54 = arith.constant dense<0.000000e+00> : vector<8x512xf32>
    %124 = tpu.matmul %122, %123, %cst_54 {dimension_numbers = #tpu.dot_dimension_numbers<[1], [0], [0], [1], [0, 0, 1, 1], [], []>} : vector<8x128xf32>, vector<128x512xf32>, vector<8x512xf32> -> vector<8x512xf32>
    %c0_55 = arith.constant 0 : index
    %c0_56 = arith.constant 0 : index
    %125 = vector.load %arg4[%c0_55, %c0_56] : memref<128x512xf32, #tpu.memory_space<vmem>>, vector<128x512xf32>
    %cst_57 = arith.constant dense<0.000000e+00> : vector<8x512xf32>
    %126 = tpu.matmul %102, %125, %cst_57 {dimension_numbers = #tpu.dot_dimension_numbers<[1], [0], [0], [1], [0, 0, 1, 1], [], []>} : vector<8x128xf32>, vector<128x512xf32>, vector<8x512xf32> -> vector<8x512xf32>
    %127 = arith.addf %124, %126 : vector<8x512xf32>
    %c0_58 = arith.constant 0 : index
    %c0_59 = arith.constant 0 : index
    %128 = vector.load %arg5[%c0_58, %c0_59] : memref<1x512xf32, #tpu.memory_space<vmem>>, vector<1x512xf32>
    %129 = vector.broadcast %128 : vector<1x512xf32> to vector<8x512xf32>
    %130 = arith.addf %127, %129 : vector<8x512xf32>
    %131 = vector.extract_strided_slice %130 {offsets = [0, 0], sizes = [8, 384], strides = [1, 1]} : vector<8x512xf32> to vector<8x384xf32>
    %132 = arith.negf %131 : vector<8x384xf32>
    %133 = math.exp %132 : vector<8x384xf32>
    %cst_60 = arith.constant 1.000000e+00 : f32
    %134 = vector.broadcast %cst_60 : f32 to vector<8x384xf32>
    %135 = arith.addf %134, %133 : vector<8x384xf32>
    %136 = arith.divf %134, %135 : vector<8x384xf32>
    %137 = vector.extract_strided_slice %130 {offsets = [0, 384], sizes = [8, 128], strides = [1, 1]} : vector<8x512xf32> to vector<8x128xf32>
    %138 = math.tanh %137 : vector<8x128xf32>
    %139 = vector.extract_strided_slice %136 {offsets = [0, 0], sizes = [8, 128], strides = [1, 1]} : vector<8x384xf32> to vector<8x128xf32>
    %140 = vector.extract_strided_slice %136 {offsets = [0, 128], sizes = [8, 128], strides = [1, 1]} : vector<8x384xf32> to vector<8x128xf32>
    %141 = vector.extract_strided_slice %136 {offsets = [0, 256], sizes = [8, 128], strides = [1, 1]} : vector<8x384xf32> to vector<8x128xf32>
    %142 = arith.mulf %140, %100 : vector<8x128xf32>
    %143 = arith.mulf %139, %138 : vector<8x128xf32>
    %144 = arith.addf %142, %143 : vector<8x128xf32>
    %145 = math.tanh %144 : vector<8x128xf32>
    %146 = arith.mulf %141, %145 : vector<8x128xf32>
    %c24 = arith.constant 24 : index
    %c0_61 = arith.constant 0 : index
    %147 = vector.load %arg14[%c24, %c0_61] : memref<64x512xf32, #tpu.memory_space<vmem>>, vector<8x512xf32>
    %c0_62 = arith.constant 0 : index
    %c0_63 = arith.constant 0 : index
    %148 = vector.load %arg2[%c0_62, %c0_63] : memref<128x512xf32, #tpu.memory_space<vmem>>, vector<128x512xf32>
    %cst_64 = arith.constant dense<0.000000e+00> : vector<8x512xf32>
    %149 = tpu.matmul %122, %148, %cst_64 {dimension_numbers = #tpu.dot_dimension_numbers<[1], [0], [0], [1], [0, 0, 1, 1], [], []>} : vector<8x128xf32>, vector<128x512xf32>, vector<8x512xf32> -> vector<8x512xf32>
    %150 = arith.addf %147, %149 : vector<8x512xf32>
    %151 = vector.extract_strided_slice %150 {offsets = [0, 0], sizes = [8, 384], strides = [1, 1]} : vector<8x512xf32> to vector<8x384xf32>
    %152 = arith.negf %151 : vector<8x384xf32>
    %153 = math.exp %152 : vector<8x384xf32>
    %cst_65 = arith.constant 1.000000e+00 : f32
    %154 = vector.broadcast %cst_65 : f32 to vector<8x384xf32>
    %155 = arith.addf %154, %153 : vector<8x384xf32>
    %156 = arith.divf %154, %155 : vector<8x384xf32>
    %157 = vector.extract_strided_slice %150 {offsets = [0, 384], sizes = [8, 128], strides = [1, 1]} : vector<8x512xf32> to vector<8x128xf32>
    %158 = math.tanh %157 : vector<8x128xf32>
    %159 = vector.extract_strided_slice %156 {offsets = [0, 0], sizes = [8, 128], strides = [1, 1]} : vector<8x384xf32> to vector<8x128xf32>
    %160 = vector.extract_strided_slice %156 {offsets = [0, 128], sizes = [8, 128], strides = [1, 1]} : vector<8x384xf32> to vector<8x128xf32>
    %161 = vector.extract_strided_slice %156 {offsets = [0, 256], sizes = [8, 128], strides = [1, 1]} : vector<8x384xf32> to vector<8x128xf32>
    %162 = arith.mulf %160, %120 : vector<8x128xf32>
    %163 = arith.mulf %159, %158 : vector<8x128xf32>
    %164 = arith.addf %162, %163 : vector<8x128xf32>
    %165 = math.tanh %164 : vector<8x128xf32>
    %166 = arith.mulf %161, %165 : vector<8x128xf32>
    %c0_66 = arith.constant 0 : index
    %c0_67 = arith.constant 0 : index
    %167 = vector.load %arg3[%c0_66, %c0_67] : memref<128x512xf32, #tpu.memory_space<vmem>>, vector<128x512xf32>
    %cst_68 = arith.constant dense<0.000000e+00> : vector<8x512xf32>
    %168 = tpu.matmul %166, %167, %cst_68 {dimension_numbers = #tpu.dot_dimension_numbers<[1], [0], [0], [1], [0, 0, 1, 1], [], []>} : vector<8x128xf32>, vector<128x512xf32>, vector<8x512xf32> -> vector<8x512xf32>
    %c0_69 = arith.constant 0 : index
    %c0_70 = arith.constant 0 : index
    %169 = vector.load %arg4[%c0_69, %c0_70] : memref<128x512xf32, #tpu.memory_space<vmem>>, vector<128x512xf32>
    %cst_71 = arith.constant dense<0.000000e+00> : vector<8x512xf32>
    %170 = tpu.matmul %146, %169, %cst_71 {dimension_numbers = #tpu.dot_dimension_numbers<[1], [0], [0], [1], [0, 0, 1, 1], [], []>} : vector<8x128xf32>, vector<128x512xf32>, vector<8x512xf32> -> vector<8x512xf32>
    %171 = arith.addf %168, %170 : vector<8x512xf32>
    %c0_72 = arith.constant 0 : index
    %c0_73 = arith.constant 0 : index
    %172 = vector.load %arg5[%c0_72, %c0_73] : memref<1x512xf32, #tpu.memory_space<vmem>>, vector<1x512xf32>
    %173 = vector.broadcast %172 : vector<1x512xf32> to vector<8x512xf32>
    %174 = arith.addf %171, %173 : vector<8x512xf32>
    %175 = vector.extract_strided_slice %174 {offsets = [0, 0], sizes = [8, 384], strides = [1, 1]} : vector<8x512xf32> to vector<8x384xf32>
    %176 = arith.negf %175 : vector<8x384xf32>
    %177 = math.exp %176 : vector<8x384xf32>
    %cst_74 = arith.constant 1.000000e+00 : f32
    %178 = vector.broadcast %cst_74 : f32 to vector<8x384xf32>
    %179 = arith.addf %178, %177 : vector<8x384xf32>
    %180 = arith.divf %178, %179 : vector<8x384xf32>
    %181 = vector.extract_strided_slice %174 {offsets = [0, 384], sizes = [8, 128], strides = [1, 1]} : vector<8x512xf32> to vector<8x128xf32>
    %182 = math.tanh %181 : vector<8x128xf32>
    %183 = vector.extract_strided_slice %180 {offsets = [0, 0], sizes = [8, 128], strides = [1, 1]} : vector<8x384xf32> to vector<8x128xf32>
    %184 = vector.extract_strided_slice %180 {offsets = [0, 128], sizes = [8, 128], strides = [1, 1]} : vector<8x384xf32> to vector<8x128xf32>
    %185 = vector.extract_strided_slice %180 {offsets = [0, 256], sizes = [8, 128], strides = [1, 1]} : vector<8x384xf32> to vector<8x128xf32>
    %186 = arith.mulf %184, %144 : vector<8x128xf32>
    %187 = arith.mulf %183, %182 : vector<8x128xf32>
    %188 = arith.addf %186, %187 : vector<8x128xf32>
    %189 = math.tanh %188 : vector<8x128xf32>
    %190 = arith.mulf %185, %189 : vector<8x128xf32>
    %c32 = arith.constant 32 : index
    %c0_75 = arith.constant 0 : index
    %191 = vector.load %arg14[%c32, %c0_75] : memref<64x512xf32, #tpu.memory_space<vmem>>, vector<8x512xf32>
    %c0_76 = arith.constant 0 : index
    %c0_77 = arith.constant 0 : index
    %192 = vector.load %arg2[%c0_76, %c0_77] : memref<128x512xf32, #tpu.memory_space<vmem>>, vector<128x512xf32>
    %cst_78 = arith.constant dense<0.000000e+00> : vector<8x512xf32>
    %193 = tpu.matmul %166, %192, %cst_78 {dimension_numbers = #tpu.dot_dimension_numbers<[1], [0], [0], [1], [0, 0, 1, 1], [], []>} : vector<8x128xf32>, vector<128x512xf32>, vector<8x512xf32> -> vector<8x512xf32>
    %194 = arith.addf %191, %193 : vector<8x512xf32>
    %195 = vector.extract_strided_slice %194 {offsets = [0, 0], sizes = [8, 384], strides = [1, 1]} : vector<8x512xf32> to vector<8x384xf32>
    %196 = arith.negf %195 : vector<8x384xf32>
    %197 = math.exp %196 : vector<8x384xf32>
    %cst_79 = arith.constant 1.000000e+00 : f32
    %198 = vector.broadcast %cst_79 : f32 to vector<8x384xf32>
    %199 = arith.addf %198, %197 : vector<8x384xf32>
    %200 = arith.divf %198, %199 : vector<8x384xf32>
    %201 = vector.extract_strided_slice %194 {offsets = [0, 384], sizes = [8, 128], strides = [1, 1]} : vector<8x512xf32> to vector<8x128xf32>
    %202 = math.tanh %201 : vector<8x128xf32>
    %203 = vector.extract_strided_slice %200 {offsets = [0, 0], sizes = [8, 128], strides = [1, 1]} : vector<8x384xf32> to vector<8x128xf32>
    %204 = vector.extract_strided_slice %200 {offsets = [0, 128], sizes = [8, 128], strides = [1, 1]} : vector<8x384xf32> to vector<8x128xf32>
    %205 = vector.extract_strided_slice %200 {offsets = [0, 256], sizes = [8, 128], strides = [1, 1]} : vector<8x384xf32> to vector<8x128xf32>
    %206 = arith.mulf %204, %164 : vector<8x128xf32>
    %207 = arith.mulf %203, %202 : vector<8x128xf32>
    %208 = arith.addf %206, %207 : vector<8x128xf32>
    %209 = math.tanh %208 : vector<8x128xf32>
    %210 = arith.mulf %205, %209 : vector<8x128xf32>
    %c0_80 = arith.constant 0 : index
    %c0_81 = arith.constant 0 : index
    %211 = vector.load %arg3[%c0_80, %c0_81] : memref<128x512xf32, #tpu.memory_space<vmem>>, vector<128x512xf32>
    %cst_82 = arith.constant dense<0.000000e+00> : vector<8x512xf32>
    %212 = tpu.matmul %210, %211, %cst_82 {dimension_numbers = #tpu.dot_dimension_numbers<[1], [0], [0], [1], [0, 0, 1, 1], [], []>} : vector<8x128xf32>, vector<128x512xf32>, vector<8x512xf32> -> vector<8x512xf32>
    %c0_83 = arith.constant 0 : index
    %c0_84 = arith.constant 0 : index
    %213 = vector.load %arg4[%c0_83, %c0_84] : memref<128x512xf32, #tpu.memory_space<vmem>>, vector<128x512xf32>
    %cst_85 = arith.constant dense<0.000000e+00> : vector<8x512xf32>
    %214 = tpu.matmul %190, %213, %cst_85 {dimension_numbers = #tpu.dot_dimension_numbers<[1], [0], [0], [1], [0, 0, 1, 1], [], []>} : vector<8x128xf32>, vector<128x512xf32>, vector<8x512xf32> -> vector<8x512xf32>
    %215 = arith.addf %212, %214 : vector<8x512xf32>
    %c0_86 = arith.constant 0 : index
    %c0_87 = arith.constant 0 : index
    %216 = vector.load %arg5[%c0_86, %c0_87] : memref<1x512xf32, #tpu.memory_space<vmem>>, vector<1x512xf32>
    %217 = vector.broadcast %216 : vector<1x512xf32> to vector<8x512xf32>
    %218 = arith.addf %215, %217 : vector<8x512xf32>
    %219 = vector.extract_strided_slice %218 {offsets = [0, 0], sizes = [8, 384], strides = [1, 1]} : vector<8x512xf32> to vector<8x384xf32>
    %220 = arith.negf %219 : vector<8x384xf32>
    %221 = math.exp %220 : vector<8x384xf32>
    %cst_88 = arith.constant 1.000000e+00 : f32
    %222 = vector.broadcast %cst_88 : f32 to vector<8x384xf32>
    %223 = arith.addf %222, %221 : vector<8x384xf32>
    %224 = arith.divf %222, %223 : vector<8x384xf32>
    %225 = vector.extract_strided_slice %218 {offsets = [0, 384], sizes = [8, 128], strides = [1, 1]} : vector<8x512xf32> to vector<8x128xf32>
    %226 = math.tanh %225 : vector<8x128xf32>
    %227 = vector.extract_strided_slice %224 {offsets = [0, 0], sizes = [8, 128], strides = [1, 1]} : vector<8x384xf32> to vector<8x128xf32>
    %228 = vector.extract_strided_slice %224 {offsets = [0, 128], sizes = [8, 128], strides = [1, 1]} : vector<8x384xf32> to vector<8x128xf32>
    %229 = vector.extract_strided_slice %224 {offsets = [0, 256], sizes = [8, 128], strides = [1, 1]} : vector<8x384xf32> to vector<8x128xf32>
    %230 = arith.mulf %228, %188 : vector<8x128xf32>
    %231 = arith.mulf %227, %226 : vector<8x128xf32>
    %232 = arith.addf %230, %231 : vector<8x128xf32>
    %233 = math.tanh %232 : vector<8x128xf32>
    %234 = arith.mulf %229, %233 : vector<8x128xf32>
    %c40 = arith.constant 40 : index
    %c0_89 = arith.constant 0 : index
    %235 = vector.load %arg14[%c40, %c0_89] : memref<64x512xf32, #tpu.memory_space<vmem>>, vector<8x512xf32>
    %c0_90 = arith.constant 0 : index
    %c0_91 = arith.constant 0 : index
    %236 = vector.load %arg2[%c0_90, %c0_91] : memref<128x512xf32, #tpu.memory_space<vmem>>, vector<128x512xf32>
    %cst_92 = arith.constant dense<0.000000e+00> : vector<8x512xf32>
    %237 = tpu.matmul %210, %236, %cst_92 {dimension_numbers = #tpu.dot_dimension_numbers<[1], [0], [0], [1], [0, 0, 1, 1], [], []>} : vector<8x128xf32>, vector<128x512xf32>, vector<8x512xf32> -> vector<8x512xf32>
    %238 = arith.addf %235, %237 : vector<8x512xf32>
    %239 = vector.extract_strided_slice %238 {offsets = [0, 0], sizes = [8, 384], strides = [1, 1]} : vector<8x512xf32> to vector<8x384xf32>
    %240 = arith.negf %239 : vector<8x384xf32>
    %241 = math.exp %240 : vector<8x384xf32>
    %cst_93 = arith.constant 1.000000e+00 : f32
    %242 = vector.broadcast %cst_93 : f32 to vector<8x384xf32>
    %243 = arith.addf %242, %241 : vector<8x384xf32>
    %244 = arith.divf %242, %243 : vector<8x384xf32>
    %245 = vector.extract_strided_slice %238 {offsets = [0, 384], sizes = [8, 128], strides = [1, 1]} : vector<8x512xf32> to vector<8x128xf32>
    %246 = math.tanh %245 : vector<8x128xf32>
    %247 = vector.extract_strided_slice %244 {offsets = [0, 0], sizes = [8, 128], strides = [1, 1]} : vector<8x384xf32> to vector<8x128xf32>
    %248 = vector.extract_strided_slice %244 {offsets = [0, 128], sizes = [8, 128], strides = [1, 1]} : vector<8x384xf32> to vector<8x128xf32>
    %249 = vector.extract_strided_slice %244 {offsets = [0, 256], sizes = [8, 128], strides = [1, 1]} : vector<8x384xf32> to vector<8x128xf32>
    %250 = arith.mulf %248, %208 : vector<8x128xf32>
    %251 = arith.mulf %247, %246 : vector<8x128xf32>
    %252 = arith.addf %250, %251 : vector<8x128xf32>
    %253 = math.tanh %252 : vector<8x128xf32>
    %254 = arith.mulf %249, %253 : vector<8x128xf32>
    %c0_94 = arith.constant 0 : index
    %c0_95 = arith.constant 0 : index
    %255 = vector.load %arg3[%c0_94, %c0_95] : memref<128x512xf32, #tpu.memory_space<vmem>>, vector<128x512xf32>
    %cst_96 = arith.constant dense<0.000000e+00> : vector<8x512xf32>
    %256 = tpu.matmul %254, %255, %cst_96 {dimension_numbers = #tpu.dot_dimension_numbers<[1], [0], [0], [1], [0, 0, 1, 1], [], []>} : vector<8x128xf32>, vector<128x512xf32>, vector<8x512xf32> -> vector<8x512xf32>
    %c0_97 = arith.constant 0 : index
    %c0_98 = arith.constant 0 : index
    %257 = vector.load %arg4[%c0_97, %c0_98] : memref<128x512xf32, #tpu.memory_space<vmem>>, vector<128x512xf32>
    %cst_99 = arith.constant dense<0.000000e+00> : vector<8x512xf32>
    %258 = tpu.matmul %234, %257, %cst_99 {dimension_numbers = #tpu.dot_dimension_numbers<[1], [0], [0], [1], [0, 0, 1, 1], [], []>} : vector<8x128xf32>, vector<128x512xf32>, vector<8x512xf32> -> vector<8x512xf32>
    %259 = arith.addf %256, %258 : vector<8x512xf32>
    %c0_100 = arith.constant 0 : index
    %c0_101 = arith.constant 0 : index
    %260 = vector.load %arg5[%c0_100, %c0_101] : memref<1x512xf32, #tpu.memory_space<vmem>>, vector<1x512xf32>
    %261 = vector.broadcast %260 : vector<1x512xf32> to vector<8x512xf32>
    %262 = arith.addf %259, %261 : vector<8x512xf32>
    %263 = vector.extract_strided_slice %262 {offsets = [0, 0], sizes = [8, 384], strides = [1, 1]} : vector<8x512xf32> to vector<8x384xf32>
    %264 = arith.negf %263 : vector<8x384xf32>
    %265 = math.exp %264 : vector<8x384xf32>
    %cst_102 = arith.constant 1.000000e+00 : f32
    %266 = vector.broadcast %cst_102 : f32 to vector<8x384xf32>
    %267 = arith.addf %266, %265 : vector<8x384xf32>
    %268 = arith.divf %266, %267 : vector<8x384xf32>
    %269 = vector.extract_strided_slice %262 {offsets = [0, 384], sizes = [8, 128], strides = [1, 1]} : vector<8x512xf32> to vector<8x128xf32>
    %270 = math.tanh %269 : vector<8x128xf32>
    %271 = vector.extract_strided_slice %268 {offsets = [0, 0], sizes = [8, 128], strides = [1, 1]} : vector<8x384xf32> to vector<8x128xf32>
    %272 = vector.extract_strided_slice %268 {offsets = [0, 128], sizes = [8, 128], strides = [1, 1]} : vector<8x384xf32> to vector<8x128xf32>
    %273 = vector.extract_strided_slice %268 {offsets = [0, 256], sizes = [8, 128], strides = [1, 1]} : vector<8x384xf32> to vector<8x128xf32>
    %274 = arith.mulf %272, %232 : vector<8x128xf32>
    %275 = arith.mulf %271, %270 : vector<8x128xf32>
    %276 = arith.addf %274, %275 : vector<8x128xf32>
    %277 = math.tanh %276 : vector<8x128xf32>
    %278 = arith.mulf %273, %277 : vector<8x128xf32>
    %c48 = arith.constant 48 : index
    %c0_103 = arith.constant 0 : index
    %279 = vector.load %arg14[%c48, %c0_103] : memref<64x512xf32, #tpu.memory_space<vmem>>, vector<8x512xf32>
    %c0_104 = arith.constant 0 : index
    %c0_105 = arith.constant 0 : index
    %280 = vector.load %arg2[%c0_104, %c0_105] : memref<128x512xf32, #tpu.memory_space<vmem>>, vector<128x512xf32>
    %cst_106 = arith.constant dense<0.000000e+00> : vector<8x512xf32>
    %281 = tpu.matmul %254, %280, %cst_106 {dimension_numbers = #tpu.dot_dimension_numbers<[1], [0], [0], [1], [0, 0, 1, 1], [], []>} : vector<8x128xf32>, vector<128x512xf32>, vector<8x512xf32> -> vector<8x512xf32>
    %282 = arith.addf %279, %281 : vector<8x512xf32>
    %283 = vector.extract_strided_slice %282 {offsets = [0, 0], sizes = [8, 384], strides = [1, 1]} : vector<8x512xf32> to vector<8x384xf32>
    %284 = arith.negf %283 : vector<8x384xf32>
    %285 = math.exp %284 : vector<8x384xf32>
    %cst_107 = arith.constant 1.000000e+00 : f32
    %286 = vector.broadcast %cst_107 : f32 to vector<8x384xf32>
    %287 = arith.addf %286, %285 : vector<8x384xf32>
    %288 = arith.divf %286, %287 : vector<8x384xf32>
    %289 = vector.extract_strided_slice %282 {offsets = [0, 384], sizes = [8, 128], strides = [1, 1]} : vector<8x512xf32> to vector<8x128xf32>
    %290 = math.tanh %289 : vector<8x128xf32>
    %291 = vector.extract_strided_slice %288 {offsets = [0, 0], sizes = [8, 128], strides = [1, 1]} : vector<8x384xf32> to vector<8x128xf32>
    %292 = vector.extract_strided_slice %288 {offsets = [0, 128], sizes = [8, 128], strides = [1, 1]} : vector<8x384xf32> to vector<8x128xf32>
    %293 = vector.extract_strided_slice %288 {offsets = [0, 256], sizes = [8, 128], strides = [1, 1]} : vector<8x384xf32> to vector<8x128xf32>
    %294 = arith.mulf %292, %252 : vector<8x128xf32>
    %295 = arith.mulf %291, %290 : vector<8x128xf32>
    %296 = arith.addf %294, %295 : vector<8x128xf32>
    %297 = math.tanh %296 : vector<8x128xf32>
    %298 = arith.mulf %293, %297 : vector<8x128xf32>
    %c0_108 = arith.constant 0 : index
    %c0_109 = arith.constant 0 : index
    %299 = vector.load %arg3[%c0_108, %c0_109] : memref<128x512xf32, #tpu.memory_space<vmem>>, vector<128x512xf32>
    %cst_110 = arith.constant dense<0.000000e+00> : vector<8x512xf32>
    %300 = tpu.matmul %298, %299, %cst_110 {dimension_numbers = #tpu.dot_dimension_numbers<[1], [0], [0], [1], [0, 0, 1, 1], [], []>} : vector<8x128xf32>, vector<128x512xf32>, vector<8x512xf32> -> vector<8x512xf32>
    %c0_111 = arith.constant 0 : index
    %c0_112 = arith.constant 0 : index
    %301 = vector.load %arg4[%c0_111, %c0_112] : memref<128x512xf32, #tpu.memory_space<vmem>>, vector<128x512xf32>
    %cst_113 = arith.constant dense<0.000000e+00> : vector<8x512xf32>
    %302 = tpu.matmul %278, %301, %cst_113 {dimension_numbers = #tpu.dot_dimension_numbers<[1], [0], [0], [1], [0, 0, 1, 1], [], []>} : vector<8x128xf32>, vector<128x512xf32>, vector<8x512xf32> -> vector<8x512xf32>
    %303 = arith.addf %300, %302 : vector<8x512xf32>
    %c0_114 = arith.constant 0 : index
    %c0_115 = arith.constant 0 : index
    %304 = vector.load %arg5[%c0_114, %c0_115] : memref<1x512xf32, #tpu.memory_space<vmem>>, vector<1x512xf32>
    %305 = vector.broadcast %304 : vector<1x512xf32> to vector<8x512xf32>
    %306 = arith.addf %303, %305 : vector<8x512xf32>
    %307 = vector.extract_strided_slice %306 {offsets = [0, 0], sizes = [8, 384], strides = [1, 1]} : vector<8x512xf32> to vector<8x384xf32>
    %308 = arith.negf %307 : vector<8x384xf32>
    %309 = math.exp %308 : vector<8x384xf32>
    %cst_116 = arith.constant 1.000000e+00 : f32
    %310 = vector.broadcast %cst_116 : f32 to vector<8x384xf32>
    %311 = arith.addf %310, %309 : vector<8x384xf32>
    %312 = arith.divf %310, %311 : vector<8x384xf32>
    %313 = vector.extract_strided_slice %306 {offsets = [0, 384], sizes = [8, 128], strides = [1, 1]} : vector<8x512xf32> to vector<8x128xf32>
    %314 = math.tanh %313 : vector<8x128xf32>
    %315 = vector.extract_strided_slice %312 {offsets = [0, 0], sizes = [8, 128], strides = [1, 1]} : vector<8x384xf32> to vector<8x128xf32>
    %316 = vector.extract_strided_slice %312 {offsets = [0, 128], sizes = [8, 128], strides = [1, 1]} : vector<8x384xf32> to vector<8x128xf32>
    %317 = vector.extract_strided_slice %312 {offsets = [0, 256], sizes = [8, 128], strides = [1, 1]} : vector<8x384xf32> to vector<8x128xf32>
    %318 = arith.mulf %316, %276 : vector<8x128xf32>
    %319 = arith.mulf %315, %314 : vector<8x128xf32>
    %320 = arith.addf %318, %319 : vector<8x128xf32>
    %321 = math.tanh %320 : vector<8x128xf32>
    %322 = arith.mulf %317, %321 : vector<8x128xf32>
    %c56 = arith.constant 56 : index
    %c0_117 = arith.constant 0 : index
    %323 = vector.load %arg14[%c56, %c0_117] : memref<64x512xf32, #tpu.memory_space<vmem>>, vector<8x512xf32>
    %c0_118 = arith.constant 0 : index
    %c0_119 = arith.constant 0 : index
    %324 = vector.load %arg2[%c0_118, %c0_119] : memref<128x512xf32, #tpu.memory_space<vmem>>, vector<128x512xf32>
    %cst_120 = arith.constant dense<0.000000e+00> : vector<8x512xf32>
    %325 = tpu.matmul %298, %324, %cst_120 {dimension_numbers = #tpu.dot_dimension_numbers<[1], [0], [0], [1], [0, 0, 1, 1], [], []>} : vector<8x128xf32>, vector<128x512xf32>, vector<8x512xf32> -> vector<8x512xf32>
    %326 = arith.addf %323, %325 : vector<8x512xf32>
    %327 = vector.extract_strided_slice %326 {offsets = [0, 0], sizes = [8, 384], strides = [1, 1]} : vector<8x512xf32> to vector<8x384xf32>
    %328 = arith.negf %327 : vector<8x384xf32>
    %329 = math.exp %328 : vector<8x384xf32>
    %cst_121 = arith.constant 1.000000e+00 : f32
    %330 = vector.broadcast %cst_121 : f32 to vector<8x384xf32>
    %331 = arith.addf %330, %329 : vector<8x384xf32>
    %332 = arith.divf %330, %331 : vector<8x384xf32>
    %333 = vector.extract_strided_slice %326 {offsets = [0, 384], sizes = [8, 128], strides = [1, 1]} : vector<8x512xf32> to vector<8x128xf32>
    %334 = math.tanh %333 : vector<8x128xf32>
    %335 = vector.extract_strided_slice %332 {offsets = [0, 0], sizes = [8, 128], strides = [1, 1]} : vector<8x384xf32> to vector<8x128xf32>
    %336 = vector.extract_strided_slice %332 {offsets = [0, 128], sizes = [8, 128], strides = [1, 1]} : vector<8x384xf32> to vector<8x128xf32>
    %337 = vector.extract_strided_slice %332 {offsets = [0, 256], sizes = [8, 128], strides = [1, 1]} : vector<8x384xf32> to vector<8x128xf32>
    %338 = arith.mulf %336, %296 : vector<8x128xf32>
    %339 = arith.mulf %335, %334 : vector<8x128xf32>
    %340 = arith.addf %338, %339 : vector<8x128xf32>
    %341 = math.tanh %340 : vector<8x128xf32>
    %342 = arith.mulf %337, %341 : vector<8x128xf32>
    %c0_122 = arith.constant 0 : index
    %c0_123 = arith.constant 0 : index
    %343 = vector.load %arg3[%c0_122, %c0_123] : memref<128x512xf32, #tpu.memory_space<vmem>>, vector<128x512xf32>
    %cst_124 = arith.constant dense<0.000000e+00> : vector<8x512xf32>
    %344 = tpu.matmul %342, %343, %cst_124 {dimension_numbers = #tpu.dot_dimension_numbers<[1], [0], [0], [1], [0, 0, 1, 1], [], []>} : vector<8x128xf32>, vector<128x512xf32>, vector<8x512xf32> -> vector<8x512xf32>
    %c0_125 = arith.constant 0 : index
    %c0_126 = arith.constant 0 : index
    %345 = vector.load %arg4[%c0_125, %c0_126] : memref<128x512xf32, #tpu.memory_space<vmem>>, vector<128x512xf32>
    %cst_127 = arith.constant dense<0.000000e+00> : vector<8x512xf32>
    %346 = tpu.matmul %322, %345, %cst_127 {dimension_numbers = #tpu.dot_dimension_numbers<[1], [0], [0], [1], [0, 0, 1, 1], [], []>} : vector<8x128xf32>, vector<128x512xf32>, vector<8x512xf32> -> vector<8x512xf32>
    %347 = arith.addf %344, %346 : vector<8x512xf32>
    %c0_128 = arith.constant 0 : index
    %c0_129 = arith.constant 0 : index
    %348 = vector.load %arg5[%c0_128, %c0_129] : memref<1x512xf32, #tpu.memory_space<vmem>>, vector<1x512xf32>
    %349 = vector.broadcast %348 : vector<1x512xf32> to vector<8x512xf32>
    %350 = arith.addf %347, %349 : vector<8x512xf32>
    %351 = vector.extract_strided_slice %350 {offsets = [0, 0], sizes = [8, 384], strides = [1, 1]} : vector<8x512xf32> to vector<8x384xf32>
    %352 = arith.negf %351 : vector<8x384xf32>
    %353 = math.exp %352 : vector<8x384xf32>
    %cst_130 = arith.constant 1.000000e+00 : f32
    %354 = vector.broadcast %cst_130 : f32 to vector<8x384xf32>
    %355 = arith.addf %354, %353 : vector<8x384xf32>
    %356 = arith.divf %354, %355 : vector<8x384xf32>
    %357 = vector.extract_strided_slice %350 {offsets = [0, 384], sizes = [8, 128], strides = [1, 1]} : vector<8x512xf32> to vector<8x128xf32>
    %358 = math.tanh %357 : vector<8x128xf32>
    %359 = vector.extract_strided_slice %356 {offsets = [0, 0], sizes = [8, 128], strides = [1, 1]} : vector<8x384xf32> to vector<8x128xf32>
    %360 = vector.extract_strided_slice %356 {offsets = [0, 128], sizes = [8, 128], strides = [1, 1]} : vector<8x384xf32> to vector<8x128xf32>
    %361 = vector.extract_strided_slice %356 {offsets = [0, 256], sizes = [8, 128], strides = [1, 1]} : vector<8x384xf32> to vector<8x128xf32>
    %362 = arith.mulf %360, %320 : vector<8x128xf32>
    %363 = arith.mulf %359, %358 : vector<8x128xf32>
    %364 = arith.addf %362, %363 : vector<8x128xf32>
    %365 = math.tanh %364 : vector<8x128xf32>
    %366 = arith.mulf %361, %365 : vector<8x128xf32>
    %c0_131 = arith.constant 0 : index
    %c0_132 = arith.constant 0 : index
    %c0_133 = arith.constant 0 : index
    %367 = vector.load %arg12[%c0_131, %c0_132, %c0_133] : memref<2x8x128xf32, #tpu.memory_space<vmem>>, vector<1x8x128xf32>
    %368 = vector.shape_cast %367 : vector<1x8x128xf32> to vector<8x128xf32>
    %369 = vector.shape_cast %342 : vector<8x128xf32> to vector<1x8x128xf32>
    tpu.vector_store %arg12[%c0_131, %c0_132, %c0_133], %369 {strides = array<i32>} : memref<2x8x128xf32, #tpu.memory_space<vmem>>, vector<1x8x128xf32>,
    %c0_134 = arith.constant 0 : index
    %c0_135 = arith.constant 0 : index
    %c0_136 = arith.constant 0 : index
    %370 = vector.load %arg13[%c0_134, %c0_135, %c0_136] : memref<2x8x128xf32, #tpu.memory_space<vmem>>, vector<1x8x128xf32>
    %371 = vector.shape_cast %370 : vector<1x8x128xf32> to vector<8x128xf32>
    %372 = vector.shape_cast %340 : vector<8x128xf32> to vector<1x8x128xf32>
    tpu.vector_store %arg13[%c0_134, %c0_135, %c0_136], %372 {strides = array<i32>} : memref<2x8x128xf32, #tpu.memory_space<vmem>>, vector<1x8x128xf32>,
    %c1_137 = arith.constant 1 : index
    %c0_138 = arith.constant 0 : index
    %c0_139 = arith.constant 0 : index
    %373 = vector.load %arg12[%c1_137, %c0_138, %c0_139] : memref<2x8x128xf32, #tpu.memory_space<vmem>>, vector<1x8x128xf32>
    %374 = vector.shape_cast %373 : vector<1x8x128xf32> to vector<8x128xf32>
    %375 = vector.shape_cast %366 : vector<8x128xf32> to vector<1x8x128xf32>
    tpu.vector_store %arg12[%c1_137, %c0_138, %c0_139], %375 {strides = array<i32>} : memref<2x8x128xf32, #tpu.memory_space<vmem>>, vector<1x8x128xf32>,
    %c1_140 = arith.constant 1 : index
    %c0_141 = arith.constant 0 : index
    %c0_142 = arith.constant 0 : index
    %376 = vector.load %arg13[%c1_140, %c0_141, %c0_142] : memref<2x8x128xf32, #tpu.memory_space<vmem>>, vector<1x8x128xf32>
    %377 = vector.shape_cast %376 : vector<1x8x128xf32> to vector<8x128xf32>
    %378 = vector.shape_cast %364 : vector<8x128xf32> to vector<1x8x128xf32>
    tpu.vector_store %arg13[%c1_140, %c0_141, %c0_142], %378 {strides = array<i32>} : memref<2x8x128xf32, #tpu.memory_space<vmem>>, vector<1x8x128xf32>,
    %c0_143 = arith.constant 0 : index
    %c0_144 = arith.constant 0 : index
    %379 = vector.load %arg9[%c0_143, %c0_144] : memref<128x128xf32, #tpu.memory_space<vmem>>, vector<128x128xf32>
    %cst_145 = arith.constant dense<0.000000e+00> : vector<8x128xf32>
    %380 = tpu.matmul %366, %379, %cst_145 {dimension_numbers = #tpu.dot_dimension_numbers<[1], [0], [0], [1], [0, 0, 1, 1], [], []>} : vector<8x128xf32>, vector<128x128xf32>, vector<8x128xf32> -> vector<8x128xf32>
    %c0_146 = arith.constant 0 : index
    %c0_147 = arith.constant 0 : index
    %381 = vector.load %arg10[%c0_146, %c0_147] : memref<1x128xf32, #tpu.memory_space<vmem>>, vector<1x128xf32>
    %382 = vector.broadcast %381 : vector<1x128xf32> to vector<8x128xf32>
    %383 = arith.addf %380, %382 : vector<8x128xf32>
    %c0_148 = arith.constant 0 : index
    %c0_149 = arith.constant 0 : index
    %384 = vector.load %arg11[%c0_148, %c0_149] : memref<8x128xf32, #tpu.memory_space<vmem>>, vector<8x128xf32>
    tpu.vector_store %arg11[%c0_148, %c0_149], %383 {strides = array<i32>} : memref<8x128xf32, #tpu.memory_space<vmem>>, vector<8x128xf32>,
    return
  }
}

</mosaic_0001>

<llo_original>
// kernel: tpu_custom_call.1
$region0: #{tpu_custom_call.1}
  #allocation0 [shape = 'u32[]', space=smem, size = 0x4, offset = 0x4, fixed_abs, tag = 'smem constant byte address 0x4 - core index']
  #allocation1 [shape = 'u32[144,128]{1,0:T(1,128)}', space=vmem, size = 0x12000, scoped, tag = 'internal scratch']
  #allocation2 [shape = 'f32[64,512]{1,0:T(8,128)}', space=vmem, size = 0x20000, scoped, tag = 'scratch operand']
  %s0 = inlined_call_operand.hbm [shape: f32[16,512], index: 0, kind: input, shape index: {}]
  %s1 = inlined_call_operand.vmem [shape: f32[1,512], index: 1, kind: input, shape index: {}]
  %s2 = inlined_call_operand.hbm [shape: f32[128,512], index: 2, kind: input, shape index: {}]
  %s3 = inlined_call_operand.hbm [shape: f32[128,512], index: 3, kind: input, shape index: {}]
  %s4 = inlined_call_operand.hbm [shape: f32[128,512], index: 4, kind: input, shape index: {}]
  %s5 = inlined_call_operand.vmem [shape: f32[1,512], index: 5, kind: input, shape index: {}]
  %s6 = inlined_call_operand.hbm [shape: f32[2,8,128], index: 6, kind: input, shape index: {}, may-alias: {6,12}]
  %s7 = inlined_call_operand.hbm [shape: f32[2,8,128], index: 7, kind: input, shape index: {}, may-alias: {7,13}]
  %s8 = inlined_call_operand.vmem [shape: f32[64,16], index: 8, kind: input, shape index: {}]
  %s9 = inlined_call_operand.vmem [shape: f32[128,128], index: 9, kind: input, shape index: {}]
  %s10 = inlined_call_operand.vmem [shape: f32[1,128], index: 10, kind: input, shape index: {}]
  %s11 = inlined_call_operand.hbm [shape: f32[8,128], index: 11, kind: output, shape index: {0}]
  %s12 = inlined_call_operand.hbm [shape: f32[2,8,128], index: 12, kind: output, shape index: {1}, may-alias: {6,12}]
  %s13 = inlined_call_operand.hbm [shape: f32[2,8,128], index: 13, kind: output, shape index: {2}, may-alias: {7,13}]
  %14 = xla_tuple %s11, %s12, %s13
  %s15 = sld [smem:[#allocation0]]
  $region94: #{tpu_custom_call.1} parent=0
    _
  %s17 = ssub.s32 1, %s15
  %s18 = scalar_select 0, %s17, %s15
  $region1: #{tpu_custom_call.1} parent=0
    #allocation3 [shape = 'u8[32768]{0}', space=vmem, size = 0x8000, scoped, tag = 'input window, operand 0, single buffered']
    #allocation4 [shape = 's32[1]{0}', space=sflag, size = 0x4, scoped, tag = 'scoped memory for tpu_custom_call.1']
    #allocation5 [shape = 's32[1]{0}', space=sflag, size = 0x4, scoped, tag = 'scoped memory for tpu_custom_call.1']
    #allocation6 [shape = 'u8[262144]{0}', space=vmem, size = 0x40000, scoped, tag = 'input window, operand 2, single buffered']
    #allocation7 [shape = 's32[1]{0}', space=sflag, size = 0x4, scoped, tag = 'scoped memory for tpu_custom_call.1']
    #allocation8 [shape = 'u8[262144]{0}', space=vmem, size = 0x40000, scoped, tag = 'input window, operand 3, single buffered']
    #allocation9 [shape = 'u8[262144]{0}', space=vmem, size = 0x40000, scoped, tag = 'input window, operand 4, single buffered']
    #allocation10 [shape = 's32[1]{0}', space=sflag, size = 0x4, scoped, tag = 'scoped memory for tpu_custom_call.1']
    #allocation11 [shape = 'u8[8192]{0}', space=vmem, size = 0x2000, scoped, tag = 'input window, operand 6, single buffered']
    #allocation12 [shape = 'u8[8192]{0}', space=vmem, size = 0x2000, scoped, tag = 'input window, operand 7, single buffered']
    #allocation13 [shape = 's32[1]{0}', space=sflag, size = 0x4, scoped, tag = 'scoped memory for tpu_custom_call.1']
    #allocation14 [shape = 'u8[4096]{0}', space=vmem, size = 0x1000, scoped, tag = 'output window, operand 0, single buffered']
    #allocation15 [shape = 'u8[8192]{0}', space=vmem, size = 0x2000, scoped, tag = 'output window, operand 1, single buffered']
    #allocation16 [shape = 's32[1]{0}', space=sflag, size = 0x4, scoped, tag = 'scoped memory for tpu_custom_call.1']
    #allocation17 [shape = 'u8[8192]{0}', space=vmem, size = 0x2000, scoped, tag = 'output window, operand 2, single buffered']
    %19 = vsyncpa [#allocation4], 0
    %20 = vsyncpa [#allocation7], 0
    %21 = vsyncpa [#allocation10], 0
    %22 = vsyncpa [#allocation13], 0
    %23 = vsyncpa [#allocation5], 0
    %24 = vsyncpa [#allocation16], 0
    // Predicated region
    $region2: #{tpu_custom_call.1} parent=1 // pred_check
      _
    $region3: #{tpu_custom_call.1} parent=1 // pred_check_branch
      %26 = sbr.rel (0) target = $region5
    $region4: #{tpu_custom_call.1} parent=1 // pred_region
      %s28 = ssub.s32 1024, 1024
      %29 = vsyncadd [#allocation4], %s28
      %s30 = sshll.u32 [#allocation3], 4
      %s31 = int_to_ptr.vmem [resolvable:$true] %s30
      %36 = dma.hbm_to_vmem [thread:$0]  %s0, 1024, %s31, [#allocation4], 512, 512, 32
    $region5: #{tpu_custom_call.1} parent=1 // pred_fallthru
      _
    // Predicated region
    $region6: #{tpu_custom_call.1} parent=1 // pred_check
      _
    $region7: #{tpu_custom_call.1} parent=1 // pred_check_branch
      %38 = sbr.rel (0) target = $region9
    $region8: #{tpu_custom_call.1} parent=1 // pred_region
      _
    $region9: #{tpu_custom_call.1} parent=1 // pred_fallthru
      _
    // Predicated region
    $region10: #{tpu_custom_call.1} parent=1 // pred_check
      _
    $region11: #{tpu_custom_call.1} parent=1 // pred_check_branch
      %40 = sbr.rel (0) target = $region13
    $region12: #{tpu_custom_call.1} parent=1 // pred_region
      %s42 = ssub.s32 8192, 8192
      %43 = vsyncadd [#allocation7], %s42
      %s44 = sshll.u32 [#allocation6], 4
      %s45 = int_to_ptr.vmem [resolvable:$true] %s44
      %50 = dma.hbm_to_vmem [thread:$0]  %s2, 8192, %s45, [#allocation7], 512, 512, 32
    $region13: #{tpu_custom_call.1} parent=1 // pred_fallthru
      _
    // Predicated region
    $region14: #{tpu_custom_call.1} parent=1 // pred_check
      _
    $region15: #{tpu_custom_call.1} parent=1 // pred_check_branch
      %52 = sbr.rel (0) target = $region17
    $region16: #{tpu_custom_call.1} parent=1 // pred_region
      %s54 = ssub.s32 8192, 8192
      %55 = vsyncadd [#allocation7], %s54
      %s56 = sshll.u32 [#allocation8], 4
      %s57 = int_to_ptr.vmem [resolvable:$true] %s56
      %62 = dma.hbm_to_vmem [thread:$0]  %s3, 8192, %s57, [#allocation7], 512, 512, 32
    $region17: #{tpu_custom_call.1} parent=1 // pred_fallthru
      _
    // Predicated region
    $region18: #{tpu_custom_call.1} parent=1 // pred_check
      _
    $region19: #{tpu_custom_call.1} parent=1 // pred_check_branch
      %64 = sbr.rel (0) target = $region21
    $region20: #{tpu_custom_call.1} parent=1 // pred_region
      %s66 = ssub.s32 8192, 8192
      %67 = vsyncadd [#allocation10], %s66
      %s68 = sshll.u32 [#allocation9], 4
      %s69 = int_to_ptr.vmem [resolvable:$true] %s68
      %74 = dma.hbm_to_vmem [thread:$0]  %s4, 8192, %s69, [#allocation10], 512, 512, 32
    $region21: #{tpu_custom_call.1} parent=1 // pred_fallthru
      _
    // Predicated region
    $region22: #{tpu_custom_call.1} parent=1 // pred_check
      _
    $region23: #{tpu_custom_call.1} parent=1 // pred_check_branch
      %76 = sbr.rel (0) target = $region25
    $region24: #{tpu_custom_call.1} parent=1 // pred_region
      _
    $region25: #{tpu_custom_call.1} parent=1 // pred_fallthru
      _
    // Predicated region
    $region26: #{tpu_custom_call.1} parent=1 // pred_check
      _
    $region27: #{tpu_custom_call.1} parent=1 // pred_check_branch
      %78 = sbr.rel (0) target = $region29
    $region28: #{tpu_custom_call.1} parent=1 // pred_region
      %s80 = ssub.s32 256, 256
      %81 = vsyncadd [#allocation10], %s80
      %s82 = sshll.u32 [#allocation11], 4
      %s83 = int_to_ptr.vmem [resolvable:$true] %s82
      %88 = dma.hbm_to_vmem [thread:$0]  %s6, 256, %s83, [#allocation10], 128, 128, 8
    $region29: #{tpu_custom_call.1} parent=1 // pred_fallthru
      _
    // Predicated region
    $region30: #{tpu_custom_call.1} parent=1 // pred_check
      _
    $region31: #{tpu_custom_call.1} parent=1 // pred_check_branch
      %90 = sbr.rel (0) target = $region33
    $region32: #{tpu_custom_call.1} parent=1 // pred_region
      %s92 = ssub.s32 256, 256
      %93 = vsyncadd [#allocation13], %s92
      %s94 = sshll.u32 [#allocation12], 4
      %s95 = int_to_ptr.vmem [resolvable:$true] %s94
      %100 = dma.hbm_to_vmem [thread:$0]  %s7, 256, %s95, [#allocation13], 128, 128, 8
    $region33: #{tpu_custom_call.1} parent=1 // pred_fallthru
      _
    // Predicated region
    $region34: #{tpu_custom_call.1} parent=1 // pred_check
      _
    $region35: #{tpu_custom_call.1} parent=1 // pred_check_branch
      %102 = sbr.rel (0) target = $region37
    $region36: #{tpu_custom_call.1} parent=1 // pred_region
      _
    $region37: #{tpu_custom_call.1} parent=1 // pred_fallthru
      _
    // Predicated region
    $region38: #{tpu_custom_call.1} parent=1 // pred_check
      _
    $region39: #{tpu_custom_call.1} parent=1 // pred_check_branch
      %104 = sbr.rel (0) target = $region41
    $region40: #{tpu_custom_call.1} parent=1 // pred_region
      _
    $region41: #{tpu_custom_call.1} parent=1 // pred_fallthru
      _
    // Predicated region
    $region42: #{tpu_custom_call.1} parent=1 // pred_check
      _
    $region43: #{tpu_custom_call.1} parent=1 // pred_check_branch
      %106 = sbr.rel (0) target = $region45
    $region44: #{tpu_custom_call.1} parent=1 // pred_region
      _
    $region45: #{tpu_custom_call.1} parent=1 // pred_fallthru
      _
    // Predicated region
    $region46: #{tpu_custom_call.1} parent=1 // pred_check
      _
    $region47: #{tpu_custom_call.1} parent=1 // pred_check_branch
      %108 = sbr.rel (0) target = $region49
    $region48: #{tpu_custom_call.1} parent=1 // pred_region
      %109 = dma.done [#allocation4], 1024
    $region49: #{tpu_custom_call.1} parent=1 // pred_fallthru
      _
    // Predicated region
    $region50: #{tpu_custom_call.1} parent=1 // pred_check
      _
    $region51: #{tpu_custom_call.1} parent=1 // pred_check_branch
      %111 = sbr.rel (0) target = $region53
    $region52: #{tpu_custom_call.1} parent=1 // pred_region
      %112 = dma.done [#allocation7], 8192
    $region53: #{tpu_custom_call.1} parent=1 // pred_fallthru
      _
    // Predicated region
    $region54: #{tpu_custom_call.1} parent=1 // pred_check
      _
    $region55: #{tpu_custom_call.1} parent=1 // pred_check_branch
      %114 = sbr.rel (0) target = $region57
    $region56: #{tpu_custom_call.1} parent=1 // pred_region
      %115 = dma.done [#allocation7], 8192
    $region57: #{tpu_custom_call.1} parent=1 // pred_fallthru
      _
    // Predicated region
    $region58: #{tpu_custom_call.1} parent=1 // pred_check
      _
    $region59: #{tpu_custom_call.1} parent=1 // pred_check_branch
      %117 = sbr.rel (0) target = $region61
    $region60: #{tpu_custom_call.1} parent=1 // pred_region
      %118 = dma.done [#allocation10], 8192
    $region61: #{tpu_custom_call.1} parent=1 // pred_fallthru
      _
    // Predicated region
    $region62: #{tpu_custom_call.1} parent=1 // pred_check
      _
    $region63: #{tpu_custom_call.1} parent=1 // pred_check_branch
      %120 = sbr.rel (0) target = $region65
    $region64: #{tpu_custom_call.1} parent=1 // pred_region
      %121 = dma.done [#allocation10], 256
    $region65: #{tpu_custom_call.1} parent=1 // pred_fallthru
      _
    // Predicated region
    $region66: #{tpu_custom_call.1} parent=1 // pred_check
      _
    $region67: #{tpu_custom_call.1} parent=1 // pred_check_branch
      %123 = sbr.rel (0) target = $region69
    $region68: #{tpu_custom_call.1} parent=1 // pred_region
      %124 = dma.done [#allocation13], 256
    $region69: #{tpu_custom_call.1} parent=1 // pred_fallthru
      _
    %v125 = vld [vmem:[%s8] sm:$0xff]
    %v126 = vld [vmem:[%s8 + $0x8] sm:$0xff]
    %v127 = vld [vmem:[%s8 + $0x10] sm:$0xff]
    %v128 = vld [vmem:[%s8 + $0x18] sm:$0xff]
    %v129 = vld [vmem:[%s8 + $0x20] sm:$0xff]
    %v130 = vld [vmem:[%s8 + $0x28] sm:$0xff]
    %v131 = vld [vmem:[%s8 + $0x30] sm:$0xff]
    %v132 = vld [vmem:[%s8 + $0x38] sm:$0xff]
    %v133 = vld [vmem:[#allocation3] sm:$0xff]
    %v134 = vld [vmem:[#allocation3 + $0x8] sm:$0xff]
    %v135 = vld [vmem:[#allocation3 + $0x10] sm:$0xff]
    %v136 = vld [vmem:[#allocation3 + $0x18] sm:$0xff]
    %v137 = vld [vmem:[#allocation3 + $0x20] sm:$0xff]
    %v138 = vld [vmem:[#allocation3 + $0x28] sm:$0xff]
    %v139 = vld [vmem:[#allocation3 + $0x30] sm:$0xff]
    %v140 = vld [vmem:[#allocation3 + $0x38] sm:$0xff]
    %v141 = vld [vmem:[%s1] sm:$0xf]
    %v143 = vlaneseq
    %v144 = vshrl.u32 %v143, 7
    %v145 = vsub.s32 0, %v144
    %v146 = vrot.slane %v141, %v145
    %v147 = vlaneseq
    %v148 = vshrl.u32 %v147, 7
    %v149 = vsub.s32 1, %v148
    %v150 = vrot.slane %v141, %v149
    %v151 = vlaneseq
    %v152 = vshrl.u32 %v151, 7
    %v153 = vsub.s32 2, %v152
    %v154 = vrot.slane %v141, %v153
    %v155 = vlaneseq
    %v156 = vshrl.u32 %v155, 7
    %v157 = vsub.s32 3, %v156
    %v158 = vrot.slane %v141, %v157
    %vm163 = vcmask 130048
    %v165 = vsel %vm163, %v125, 0
    %v168 = vsel %vm163, %v126, 0
    %v171 = vsel %vm163, %v127, 0
    %v174 = vsel %vm163, %v128, 0
    %v177 = vsel %vm163, %v129, 0
    %v180 = vsel %vm163, %v130, 0
    %v183 = vsel %vm163, %v131, 0
    %v186 = vsel %vm163, %v132, 0
    %188 = vmatprep.subr.mxu0 %v134
    %189 = vmatpush1.msra.mxu0 %v133
    %190 = vmatprep.subr.mxu0 %v138
    %191 = vmatpush1.msra.mxu0 %v137
    %192 = vmatprep.subr.mxu0 0.0
    %193 = vmatpush1.msra.mxu0 0.0
    %194 = vmatprep.subr.mxu0 0.0
    %195 = vmatpush1.msra.mxu0 0.0
    %196 = vmatprep.subr.mxu0 0.0
    %197 = vmatpush1.msra.mxu0 0.0
    %198 = vmatprep.subr.mxu0 0.0
    %199 = vmatpush1.msra.mxu0 0.0
    %200 = vmatprep.subr.mxu0 0.0
    %201 = vmatpush1.msra.mxu0 0.0
    %202 = vmatprep.subr.mxu0 0.0
    %203 = vmatpush1.msra.mxu0 0.0
    %204 = vmatprep.subr.mxu0 0.0
    %205 = vmatpush1.msra.mxu0 0.0
    %206 = vmatprep.subr.mxu0 0.0
    %207 = vmatpush1.msra.mxu0 0.0
    %208 = vmatprep.subr.mxu0 0.0
    %209 = vmatpush1.msra.mxu0 0.0
    %210 = vmatprep.subr.mxu0 0.0
    %211 = vmatpush1.msra.mxu0 0.0
    %212 = vmatprep.subr.mxu0 0.0
    %213 = vmatpush1.msra.mxu0 0.0
    %214 = vmatprep.subr.mxu0 0.0
    %215 = vmatpush1.msra.mxu0 0.0
    %216 = vmatprep.subr.mxu0 0.0
    %217 = vmatpush1.msra.mxu0 0.0
    %218 = vmatprep.subr.mxu0 0.0
    %219 = vmatpush1.msra.mxu0 0.0
    %220 = vmatprep.subr.mxu0 0.0
    %221 = vmatpush1.msra.mxu0 0.0
    %222 = vmatprep.subr.mxu0 0.0
    %223 = vmatpush1.msra.mxu0 0.0
    %224 = vmatprep.subr.mxu0 0.0
    %225 = vmatpush1.msra.mxu0 0.0
    %226 = vmatprep.subr.mxu0 0.0
    %227 = vmatpush1.msra.mxu0 0.0
    %228 = vmatprep.subr.mxu0 0.0
    %229 = vmatpush1.msra.mxu0 0.0
    %230 = vmatprep.subr.mxu0 0.0
    %231 = vmatpush1.msra.mxu0 0.0
    %232 = vmatprep.subr.mxu0 0.0
    %233 = vmatpush1.msra.mxu0 0.0
    %234 = vmatprep.subr.mxu0 0.0
    %235 = vmatpush1.msra.mxu0 0.0
    %236 = vmatprep.subr.mxu0 0.0
    %237 = vmatpush1.msra.mxu0 0.0
    %238 = vmatprep.subr.mxu0 0.0
    %239 = vmatpush1.msra.mxu0 0.0
    %240 = vmatprep.subr.mxu0 0.0
    %241 = vmatpush1.msra.mxu0 0.0
    %242 = vmatprep.subr.mxu0 0.0
    %243 = vmatpush1.msra.mxu0 0.0
    %244 = vmatprep.subr.mxu0 0.0
    %245 = vmatpush1.msra.mxu0 0.0
    %246 = vmatprep.subr.mxu0 0.0
    %247 = vmatpush1.msra.mxu0 0.0
    %248 = vmatprep.subr.mxu0 0.0
    %249 = vmatpush1.msra.mxu0 0.0
    %250 = vmatprep.subr.mxu0 0.0
    %251 = vmatpush1.msra.mxu0 0.0
    %252 = vmatprep.mubr.f32.mxu0 0.0
    %253 = vmatmul.mubr.f32.gmra.mrb[0].mxu0 %v165
    %v254 = vpop.f32.mrb[0].mxu0
    %v255 = vadd.f32 %v146, %v254
    %v256 = vpop.f32.mrb[0].mxu0
    %v257 = vadd.f32 %v150, %v256
    %258 = vmatprep.mubr.f32.mxu0 0.0
    %259 = vmatmul.mubr.f32.gmra.mrb[0].mxu0 %v168
    %v260 = vpop.f32.mrb[0].mxu0
    %v261 = vadd.f32 %v146, %v260
    %v262 = vpop.f32.mrb[0].mxu0
    %v263 = vadd.f32 %v150, %v262
    %264 = vmatprep.mubr.f32.mxu0 0.0
    %265 = vmatmul.mubr.f32.gmra.mrb[0].mxu0 %v171
    %v266 = vpop.f32.mrb[0].mxu0
    %v267 = vadd.f32 %v146, %v266
    %v268 = vpop.f32.mrb[0].mxu0
    %v269 = vadd.f32 %v150, %v268
    %270 = vmatprep.mubr.f32.mxu0 0.0
    %271 = vmatmul.mubr.f32.gmra.mrb[0].mxu0 %v174
    %v272 = vpop.f32.mrb[0].mxu0
    %v273 = vadd.f32 %v146, %v272
    %v274 = vpop.f32.mrb[0].mxu0
    %v275 = vadd.f32 %v150, %v274
    %276 = vmatprep.mubr.f32.mxu0 0.0
    %277 = vmatmul.mubr.f32.gmra.mrb[0].mxu0 %v177
    %v278 = vpop.f32.mrb[0].mxu0
    %v279 = vadd.f32 %v146, %v278
    %v280 = vpop.f32.mrb[0].mxu0
    %v281 = vadd.f32 %v150, %v280
    %282 = vmatprep.mubr.f32.mxu0 0.0
    %283 = vmatmul.mubr.f32.gmra.mrb[0].mxu0 %v180
    %v284 = vpop.f32.mrb[0].mxu0
    %v285 = vadd.f32 %v146, %v284
    %v286 = vpop.f32.mrb[0].mxu0
    %v287 = vadd.f32 %v150, %v286
    %288 = vmatprep.mubr.f32.mxu0 0.0
    %289 = vmatmul.mubr.f32.gmra.mrb[0].mxu0 %v183
    %v290 = vpop.f32.mrb[0].mxu0
    %v291 = vadd.f32 %v146, %v290
    %v292 = vpop.f32.mrb[0].mxu0
    %v293 = vadd.f32 %v150, %v292
    %294 = vmatprep.mubr.f32.mxu0 0.0
    %295 = vmatmul.mubr.f32.gmra.mrb[0].mxu0 %v186
    %v296 = vpop.f32.mrb[0].mxu0
    %v297 = vadd.f32 %v146, %v296
    %v298 = vpop.f32.mrb[0].mxu0
    %v299 = vadd.f32 %v150, %v298
    %300 = vdwg.mxu0
    %301 = vmatprep.subr.mxu0 %v136
    %302 = vmatpush1.msra.mxu0 %v135
    %303 = vmatprep.subr.mxu0 %v140
    %304 = vmatpush1.msra.mxu0 %v139
    %305 = vmatprep.subr.mxu0 0.0
    %306 = vmatpush1.msra.mxu0 0.0
    %307 = vmatprep.subr.mxu0 0.0
    %308 = vmatpush1.msra.mxu0 0.0
    %309 = vmatprep.subr.mxu0 0.0
    %310 = vmatpush1.msra.mxu0 0.0
    %311 = vmatprep.subr.mxu0 0.0
    %312 = vmatpush1.msra.mxu0 0.0
    %313 = vmatprep.subr.mxu0 0.0
    %314 = vmatpush1.msra.mxu0 0.0
    %315 = vmatprep.subr.mxu0 0.0
    %316 = vmatpush1.msra.mxu0 0.0
    %317 = vmatprep.subr.mxu0 0.0
    %318 = vmatpush1.msra.mxu0 0.0
    %319 = vmatprep.subr.mxu0 0.0
    %320 = vmatpush1.msra.mxu0 0.0
    %321 = vmatprep.subr.mxu0 0.0
    %322 = vmatpush1.msra.mxu0 0.0
    %323 = vmatprep.subr.mxu0 0.0
    %324 = vmatpush1.msra.mxu0 0.0
    %325 = vmatprep.subr.mxu0 0.0
    %326 = vmatpush1.msra.mxu0 0.0
    %327 = vmatprep.subr.mxu0 0.0
    %328 = vmatpush1.msra.mxu0 0.0
    %329 = vmatprep.subr.mxu0 0.0
    %330 = vmatpush1.msra.mxu0 0.0
    %331 = vmatprep.subr.mxu0 0.0
    %332 = vmatpush1.msra.mxu0 0.0
    %333 = vmatprep.subr.mxu0 0.0
    %334 = vmatpush1.msra.mxu0 0.0
    %335 = vmatprep.subr.mxu0 0.0
    %336 = vmatpush1.msra.mxu0 0.0
    %337 = vmatprep.subr.mxu0 0.0
    %338 = vmatpush1.msra.mxu0 0.0
    %339 = vmatprep.subr.mxu0 0.0
    %340 = vmatpush1.msra.mxu0 0.0
    %341 = vmatprep.subr.mxu0 0.0
    %342 = vmatpush1.msra.mxu0 0.0
    %343 = vmatprep.subr.mxu0 0.0
    %344 = vmatpush1.msra.mxu0 0.0
    %345 = vmatprep.subr.mxu0 0.0
    %346 = vmatpush1.msra.mxu0 0.0
    %347 = vmatprep.subr.mxu0 0.0
    %348 = vmatpush1.msra.mxu0 0.0
    %349 = vmatprep.subr.mxu0 0.0
    %350 = vmatpush1.msra.mxu0 0.0
    %351 = vmatprep.subr.mxu0 0.0
    %352 = vmatpush1.msra.mxu0 0.0
    %353 = vmatprep.subr.mxu0 0.0
    %354 = vmatpush1.msra.mxu0 0.0
    %355 = vmatprep.subr.mxu0 0.0
    %356 = vmatpush1.msra.mxu0 0.0
    %357 = vmatprep.subr.mxu0 0.0
    %358 = vmatpush1.msra.mxu0 0.0
    %359 = vmatprep.subr.mxu0 0.0
    %360 = vmatpush1.msra.mxu0 0.0
    %361 = vmatprep.subr.mxu0 0.0
    %362 = vmatpush1.msra.mxu0 0.0
    %363 = vmatprep.subr.mxu0 0.0
    %364 = vmatpush1.msra.mxu0 0.0
    %365 = vmatprep.mubr.f32.mxu0 0.0
    %366 = vmatmul.mubr.f32.gmra.mrb[0].mxu0 %v165
    %v367 = vpop.f32.mrb[0].mxu0
    %v368 = vadd.f32 %v154, %v367
    %v369 = vpop.f32.mrb[0].mxu0
    %v370 = vadd.f32 %v158, %v369
    %371 = vmatprep.mubr.f32.mxu0 0.0
    %372 = vmatmul.mubr.f32.gmra.mrb[0].mxu0 %v168
    %v373 = vpop.f32.mrb[0].mxu0
    %v374 = vadd.f32 %v154, %v373
    %v375 = vpop.f32.mrb[0].mxu0
    %v376 = vadd.f32 %v158, %v375
    %377 = vmatprep.mubr.f32.mxu0 0.0
    %378 = vmatmul.mubr.f32.gmra.mrb[0].mxu0 %v171
    %v379 = vpop.f32.mrb[0].mxu0
    %v380 = vadd.f32 %v154, %v379
    %v381 = vpop.f32.mrb[0].mxu0
    %v382 = vadd.f32 %v158, %v381
    %383 = vmatprep.mubr.f32.mxu0 0.0
    %384 = vmatmul.mubr.f32.gmra.mrb[0].mxu0 %v174
    %v385 = vpop.f32.mrb[0].mxu0
    %v386 = vadd.f32 %v154, %v385
    %v387 = vpop.f32.mrb[0].mxu0
    %v388 = vadd.f32 %v158, %v387
    %389 = vmatprep.mubr.f32.mxu0 0.0
    %390 = vmatmul.mubr.f32.gmra.mrb[0].mxu0 %v177
    %v391 = vpop.f32.mrb[0].mxu0
    %v392 = vadd.f32 %v154, %v391
    %v393 = vpop.f32.mrb[0].mxu0
    %v394 = vadd.f32 %v158, %v393
    %395 = vmatprep.mubr.f32.mxu0 0.0
    %396 = vmatmul.mubr.f32.gmra.mrb[0].mxu0 %v180
    %v397 = vpop.f32.mrb[0].mxu0
    %v398 = vadd.f32 %v154, %v397
    %v399 = vpop.f32.mrb[0].mxu0
    %v400 = vadd.f32 %v158, %v399
    %401 = vmatprep.mubr.f32.mxu0 0.0
    %402 = vmatmul.mubr.f32.gmra.mrb[0].mxu0 %v183
    %v403 = vpop.f32.mrb[0].mxu0
    %v404 = vadd.f32 %v154, %v403
    %v405 = vpop.f32.mrb[0].mxu0
    %v406 = vadd.f32 %v158, %v405
    %407 = vmatprep.mubr.f32.mxu0 0.0
    %408 = vmatmul.mubr.f32.gmra.mrb[0].mxu0 %v186
    %v409 = vpop.f32.mrb[0].mxu0
    %v410 = vadd.f32 %v154, %v409
    %v411 = vpop.f32.mrb[0].mxu0
    %v412 = vadd.f32 %v158, %v411
    %413 = vdwg.mxu0
    %414 = vst [vmem:[#allocation2] sm:$0xff] %v255
    %415 = vst [vmem:[#allocation2 + $0x8] sm:$0xff] %v257
    %416 = vst [vmem:[#allocation2 + $0x10] sm:$0xff] %v368
    %417 = vst [vmem:[#allocation2 + $0x18] sm:$0xff] %v370
    %418 = vst [vmem:[#allocation2 + $0x20] sm:$0xff] %v261
    %419 = vst [vmem:[#allocation2 + $0x28] sm:$0xff] %v263
    %420 = vst [vmem:[#allocation2 + $0x30] sm:$0xff] %v374
    %421 = vst [vmem:[#allocation2 + $0x38] sm:$0xff] %v376
    %422 = vst [vmem:[#allocation2 + $0x40] sm:$0xff] %v267
    %423 = vst [vmem:[#allocation2 + $0x48] sm:$0xff] %v269
    %424 = vst [vmem:[#allocation2 + $0x50] sm:$0xff] %v380
    %425 = vst [vmem:[#allocation2 + $0x58] sm:$0xff] %v382
    %426 = vst [vmem:[#allocation2 + $0x60] sm:$0xff] %v273
    %427 = vst [vmem:[#allocation2 + $0x68] sm:$0xff] %v275
    %428 = vst [vmem:[#allocation2 + $0x70] sm:$0xff] %v386
    %429 = vst [vmem:[#allocation2 + $0x78] sm:$0xff] %v388
    %430 = vst [vmem:[#allocation2 + $0x80] sm:$0xff] %v279
    %431 = vst [vmem:[#allocation2 + $0x88] sm:$0xff] %v281
    %432 = vst [vmem:[#allocation2 + $0x90] sm:$0xff] %v392
    %433 = vst [vmem:[#allocation2 + $0x98] sm:$0xff] %v394
    %434 = vst [vmem:[#allocation2 + $0xa0] sm:$0xff] %v285
    %435 = vst [vmem:[#allocation2 + $0xa8] sm:$0xff] %v287
    %436 = vst [vmem:[#allocation2 + $0xb0] sm:$0xff] %v398
    %437 = vst [vmem:[#allocation2 + $0xb8] sm:$0xff] %v400
    %438 = vst [vmem:[#allocation2 + $0xc0] sm:$0xff] %v291
    %439 = vst [vmem:[#allocation2 + $0xc8] sm:$0xff] %v293
    %440 = vst [vmem:[#allocation2 + $0xd0] sm:$0xff] %v404
    %441 = vst [vmem:[#allocation2 + $0xd8] sm:$0xff] %v406
    %442 = vst [vmem:[#allocation2 + $0xe0] sm:$0xff] %v297
    %443 = vst [vmem:[#allocation2 + $0xe8] sm:$0xff] %v299
    %444 = vst [vmem:[#allocation2 + $0xf0] sm:$0xff] %v410
    %445 = vst [vmem:[#allocation2 + $0xf8] sm:$0xff] %v412
    %v446 = vld [vmem:[#allocation11] sm:$0xff]
    %s447 = scalar_lea.vmem [#allocation11], 8
    %v448 = vld [vmem:[%s447] sm:$0xff]
    %v449 = vld [vmem:[#allocation12] sm:$0xff]
    %s450 = scalar_lea.vmem [#allocation12], 8
    %v451 = vld [vmem:[%s450] sm:$0xff]
    %v452 = vld [vmem:[#allocation2] sm:$0xff]
    %v453 = vld [vmem:[#allocation2 + $0x8] sm:$0xff]
    %v454 = vld [vmem:[#allocation2 + $0x10] sm:$0xff]
    %v455 = vld [vmem:[#allocation2 + $0x18] sm:$0xff]
    %v456 = vld [vmem:[#allocation6] sm:$0xff]
    %v457 = vld [vmem:[#allocation6 + $0x8] sm:$0xff]
    %v458 = vld [vmem:[#allocation6 + $0x10] sm:$0xff]
    %v459 = vld [vmem:[#allocation6 + $0x18] sm:$0xff]
    %v460 = vld [vmem:[#allocation6 + $0x20] sm:$0xff]
    %v461 = vld [vmem:[#allocation6 + $0x28] sm:$0xff]
    %v462 = vld [vmem:[#allocation6 + $0x30] sm:$0xff]
    %v463 = vld [vmem:[#allocation6 + $0x38] sm:$0xff]
    %v464 = vld [vmem:[#allocation6 + $0x40] sm:$0xff]
    %v465 = vld [vmem:[#allocation6 + $0x48] sm:$0xff]
    %v466 = vld [vmem:[#allocation6 + $0x50] sm:$0xff]
    %v467 = vld [vmem:[#allocation6 + $0x58] sm:$0xff]
    %v468 = vld [vmem:[#allocation6 + $0x60] sm:$0xff]
    %v469 = vld [vmem:[#allocation6 + $0x68] sm:$0xff]
    %v470 = vld [vmem:[#allocation6 + $0x70] sm:$0xff]
    %v471 = vld [vmem:[#allocation6 + $0x78] sm:$0xff]
    %v472 = vld [vmem:[#allocation6 + $0x80] sm:$0xff]
    %v473 = vld [vmem:[#allocation6 + $0x88] sm:$0xff]
    %v474 = vld [vmem:[#allocation6 + $0x90] sm:$0xff]
    %v475 = vld [vmem:[#allocation6 + $0x98] sm:$0xff]
    %v476 = vld [vmem:[#allocation6 + $0xa0] sm:$0xff]
    %v477 = vld [vmem:[#allocation6 + $0xa8] sm:$0xff]
    %v478 = vld [vmem:[#allocation6 + $0xb0] sm:$0xff]
    %v479 = vld [vmem:[#allocation6 + $0xb8] sm:$0xff]
    %v480 = vld [vmem:[#allocation6 + $0xc0] sm:$0xff]
    %v481 = vld [vmem:[#allocation6 + $0xc8] sm:$0xff]
    %v482 = vld [vmem:[#allocation6 + $0xd0] sm:$0xff]
    %v483 = vld [vmem:[#allocation6 + $0xd8] sm:$0xff]
    %v484 = vld [vmem:[#allocation6 + $0xe0] sm:$0xff]
    %v485 = vld [vmem:[#allocation6 + $0xe8] sm:$0xff]
    %v486 = vld [vmem:[#allocation6 + $0xf0] sm:$0xff]
    %v487 = vld [vmem:[#allocation6 + $0xf8] sm:$0xff]
    %v488 = vld [vmem:[#allocation6 + $0x100] sm:$0xff]
    %v489 = vld [vmem:[#allocation6 + $0x108] sm:$0xff]
    %v490 = vld [vmem:[#allocation6 + $0x110] sm:$0xff]
    %v491 = vld [vmem:[#allocation6 + $0x118] sm:$0xff]
    %v492 = vld [vmem:[#allocation6 + $0x120] sm:$0xff]
    %v493 = vld [vmem:[#allocation6 + $0x128] sm:$0xff]
    %v494 = vld [vmem:[#allocation6 + $0x130] sm:$0xff]
    %v495 = vld [vmem:[#allocation6 + $0x138] sm:$0xff]
    %v496 = vld [vmem:[#allocation6 + $0x140] sm:$0xff]
    %v497 = vld [vmem:[#allocation6 + $0x148] sm:$0xff]
    %v498 = vld [vmem:[#allocation6 + $0x150] sm:$0xff]
    %v499 = vld [vmem:[#allocation6 + $0x158] sm:$0xff]
    %v500 = vld [vmem:[#allocation6 + $0x160] sm:$0xff]
    %v501 = vld [vmem:[#allocation6 + $0x168] sm:$0xff]
    %v502 = vld [vmem:[#allocation6 + $0x170] sm:$0xff]
    %v503 = vld [vmem:[#allocation6 + $0x178] sm:$0xff]
    %v504 = vld [vmem:[#allocation6 + $0x180] sm:$0xff]
    %v505 = vld [vmem:[#allocation6 + $0x188] sm:$0xff]
    %v506 = vld [vmem:[#allocation6 + $0x190] sm:$0xff]
    %v507 = vld [vmem:[#allocation6 + $0x198] sm:$0xff]
    %v508 = vld [vmem:[#allocation6 + $0x1a0] sm:$0xff]
    %v509 = vld [vmem:[#allocation6 + $0x1a8] sm:$0xff]
    %v510 = vld [vmem:[#allocation6 + $0x1b0] sm:$0xff]
    %v511 = vld [vmem:[#allocation6 + $0x1b8] sm:$0xff]
    %v512 = vld [vmem:[#allocation6 + $0x1c0] sm:$0xff]
    %v513 = vld [vmem:[#allocation6 + $0x1c8] sm:$0xff]
    %v514 = vld [vmem:[#allocation6 + $0x1d0] sm:$0xff]
    %v515 = vld [vmem:[#allocation6 + $0x1d8] sm:$0xff]
    %v516 = vld [vmem:[#allocation6 + $0x1e0] sm:$0xff]
    %v517 = vld [vmem:[#allocation6 + $0x1e8] sm:$0xff]
    %v518 = vld [vmem:[#allocation6 + $0x1f0] sm:$0xff]
    %v519 = vld [vmem:[#allocation6 + $0x1f8] sm:$0xff]
    %520 = vmatprep.subr.mxu0 %v457
    %521 = vmatpush1.msra.mxu0 %v456
    %522 = vmatprep.subr.mxu0 %v461
    %523 = vmatpush1.msra.mxu0 %v460
    %524 = vmatprep.subr.mxu0 %v465
    %525 = vmatpush1.msra.mxu0 %v464
    %526 = vmatprep.subr.mxu0 %v469
    %527 = vmatpush1.msra.mxu0 %v468
    %528 = vmatprep.subr.mxu0 %v473
    %529 = vmatpush1.msra.mxu0 %v472
    %530 = vmatprep.subr.mxu0 %v477
    %531 = vmatpush1.msra.mxu0 %v476
    %532 = vmatprep.subr.mxu0 %v481
    %533 = vmatpush1.msra.mxu0 %v480
    %534 = vmatprep.subr.mxu0 %v485
    %535 = vmatpush1.msra.mxu0 %v484
    %536 = vmatprep.subr.mxu0 %v489
    %537 = vmatpush1.msra.mxu0 %v488
    %538 = vmatprep.subr.mxu0 %v493
    %539 = vmatpush1.msra.mxu0 %v492
    %540 = vmatprep.subr.mxu0 %v497
    %541 = vmatpush1.msra.mxu0 %v496
    %542 = vmatprep.subr.mxu0 %v501
    %543 = vmatpush1.msra.mxu0 %v500
    %544 = vmatprep.subr.mxu0 %v505
    %545 = vmatpush1.msra.mxu0 %v504
    %546 = vmatprep.subr.mxu0 %v509
    %547 = vmatpush1.msra.mxu0 %v508
    %548 = vmatprep.subr.mxu0 %v513
    %549 = vmatpush1.msra.mxu0 %v512
    %550 = vmatprep.subr.mxu0 %v517
    %551 = vmatpush1.msra.mxu0 %v516
    %552 = vmatprep.subr.mxu0 0.0
    %553 = vmatpush1.msra.mxu0 0.0
    %554 = vmatprep.subr.mxu0 0.0
    %555 = vmatpush1.msra.mxu0 0.0
    %556 = vmatprep.subr.mxu0 0.0
    %557 = vmatpush1.msra.mxu0 0.0
    %558 = vmatprep.subr.mxu0 0.0
    %559 = vmatpush1.msra.mxu0 0.0
    %560 = vmatprep.subr.mxu0 0.0
    %561 = vmatpush1.msra.mxu0 0.0
    %562 = vmatprep.subr.mxu0 0.0
    %563 = vmatpush1.msra.mxu0 0.0
    %564 = vmatprep.subr.mxu0 0.0
    %565 = vmatpush1.msra.mxu0 0.0
    %566 = vmatprep.subr.mxu0 0.0
    %567 = vmatpush1.msra.mxu0 0.0
    %568 = vmatprep.subr.mxu0 0.0
    %569 = vmatpush1.msra.mxu0 0.0
    %570 = vmatprep.subr.mxu0 0.0
    %571 = vmatpush1.msra.mxu0 0.0
    %572 = vmatprep.subr.mxu0 0.0
    %573 = vmatpush1.msra.mxu0 0.0
    %574 = vmatprep.subr.mxu0 0.0
    %575 = vmatpush1.msra.mxu0 0.0
    %576 = vmatprep.subr.mxu0 0.0
    %577 = vmatpush1.msra.mxu0 0.0
    %578 = vmatprep.subr.mxu0 0.0
    %579 = vmatpush1.msra.mxu0 0.0
    %580 = vmatprep.subr.mxu0 0.0
    %581 = vmatpush1.msra.mxu0 0.0
    %582 = vmatprep.subr.mxu0 0.0
    %583 = vmatpush1.msra.mxu0 0.0
    %584 = vmatprep.mubr.f32.mxu0 0.0
    %585 = vmatmul.mubr.f32.gmra.mrb[0].mxu0 %v446
    %v586 = vpop.f32.mrb[0].mxu0
    %v587 = vadd.f32 0.0, %v586
    %v588 = vpop.f32.mrb[0].mxu0
    %v589 = vadd.f32 0.0, %v588
    %590 = vdwg.mxu0
    %591 = vmatprep.subr.mxu0 %v459
    %592 = vmatpush1.msra.mxu0 %v458
    %593 = vmatprep.subr.mxu0 %v463
    %594 = vmatpush1.msra.mxu0 %v462
    %595 = vmatprep.subr.mxu0 %v467
    %596 = vmatpush1.msra.mxu0 %v466
    %597 = vmatprep.subr.mxu0 %v471
    %598 = vmatpush1.msra.mxu0 %v470
    %599 = vmatprep.subr.mxu0 %v475
    %600 = vmatpush1.msra.mxu0 %v474
    %601 = vmatprep.subr.mxu0 %v479
    %602 = vmatpush1.msra.mxu0 %v478
    %603 = vmatprep.subr.mxu0 %v483
    %604 = vmatpush1.msra.mxu0 %v482
    %605 = vmatprep.subr.mxu0 %v487
    %606 = vmatpush1.msra.mxu0 %v486
    %607 = vmatprep.subr.mxu0 %v491
    %608 = vmatpush1.msra.mxu0 %v490
    %609 = vmatprep.subr.mxu0 %v495
    %610 = vmatpush1.msra.mxu0 %v494
    %611 = vmatprep.subr.mxu0 %v499
    %612 = vmatpush1.msra.mxu0 %v498
    %613 = vmatprep.subr.mxu0 %v503
    %614 = vmatpush1.msra.mxu0 %v502
    %615 = vmatprep.subr.mxu0 %v507
    %616 = vmatpush1.msra.mxu0 %v506
    %617 = vmatprep.subr.mxu0 %v511
    %618 = vmatpush1.msra.mxu0 %v510
    %619 = vmatprep.subr.mxu0 %v515
    %620 = vmatpush1.msra.mxu0 %v514
    %621 = vmatprep.subr.mxu0 %v519
    %622 = vmatpush1.msra.mxu0 %v518
    %623 = vmatprep.subr.mxu0 0.0
    %624 = vmatpush1.msra.mxu0 0.0
    %625 = vmatprep.subr.mxu0 0.0
    %626 = vmatpush1.msra.mxu0 0.0
    %627 = vmatprep.subr.mxu0 0.0
    %628 = vmatpush1.msra.mxu0 0.0
    %629 = vmatprep.subr.mxu0 0.0
    %630 = vmatpush1.msra.mxu0 0.0
    %631 = vmatprep.subr.mxu0 0.0
    %632 = vmatpush1.msra.mxu0 0.0
    %633 = vmatprep.subr.mxu0 0.0
    %634 = vmatpush1.msra.mxu0 0.0
    %635 = vmatprep.subr.mxu0 0.0
    %636 = vmatpush1.msra.mxu0 0.0
    %637 = vmatprep.subr.mxu0 0.0
    %638 = vmatpush1.msra.mxu0 0.0
    %639 = vmatprep.subr.mxu0 0.0
    %640 = vmatpush1.msra.mxu0 0.0
    %641 = vmatprep.subr.mxu0 0.0
    %642 = vmatpush1.msra.mxu0 0.0
    %643 = vmatprep.subr.mxu0 0.0
    %644 = vmatpush1.msra.mxu0 0.0
    %645 = vmatprep.subr.mxu0 0.0
    %646 = vmatpush1.msra.mxu0 0.0
    %647 = vmatprep.subr.mxu0 0.0
    %648 = vmatpush1.msra.mxu0 0.0
    %649 = vmatprep.subr.mxu0 0.0
    %650 = vmatpush1.msra.mxu0 0.0
    %651 = vmatprep.subr.mxu0 0.0
    %652 = vmatpush1.msra.mxu0 0.0
    %653 = vmatprep.subr.mxu0 0.0
    %654 = vmatpush1.msra.mxu0 0.0
    %655 = vmatprep.mubr.f32.mxu0 0.0
    %656 = vmatmul.mubr.f32.gmra.mrb[0].mxu0 %v446
    %v657 = vpop.f32.mrb[0].mxu0
    %v658 = vadd.f32 0.0, %v657
    %v659 = vpop.f32.mrb[0].mxu0
    %v660 = vadd.f32 0.0, %v659
    %661 = vdwg.mxu0
    %v662 = vadd.f32 %v452, %v587
    %v663 = vadd.f32 %v453, %v589
    %v664 = vadd.f32 %v454, %v658
    %v665 = vadd.f32 %v455, %v660
    %v666 = vxor.u32 %v662, 2147483648
    %v667 = vxor.u32 %v663, 2147483648
    %v668 = vxor.u32 %v664, 2147483648
    %v669 = vmul.f32 %v666, 1.442695
    %v670 = vpow.pop %v669
    %v671 = vmul.f32 %v667, 1.442695
    %v672 = vpow.pop %v671
    %v673 = vmul.f32 %v668, 1.442695
    %v674 = vpow.pop %v673
    %v675 = vadd.f32 %v670, 1.0
    %v676 = vadd.f32 %v672, 1.0
    %v677 = vadd.f32 %v674, 1.0
    %v678 = vrcp.pop %v675
    %v679 = vmul.f32 1.0, %v678
    %v680 = vrcp.pop %v676
    %v681 = vmul.f32 1.0, %v680
    %v682 = vrcp.pop %v677
    %v683 = vmul.f32 1.0, %v682
    %v684 = vtanh.pop %v665
    %v685 = vmul.f32 %v681, %v449
    %v686 = vmul.f32 %v679, %v684
    %v687 = vadd.f32 %v685, %v686
    %v688 = vtanh.pop %v687
    %v689 = vmul.f32 %v683, %v688
    %v690 = vld [vmem:[#allocation8] sm:$0xff]
    %v691 = vld [vmem:[#allocation8 + $0x8] sm:$0xff]
    %v692 = vld [vmem:[#allocation8 + $0x10] sm:$0xff]
    %v693 = vld [vmem:[#allocation8 + $0x18] sm:$0xff]
    %v694 = vld [vmem:[#allocation8 + $0x20] sm:$0xff]
    %v695 = vld [vmem:[#allocation8 + $0x28] sm:$0xff]
    %v696 = vld [vmem:[#allocation8 + $0x30] sm:$0xff]
    %v697 = vld [vmem:[#allocation8 + $0x38] sm:$0xff]
    %v698 = vld [vmem:[#allocation8 + $0x40] sm:$0xff]
    %v699 = vld [vmem:[#allocation8 + $0x48] sm:$0xff]
    %v700 = vld [vmem:[#allocation8 + $0x50] sm:$0xff]
    %v701 = vld [vmem:[#allocation8 + $0x58] sm:$0xff]
    %v702 = vld [vmem:[#allocation8 + $0x60] sm:$0xff]
    %v703 = vld [vmem:[#allocation8 + $0x68] sm:$0xff]
    %v704 = vld [vmem:[#allocation8 + $0x70] sm:$0xff]
    %v705 = vld [vmem:[#allocation8 + $0x78] sm:$0xff]
    %v706 = vld [vmem:[#allocation8 + $0x80] sm:$0xff]
    %v707 = vld [vmem:[#allocation8 + $0x88] sm:$0xff]
    %v708 = vld [vmem:[#allocation8 + $0x90] sm:$0xff]
    %v709 = vld [vmem:[#allocation8 + $0x98] sm:$0xff]
    %v710 = vld [vmem:[#allocation8 + $0xa0] sm:$0xff]
    %v711 = vld [vmem:[#allocation8 + $0xa8] sm:$0xff]
    %v712 = vld [vmem:[#allocation8 + $0xb0] sm:$0xff]
    %v713 = vld [vmem:[#allocation8 + $0xb8] sm:$0xff]
    %v714 = vld [vmem:[#allocation8 + $0xc0] sm:$0xff]
    %v715 = vld [vmem:[#allocation8 + $0xc8] sm:$0xff]
    %v716 = vld [vmem:[#allocation8 + $0xd0] sm:$0xff]
    %v717 = vld [vmem:[#allocation8 + $0xd8] sm:$0xff]
    %v718 = vld [vmem:[#allocation8 + $0xe0] sm:$0xff]
    %v719 = vld [vmem:[#allocation8 + $0xe8] sm:$0xff]
    %v720 = vld [vmem:[#allocation8 + $0xf0] sm:$0xff]
    %v721 = vld [vmem:[#allocation8 + $0xf8] sm:$0xff]
    %v722 = vld [vmem:[#allocation8 + $0x100] sm:$0xff]
    %v723 = vld [vmem:[#allocation8 + $0x108] sm:$0xff]
    %v724 = vld [vmem:[#allocation8 + $0x110] sm:$0xff]
    %v725 = vld [vmem:[#allocation8 + $0x118] sm:$0xff]
    %v726 = vld [vmem:[#allocation8 + $0x120] sm:$0xff]
    %v727 = vld [vmem:[#allocation8 + $0x128] sm:$0xff]
    %v728 = vld [vmem:[#allocation8 + $0x130] sm:$0xff]
    %v729 = vld [vmem:[#allocation8 + $0x138] sm:$0xff]
    %v730 = vld [vmem:[#allocation8 + $0x140] sm:$0xff]
    %v731 = vld [vmem:[#allocation8 + $0x148] sm:$0xff]
    %v732 = vld [vmem:[#allocation8 + $0x150] sm:$0xff]
    %v733 = vld [vmem:[#allocation8 + $0x158] sm:$0xff]
    %v734 = vld [vmem:[#allocation8 + $0x160] sm:$0xff]
    %v735 = vld [vmem:[#allocation8 + $0x168] sm:$0xff]
    %v736 = vld [vmem:[#allocation8 + $0x170] sm:$0xff]
    %v737 = vld [vmem:[#allocation8 + $0x178] sm:$0xff]
    %v738 = vld [vmem:[#allocation8 + $0x180] sm:$0xff]
    %v739 = vld [vmem:[#allocation8 + $0x188] sm:$0xff]
    %v740 = vld [vmem:[#allocation8 + $0x190] sm:$0xff]
    %v741 = vld [vmem:[#allocation8 + $0x198] sm:$0xff]
    %v742 = vld [vmem:[#allocation8 + $0x1a0] sm:$0xff]
    %v743 = vld [vmem:[#allocation8 + $0x1a8] sm:$0xff]
    %v744 = vld [vmem:[#allocation8 + $0x1b0] sm:$0xff]
    %v745 = vld [vmem:[#allocation8 + $0x1b8] sm:$0xff]
    %v746 = vld [vmem:[#allocation8 + $0x1c0] sm:$0xff]
    %v747 = vld [vmem:[#allocation8 + $0x1c8] sm:$0xff]
    %v748 = vld [vmem:[#allocation8 + $0x1d0] sm:$0xff]
    %v749 = vld [vmem:[#allocation8 + $0x1d8] sm:$0xff]
    %v750 = vld [vmem:[#allocation8 + $0x1e0] sm:$0xff]
    %v751 = vld [vmem:[#allocation8 + $0x1e8] sm:$0xff]
    %v752 = vld [vmem:[#allocation8 + $0x1f0] sm:$0xff]
    %v753 = vld [vmem:[#allocation8 + $0x1f8] sm:$0xff]
    %v754 = vld [vmem:[#allocation9] sm:$0xff]
    %v755 = vld [vmem:[#allocation9 + $0x8] sm:$0xff]
    %v756 = vld [vmem:[#allocation9 + $0x10] sm:$0xff]
    %v757 = vld [vmem:[#allocation9 + $0x18] sm:$0xff]
    %v758 = vld [vmem:[#allocation9 + $0x20] sm:$0xff]
    %v759 = vld [vmem:[#allocation9 + $0x28] sm:$0xff]
    %v760 = vld [vmem:[#allocation9 + $0x30] sm:$0xff]
    %v761 = vld [vmem:[#allocation9 + $0x38] sm:$0xff]
    %v762 = vld [vmem:[#allocation9 + $0x40] sm:$0xff]
    %v763 = vld [vmem:[#allocation9 + $0x48] sm:$0xff]
    %v764 = vld [vmem:[#allocation9 + $0x50] sm:$0xff]
    %v765 = vld [vmem:[#allocation9 + $0x58] sm:$0xff]
    %v766 = vld [vmem:[#allocation9 + $0x60] sm:$0xff]
    %v767 = vld [vmem:[#allocation9 + $0x68] sm:$0xff]
    %v768 = vld [vmem:[#allocation9 + $0x70] sm:$0xff]
    %v769 = vld [vmem:[#allocation9 + $0x78] sm:$0xff]
    %v770 = vld [vmem:[#allocation9 + $0x80] sm:$0xff]
    %v771 = vld [vmem:[#allocation9 + $0x88] sm:$0xff]
    %v772 = vld [vmem:[#allocation9 + $0x90] sm:$0xff]
    %v773 = vld [vmem:[#allocation9 + $0x98] sm:$0xff]
    %v774 = vld [vmem:[#allocation9 + $0xa0] sm:$0xff]
    %v775 = vld [vmem:[#allocation9 + $0xa8] sm:$0xff]
    %v776 = vld [vmem:[#allocation9 + $0xb0] sm:$0xff]
    %v777 = vld [vmem:[#allocation9 + $0xb8] sm:$0xff]
    %v778 = vld [vmem:[#allocation9 + $0xc0] sm:$0xff]
    %v779 = vld [vmem:[#allocation9 + $0xc8] sm:$0xff]
    %v780 = vld [vmem:[#allocation9 + $0xd0] sm:$0xff]
    %v781 = vld [vmem:[#allocation9 + $0xd8] sm:$0xff]
    %v782 = vld [vmem:[#allocation9 + $0xe0] sm:$0xff]
    %v783 = vld [vmem:[#allocation9 + $0xe8] sm:$0xff]
    %v784 = vld [vmem:[#allocation9 + $0xf0] sm:$0xff]
    %v785 = vld [vmem:[#allocation9 + $0xf8] sm:$0xff]
    %v786 = vld [vmem:[#allocation9 + $0x100] sm:$0xff]
    %v787 = vld [vmem:[#allocation9 + $0x108] sm:$0xff]
    %v788 = vld [vmem:[#allocation9 + $0x110] sm:$0xff]
    %v789 = vld [vmem:[#allocation9 + $0x118] sm:$0xff]
    %v790 = vld [vmem:[#allocation9 + $0x120] sm:$0xff]
    %v791 = vld [vmem:[#allocation9 + $0x128] sm:$0xff]
    %v792 = vld [vmem:[#allocation9 + $0x130] sm:$0xff]
    %v793 = vld [vmem:[#allocation9 + $0x138] sm:$0xff]
    %v794 = vld [vmem:[#allocation9 + $0x140] sm:$0xff]
    %v795 = vld [vmem:[#allocation9 + $0x148] sm:$0xff]
    %v796 = vld [vmem:[#allocation9 + $0x150] sm:$0xff]
    %v797 = vld [vmem:[#allocation9 + $0x158] sm:$0xff]
    %v798 = vld [vmem:[#allocation9 + $0x160] sm:$0xff]
    %v799 = vld [vmem:[#allocation9 + $0x168] sm:$0xff]
    %v800 = vld [vmem:[#allocation9 + $0x170] sm:$0xff]
    %v801 = vld [vmem:[#allocation9 + $0x178] sm:$0xff]
    %v802 = vld [vmem:[#allocation9 + $0x180] sm:$0xff]
    %v803 = vld [vmem:[#allocation9 + $0x188] sm:$0xff]
    %v804 = vld [vmem:[#allocation9 + $0x190] sm:$0xff]
    %v805 = vld [vmem:[#allocation9 + $0x198] sm:$0xff]
    %v806 = vld [vmem:[#allocation9 + $0x1a0] sm:$0xff]
    %v807 = vld [vmem:[#allocation9 + $0x1a8] sm:$0xff]
    %v808 = vld [vmem:[#allocation9 + $0x1b0] sm:$0xff]
    %v809 = vld [vmem:[#allocation9 + $0x1b8] sm:$0xff]
    %v810 = vld [vmem:[#allocation9 + $0x1c0] sm:$0xff]
    %v811 = vld [vmem:[#allocation9 + $0x1c8] sm:$0xff]
    %v812 = vld [vmem:[#allocation9 + $0x1d0] sm:$0xff]
    %v813 = vld [vmem:[#allocation9 + $0x1d8] sm:$0xff]
    %v814 = vld [vmem:[#allocation9 + $0x1e0] sm:$0xff]
    %v815 = vld [vmem:[#allocation9 + $0x1e8] sm:$0xff]
    %v816 = vld [vmem:[#allocation9 + $0x1f0] sm:$0xff]
    %v817 = vld [vmem:[#allocation9 + $0x1f8] sm:$0xff]
    %818 = vmatprep.subr.mxu0 %v755
    %819 = vmatpush1.msra.mxu0 %v754
    %820 = vmatprep.subr.mxu0 %v759
    %821 = vmatpush1.msra.mxu0 %v758
    %822 = vmatprep.subr.mxu0 %v763
    %823 = vmatpush1.msra.mxu0 %v762
    %824 = vmatprep.subr.mxu0 %v767
    %825 = vmatpush1.msra.mxu0 %v766
    %826 = vmatprep.subr.mxu0 %v771
    %827 = vmatpush1.msra.mxu0 %v770
    %828 = vmatprep.subr.mxu0 %v775
    %829 = vmatpush1.msra.mxu0 %v774
    %830 = vmatprep.subr.mxu0 %v779
    %831 = vmatpush1.msra.mxu0 %v778
    %832 = vmatprep.subr.mxu0 %v783
    %833 = vmatpush1.msra.mxu0 %v782
    %834 = vmatprep.subr.mxu0 %v787
    %835 = vmatpush1.msra.mxu0 %v786
    %836 = vmatprep.subr.mxu0 %v791
    %837 = vmatpush1.msra.mxu0 %v790
    %838 = vmatprep.subr.mxu0 %v795
    %839 = vmatpush1.msra.mxu0 %v794
    %840 = vmatprep.subr.mxu0 %v799
    %841 = vmatpush1.msra.mxu0 %v798
    %842 = vmatprep.subr.mxu0 %v803
    %843 = vmatpush1.msra.mxu0 %v802
    %844 = vmatprep.subr.mxu0 %v807
    %845 = vmatpush1.msra.mxu0 %v806
    %846 = vmatprep.subr.mxu0 %v811
    %847 = vmatpush1.msra.mxu0 %v810
    %848 = vmatprep.subr.mxu0 %v815
    %849 = vmatpush1.msra.mxu0 %v814
    %850 = vmatprep.subr.mxu0 0.0
    %851 = vmatpush1.msra.mxu0 0.0
    %852 = vmatprep.subr.mxu0 0.0
    %853 = vmatpush1.msra.mxu0 0.0
    %854 = vmatprep.subr.mxu0 0.0
    %855 = vmatpush1.msra.mxu0 0.0
    %856 = vmatprep.subr.mxu0 0.0
    %857 = vmatpush1.msra.mxu0 0.0
    %858 = vmatprep.subr.mxu0 0.0
    %859 = vmatpush1.msra.mxu0 0.0
    %860 = vmatprep.subr.mxu0 0.0
    %861 = vmatpush1.msra.mxu0 0.0
    %862 = vmatprep.subr.mxu0 0.0
    %863 = vmatpush1.msra.mxu0 0.0
    %864 = vmatprep.subr.mxu0 0.0
    %865 = vmatpush1.msra.mxu0 0.0
    %866 = vmatprep.subr.mxu0 0.0
    %867 = vmatpush1.msra.mxu0 0.0
    %868 = vmatprep.subr.mxu0 0.0
    %869 = vmatpush1.msra.mxu0 0.0
    %870 = vmatprep.subr.mxu0 0.0
    %871 = vmatpush1.msra.mxu0 0.0
    %872 = vmatprep.subr.mxu0 0.0
    %873 = vmatpush1.msra.mxu0 0.0
    %874 = vmatprep.subr.mxu0 0.0
    %875 = vmatpush1.msra.mxu0 0.0
    %876 = vmatprep.subr.mxu0 0.0
    %877 = vmatpush1.msra.mxu0 0.0
    %878 = vmatprep.subr.mxu0 0.0
    %879 = vmatpush1.msra.mxu0 0.0
    %880 = vmatprep.subr.mxu0 0.0
    %881 = vmatpush1.msra.mxu0 0.0
    %882 = vmatprep.mubr.f32.mxu0 0.0
    %883 = vmatmul.mubr.f32.gmra.mrb[0].mxu0 %v448
    %v884 = vpop.f32.mrb[0].mxu0
    %v885 = vadd.f32 0.0, %v884
    %v886 = vpop.f32.mrb[0].mxu0
    %v887 = vadd.f32 0.0, %v886
    %888 = vdwg.mxu0
    %889 = vmatprep.subr.mxu0 %v757
    %890 = vmatpush1.msra.mxu0 %v756
    %891 = vmatprep.subr.mxu0 %v761
    %892 = vmatpush1.msra.mxu0 %v760
    %893 = vmatprep.subr.mxu0 %v765
    %894 = vmatpush1.msra.mxu0 %v764
    %895 = vmatprep.subr.mxu0 %v769
    %896 = vmatpush1.msra.mxu0 %v768
    %897 = vmatprep.subr.mxu0 %v773
    %898 = vmatpush1.msra.mxu0 %v772
    %899 = vmatprep.subr.mxu0 %v777
    %900 = vmatpush1.msra.mxu0 %v776
    %901 = vmatprep.subr.mxu0 %v781
    %902 = vmatpush1.msra.mxu0 %v780
    %903 = vmatprep.subr.mxu0 %v785
    %904 = vmatpush1.msra.mxu0 %v784
    %905 = vmatprep.subr.mxu0 %v789
    %906 = vmatpush1.msra.mxu0 %v788
    %907 = vmatprep.subr.mxu0 %v793
    %908 = vmatpush1.msra.mxu0 %v792
    %909 = vmatprep.subr.mxu0 %v797
    %910 = vmatpush1.msra.mxu0 %v796
    %911 = vmatprep.subr.mxu0 %v801
    %912 = vmatpush1.msra.mxu0 %v800
    %913 = vmatprep.subr.mxu0 %v805
    %914 = vmatpush1.msra.mxu0 %v804
    %915 = vmatprep.subr.mxu0 %v809
    %916 = vmatpush1.msra.mxu0 %v808
    %917 = vmatprep.subr.mxu0 %v813
    %918 = vmatpush1.msra.mxu0 %v812
    %919 = vmatprep.subr.mxu0 %v817
    %920 = vmatpush1.msra.mxu0 %v816
    %921 = vmatprep.subr.mxu0 0.0
    %922 = vmatpush1.msra.mxu0 0.0
    %923 = vmatprep.subr.mxu0 0.0
    %924 = vmatpush1.msra.mxu0 0.0
    %925 = vmatprep.subr.mxu0 0.0
    %926 = vmatpush1.msra.mxu0 0.0
    %927 = vmatprep.subr.mxu0 0.0
    %928 = vmatpush1.msra.mxu0 0.0
    %929 = vmatprep.subr.mxu0 0.0
    %930 = vmatpush1.msra.mxu0 0.0
    %931 = vmatprep.subr.mxu0 0.0
    %932 = vmatpush1.msra.mxu0 0.0
    %933 = vmatprep.subr.mxu0 0.0
    %934 = vmatpush1.msra.mxu0 0.0
    %935 = vmatprep.subr.mxu0 0.0
    %936 = vmatpush1.msra.mxu0 0.0
    %937 = vmatprep.subr.mxu0 0.0
    %938 = vmatpush1.msra.mxu0 0.0
    %939 = vmatprep.subr.mxu0 0.0
    %940 = vmatpush1.msra.mxu0 0.0
    %941 = vmatprep.subr.mxu0 0.0
    %942 = vmatpush1.msra.mxu0 0.0
    %943 = vmatprep.subr.mxu0 0.0
    %944 = vmatpush1.msra.mxu0 0.0
    %945 = vmatprep.subr.mxu0 0.0
    %946 = vmatpush1.msra.mxu0 0.0
    %947 = vmatprep.subr.mxu0 0.0
    %948 = vmatpush1.msra.mxu0 0.0
    %949 = vmatprep.subr.mxu0 0.0
    %950 = vmatpush1.msra.mxu0 0.0
    %951 = vmatprep.subr.mxu0 0.0
    %952 = vmatpush1.msra.mxu0 0.0
    %953 = vmatprep.mubr.f32.mxu0 0.0
    %954 = vmatmul.mubr.f32.gmra.mrb[0].mxu0 %v448
    %v955 = vpop.f32.mrb[0].mxu0
    %v956 = vadd.f32 0.0, %v955
    %v957 = vpop.f32.mrb[0].mxu0
    %v958 = vadd.f32 0.0, %v957
    %959 = vdwg.mxu0
    %960 = vmatprep.subr.mxu0 %v691
    %961 = vmatpush1.msra.mxu0 %v690
    %962 = vmatprep.subr.mxu0 %v695
    %963 = vmatpush1.msra.mxu0 %v694
    %964 = vmatprep.subr.mxu0 %v699
    %965 = vmatpush1.msra.mxu0 %v698
    %966 = vmatprep.subr.mxu0 %v703
    %967 = vmatpush1.msra.mxu0 %v702
    %968 = vmatprep.subr.mxu0 %v707
    %969 = vmatpush1.msra.mxu0 %v706
    %970 = vmatprep.subr.mxu0 %v711
    %971 = vmatpush1.msra.mxu0 %v710
    %972 = vmatprep.subr.mxu0 %v715
    %973 = vmatpush1.msra.mxu0 %v714
    %974 = vmatprep.subr.mxu0 %v719
    %975 = vmatpush1.msra.mxu0 %v718
    %976 = vmatprep.subr.mxu0 %v723
    %977 = vmatpush1.msra.mxu0 %v722
    %978 = vmatprep.subr.mxu0 %v727
    %979 = vmatpush1.msra.mxu0 %v726
    %980 = vmatprep.subr.mxu0 %v731
    %981 = vmatpush1.msra.mxu0 %v730
    %982 = vmatprep.subr.mxu0 %v735
    %983 = vmatpush1.msra.mxu0 %v734
    %984 = vmatprep.subr.mxu0 %v739
    %985 = vmatpush1.msra.mxu0 %v738
    %986 = vmatprep.subr.mxu0 %v743
    %987 = vmatpush1.msra.mxu0 %v742
    %988 = vmatprep.subr.mxu0 %v747
    %989 = vmatpush1.msra.mxu0 %v746
    %990 = vmatprep.subr.mxu0 %v751
    %991 = vmatpush1.msra.mxu0 %v750
    %992 = vmatprep.subr.mxu0 0.0
    %993 = vmatpush1.msra.mxu0 0.0
    %994 = vmatprep.subr.mxu0 0.0
    %995 = vmatpush1.msra.mxu0 0.0
    %996 = vmatprep.subr.mxu0 0.0
    %997 = vmatpush1.msra.mxu0 0.0
    %998 = vmatprep.subr.mxu0 0.0
    %999 = vmatpush1.msra.mxu0 0.0
    %1000 = vmatprep.subr.mxu0 0.0
    %1001 = vmatpush1.msra.mxu0 0.0
    %1002 = vmatprep.subr.mxu0 0.0
    %1003 = vmatpush1.msra.mxu0 0.0
    %1004 = vmatprep.subr.mxu0 0.0
    %1005 = vmatpush1.msra.mxu0 0.0
    %1006 = vmatprep.subr.mxu0 0.0
    %1007 = vmatpush1.msra.mxu0 0.0
    %1008 = vmatprep.subr.mxu0 0.0
    %1009 = vmatpush1.msra.mxu0 0.0
    %1010 = vmatprep.subr.mxu0 0.0
    %1011 = vmatpush1.msra.mxu0 0.0
    %1012 = vmatprep.subr.mxu0 0.0
    %1013 = vmatpush1.msra.mxu0 0.0
    %1014 = vmatprep.subr.mxu0 0.0
    %1015 = vmatpush1.msra.mxu0 0.0
    %1016 = vmatprep.subr.mxu0 0.0
    %1017 = vmatpush1.msra.mxu0 0.0
    %1018 = vmatprep.subr.mxu0 0.0
    %1019 = vmatpush1.msra.mxu0 0.0
    %1020 = vmatprep.subr.mxu0 0.0
    %1021 = vmatpush1.msra.mxu0 0.0
    %1022 = vmatprep.subr.mxu0 0.0
    %1023 = vmatpush1.msra.mxu0 0.0
    %1024 = vmatprep.mubr.f32.mxu0 0.0
    %1025 = vmatmul.mubr.f32.gmra.mrb[0].mxu0 %v689
    %v1026 = vpop.f32.mrb[0].mxu0
    %v1027 = vadd.f32 %v885, %v1026
    %v1028 = vpop.f32.mrb[0].mxu0
    %v1029 = vadd.f32 %v887, %v1028
    %1030 = vdwg.mxu0
    %1031 = vmatprep.subr.mxu0 %v693
    %1032 = vmatpush1.msra.mxu0 %v692
    %1033 = vmatprep.subr.mxu0 %v697
    %1034 = vmatpush1.msra.mxu0 %v696
    %1035 = vmatprep.subr.mxu0 %v701
    %1036 = vmatpush1.msra.mxu0 %v700
    %1037 = vmatprep.subr.mxu0 %v705
    %1038 = vmatpush1.msra.mxu0 %v704
    %1039 = vmatprep.subr.mxu0 %v709
    %1040 = vmatpush1.msra.mxu0 %v708
    %1041 = vmatprep.subr.mxu0 %v713
    %1042 = vmatpush1.msra.mxu0 %v712
    %1043 = vmatprep.subr.mxu0 %v717
    %1044 = vmatpush1.msra.mxu0 %v716
    %1045 = vmatprep.subr.mxu0 %v721
    %1046 = vmatpush1.msra.mxu0 %v720
    %1047 = vmatprep.subr.mxu0 %v725
    %1048 = vmatpush1.msra.mxu0 %v724
    %1049 = vmatprep.subr.mxu0 %v729
    %1050 = vmatpush1.msra.mxu0 %v728
    %1051 = vmatprep.subr.mxu0 %v733
    %1052 = vmatpush1.msra.mxu0 %v732
    %1053 = vmatprep.subr.mxu0 %v737
    %1054 = vmatpush1.msra.mxu0 %v736
    %1055 = vmatprep.subr.mxu0 %v741
    %1056 = vmatpush1.msra.mxu0 %v740
    %1057 = vmatprep.subr.mxu0 %v745
    %1058 = vmatpush1.msra.mxu0 %v744
    %1059 = vmatprep.subr.mxu0 %v749
    %1060 = vmatpush1.msra.mxu0 %v748
    %1061 = vmatprep.subr.mxu0 %v753
    %1062 = vmatpush1.msra.mxu0 %v752
    %1063 = vmatprep.subr.mxu0 0.0
    %1064 = vmatpush1.msra.mxu0 0.0
    %1065 = vmatprep.subr.mxu0 0.0
    %1066 = vmatpush1.msra.mxu0 0.0
    %1067 = vmatprep.subr.mxu0 0.0
    %1068 = vmatpush1.msra.mxu0 0.0
    %1069 = vmatprep.subr.mxu0 0.0
    %1070 = vmatpush1.msra.mxu0 0.0
    %1071 = vmatprep.subr.mxu0 0.0
    %1072 = vmatpush1.msra.mxu0 0.0
    %1073 = vmatprep.subr.mxu0 0.0
    %1074 = vmatpush1.msra.mxu0 0.0
    %1075 = vmatprep.subr.mxu0 0.0
    %1076 = vmatpush1.msra.mxu0 0.0
    %1077 = vmatprep.subr.mxu0 0.0
    %1078 = vmatpush1.msra.mxu0 0.0
    %1079 = vmatprep.subr.mxu0 0.0
    %1080 = vmatpush1.msra.mxu0 0.0
    %1081 = vmatprep.subr.mxu0 0.0
    %1082 = vmatpush1.msra.mxu0 0.0
    %1083 = vmatprep.subr.mxu0 0.0
    %1084 = vmatpush1.msra.mxu0 0.0
    %1085 = vmatprep.subr.mxu0 0.0
    %1086 = vmatpush1.msra.mxu0 0.0
    %1087 = vmatprep.subr.mxu0 0.0
    %1088 = vmatpush1.msra.mxu0 0.0
    %1089 = vmatprep.subr.mxu0 0.0
    %1090 = vmatpush1.msra.mxu0 0.0
    %1091 = vmatprep.subr.mxu0 0.0
    %1092 = vmatpush1.msra.mxu0 0.0
    %1093 = vmatprep.subr.mxu0 0.0
    %1094 = vmatpush1.msra.mxu0 0.0
    %1095 = vmatprep.mubr.f32.mxu0 0.0
    %1096 = vmatmul.mubr.f32.gmra.mrb[0].mxu0 %v689
    %v1097 = vpop.f32.mrb[0].mxu0
    %v1098 = vadd.f32 %v956, %v1097
    %v1099 = vpop.f32.mrb[0].mxu0
    %v1100 = vadd.f32 %v958, %v1099
    %1101 = vdwg.mxu0
    %v1102 = vld [vmem:[%s5] sm:$0xf]
    %v1104 = vlaneseq
    %v1105 = vshrl.u32 %v1104, 7
    %v1106 = vsub.s32 0, %v1105
    %v1107 = vrot.slane %v1102, %v1106
    %v1108 = vlaneseq
    %v1109 = vshrl.u32 %v1108, 7
    %v1110 = vsub.s32 1, %v1109
    %v1111 = vrot.slane %v1102, %v1110
    %v1112 = vlaneseq
    %v1113 = vshrl.u32 %v1112, 7
    %v1114 = vsub.s32 2, %v1113
    %v1115 = vrot.slane %v1102, %v1114
    %v1116 = vlaneseq
    %v1117 = vshrl.u32 %v1116, 7
    %v1118 = vsub.s32 3, %v1117
    %v1119 = vrot.slane %v1102, %v1118
    %v1124 = vadd.f32 %v1027, %v1107
    %v1125 = vadd.f32 %v1029, %v1111
    %v1126 = vadd.f32 %v1098, %v1115
    %v1127 = vadd.f32 %v1100, %v1119
    %v1128 = vxor.u32 %v1124, 2147483648
    %v1129 = vxor.u32 %v1125, 2147483648
    %v1130 = vxor.u32 %v1126, 2147483648
    %v1131 = vmul.f32 %v1128, 1.442695
    %v1132 = vpow.pop %v1131
    %v1133 = vmul.f32 %v1129, 1.442695
    %v1134 = vpow.pop %v1133
    %v1135 = vmul.f32 %v1130, 1.442695
    %v1136 = vpow.pop %v1135
    %v1137 = vadd.f32 %v1132, 1.0
    %v1138 = vadd.f32 %v1134, 1.0
    %v1139 = vadd.f32 %v1136, 1.0
    %v1140 = vrcp.pop %v1137
    %v1141 = vmul.f32 1.0, %v1140
    %v1142 = vrcp.pop %v1138
    %v1143 = vmul.f32 1.0, %v1142
    %v1144 = vrcp.pop %v1139
    %v1145 = vmul.f32 1.0, %v1144
    %v1146 = vtanh.pop %v1127
    %v1147 = vmul.f32 %v1143, %v451
    %v1148 = vmul.f32 %v1141, %v1146
    %v1149 = vadd.f32 %v1147, %v1148
    %v1150 = vtanh.pop %v1149
    %v1151 = vmul.f32 %v1145, %v1150
    %v1152 = vld [vmem:[#allocation2 + $0x20] sm:$0xff]
    %v1153 = vld [vmem:[#allocation2 + $0x28] sm:$0xff]
    %v1154 = vld [vmem:[#allocation2 + $0x30] sm:$0xff]
    %v1155 = vld [vmem:[#allocation2 + $0x38] sm:$0xff]
    %1156 = vmatprep.subr.mxu0 %v457
    %1157 = vmatpush1.msra.mxu0 %v456
    %1158 = vmatprep.subr.mxu0 %v461
    %1159 = vmatpush1.msra.mxu0 %v460
    %1160 = vmatprep.subr.mxu0 %v465
    %1161 = vmatpush1.msra.mxu0 %v464
    %1162 = vmatprep.subr.mxu0 %v469
    %1163 = vmatpush1.msra.mxu0 %v468
    %1164 = vmatprep.subr.mxu0 %v473
    %1165 = vmatpush1.msra.mxu0 %v472
    %1166 = vmatprep.subr.mxu0 %v477
    %1167 = vmatpush1.msra.mxu0 %v476
    %1168 = vmatprep.subr.mxu0 %v481
    %1169 = vmatpush1.msra.mxu0 %v480
    %1170 = vmatprep.subr.mxu0 %v485
    %1171 = vmatpush1.msra.mxu0 %v484
    %1172 = vmatprep.subr.mxu0 %v489
    %1173 = vmatpush1.msra.mxu0 %v488
    %1174 = vmatprep.subr.mxu0 %v493
    %1175 = vmatpush1.msra.mxu0 %v492
    %1176 = vmatprep.subr.mxu0 %v497
    %1177 = vmatpush1.msra.mxu0 %v496
    %1178 = vmatprep.subr.mxu0 %v501
    %1179 = vmatpush1.msra.mxu0 %v500
    %1180 = vmatprep.subr.mxu0 %v505
    %1181 = vmatpush1.msra.mxu0 %v504
    %1182 = vmatprep.subr.mxu0 %v509
    %1183 = vmatpush1.msra.mxu0 %v508
    %1184 = vmatprep.subr.mxu0 %v513
    %1185 = vmatpush1.msra.mxu0 %v512
    %1186 = vmatprep.subr.mxu0 %v517
    %1187 = vmatpush1.msra.mxu0 %v516
    %1188 = vmatprep.subr.mxu0 0.0
    %1189 = vmatpush1.msra.mxu0 0.0
    %1190 = vmatprep.subr.mxu0 0.0
    %1191 = vmatpush1.msra.mxu0 0.0
    %1192 = vmatprep.subr.mxu0 0.0
    %1193 = vmatpush1.msra.mxu0 0.0
    %1194 = vmatprep.subr.mxu0 0.0
    %1195 = vmatpush1.msra.mxu0 0.0
    %1196 = vmatprep.subr.mxu0 0.0
    %1197 = vmatpush1.msra.mxu0 0.0
    %1198 = vmatprep.subr.mxu0 0.0
    %1199 = vmatpush1.msra.mxu0 0.0
    %1200 = vmatprep.subr.mxu0 0.0
    %1201 = vmatpush1.msra.mxu0 0.0
    %1202 = vmatprep.subr.mxu0 0.0
    %1203 = vmatpush1.msra.mxu0 0.0
    %1204 = vmatprep.subr.mxu0 0.0
    %1205 = vmatpush1.msra.mxu0 0.0
    %1206 = vmatprep.subr.mxu0 0.0
    %1207 = vmatpush1.msra.mxu0 0.0
    %1208 = vmatprep.subr.mxu0 0.0
    %1209 = vmatpush1.msra.mxu0 0.0
    %1210 = vmatprep.subr.mxu0 0.0
    %1211 = vmatpush1.msra.mxu0 0.0
    %1212 = vmatprep.subr.mxu0 0.0
    %1213 = vmatpush1.msra.mxu0 0.0
    %1214 = vmatprep.subr.mxu0 0.0
    %1215 = vmatpush1.msra.mxu0 0.0
    %1216 = vmatprep.subr.mxu0 0.0
    %1217 = vmatpush1.msra.mxu0 0.0
    %1218 = vmatprep.subr.mxu0 0.0
    %1219 = vmatpush1.msra.mxu0 0.0
    %1220 = vmatprep.mubr.f32.mxu0 0.0
    %1221 = vmatmul.mubr.f32.gmra.mrb[0].mxu0 %v689
    %v1222 = vpop.f32.mrb[0].mxu0
    %v1223 = vadd.f32 0.0, %v1222
    %v1224 = vpop.f32.mrb[0].mxu0
    %v1225 = vadd.f32 0.0, %v1224
    %1226 = vdwg.mxu0
    %1227 = vmatprep.subr.mxu0 %v459
    %1228 = vmatpush1.msra.mxu0 %v458
    %1229 = vmatprep.subr.mxu0 %v463
    %1230 = vmatpush1.msra.mxu0 %v462
    %1231 = vmatprep.subr.mxu0 %v467
    %1232 = vmatpush1.msra.mxu0 %v466
    %1233 = vmatprep.subr.mxu0 %v471
    %1234 = vmatpush1.msra.mxu0 %v470
    %1235 = vmatprep.subr.mxu0 %v475
    %1236 = vmatpush1.msra.mxu0 %v474
    %1237 = vmatprep.subr.mxu0 %v479
    %1238 = vmatpush1.msra.mxu0 %v478
    %1239 = vmatprep.subr.mxu0 %v483
    %1240 = vmatpush1.msra.mxu0 %v482
    %1241 = vmatprep.subr.mxu0 %v487
    %1242 = vmatpush1.msra.mxu0 %v486
    %1243 = vmatprep.subr.mxu0 %v491
    %1244 = vmatpush1.msra.mxu0 %v490
    %1245 = vmatprep.subr.mxu0 %v495
    %1246 = vmatpush1.msra.mxu0 %v494
    %1247 = vmatprep.subr.mxu0 %v499
    %1248 = vmatpush1.msra.mxu0 %v498
    %1249 = vmatprep.subr.mxu0 %v503
    %1250 = vmatpush1.msra.mxu0 %v502
    %1251 = vmatprep.subr.mxu0 %v507
    %1252 = vmatpush1.msra.mxu0 %v506
    %1253 = vmatprep.subr.mxu0 %v511
    %1254 = vmatpush1.msra.mxu0 %v510
    %1255 = vmatprep.subr.mxu0 %v515
    %1256 = vmatpush1.msra.mxu0 %v514
    %1257 = vmatprep.subr.mxu0 %v519
    %1258 = vmatpush1.msra.mxu0 %v518
    %1259 = vmatprep.subr.mxu0 0.0
    %1260 = vmatpush1.msra.mxu0 0.0
    %1261 = vmatprep.subr.mxu0 0.0
    %1262 = vmatpush1.msra.mxu0 0.0
    %1263 = vmatprep.subr.mxu0 0.0
    %1264 = vmatpush1.msra.mxu0 0.0
    %1265 = vmatprep.subr.mxu0 0.0
    %1266 = vmatpush1.msra.mxu0 0.0
    %1267 = vmatprep.subr.mxu0 0.0
    %1268 = vmatpush1.msra.mxu0 0.0
    %1269 = vmatprep.subr.mxu0 0.0
    %1270 = vmatpush1.msra.mxu0 0.0
    %1271 = vmatprep.subr.mxu0 0.0
    %1272 = vmatpush1.msra.mxu0 0.0
    %1273 = vmatprep.subr.mxu0 0.0
    %1274 = vmatpush1.msra.mxu0 0.0
    %1275 = vmatprep.subr.mxu0 0.0
    %1276 = vmatpush1.msra.mxu0 0.0
    %1277 = vmatprep.subr.mxu0 0.0
    %1278 = vmatpush1.msra.mxu0 0.0
    %1279 = vmatprep.subr.mxu0 0.0
    %1280 = vmatpush1.msra.mxu0 0.0
    %1281 = vmatprep.subr.mxu0 0.0
    %1282 = vmatpush1.msra.mxu0 0.0
    %1283 = vmatprep.subr.mxu0 0.0
    %1284 = vmatpush1.msra.mxu0 0.0
    %1285 = vmatprep.subr.mxu0 0.0
    %1286 = vmatpush1.msra.mxu0 0.0
    %1287 = vmatprep.subr.mxu0 0.0
    %1288 = vmatpush1.msra.mxu0 0.0
    %1289 = vmatprep.subr.mxu0 0.0
    %1290 = vmatpush1.msra.mxu0 0.0
    %1291 = vmatprep.mubr.f32.mxu0 0.0
    %1292 = vmatmul.mubr.f32.gmra.mrb[0].mxu0 %v689
    %v1293 = vpop.f32.mrb[0].mxu0
    %v1294 = vadd.f32 0.0, %v1293
    %v1295 = vpop.f32.mrb[0].mxu0
    %v1296 = vadd.f32 0.0, %v1295
    %1297 = vdwg.mxu0
    %v1298 = vadd.f32 %v1152, %v1223
    %v1299 = vadd.f32 %v1153, %v1225
    %v1300 = vadd.f32 %v1154, %v1294
    %v1301 = vadd.f32 %v1155, %v1296
    %v1302 = vxor.u32 %v1298, 2147483648
    %v1303 = vxor.u32 %v1299, 2147483648
    %v1304 = vxor.u32 %v1300, 2147483648
    %v1305 = vmul.f32 %v1302, 1.442695
    %v1306 = vpow.pop %v1305
    %v1307 = vmul.f32 %v1303, 1.442695
    %v1308 = vpow.pop %v1307
    %v1309 = vmul.f32 %v1304, 1.442695
    %v1310 = vpow.pop %v1309
    %v1311 = vadd.f32 %v1306, 1.0
    %v1312 = vadd.f32 %v1308, 1.0
    %v1313 = vadd.f32 %v1310, 1.0
    %v1314 = vrcp.pop %v1311
    %v1315 = vmul.f32 1.0, %v1314
    %v1316 = vrcp.pop %v1312
    %v1317 = vmul.f32 1.0, %v1316
    %v1318 = vrcp.pop %v1313
    %v1319 = vmul.f32 1.0, %v1318
    %v1320 = vtanh.pop %v1301
    %v1321 = vmul.f32 %v1317, %v687
    %v1322 = vmul.f32 %v1315, %v1320
    %v1323 = vadd.f32 %v1321, %v1322
    %v1324 = vtanh.pop %v1323
    %v1325 = vmul.f32 %v1319, %v1324
    %1326 = vmatprep.subr.mxu0 %v755
    %1327 = vmatpush1.msra.mxu0 %v754
    %1328 = vmatprep.subr.mxu0 %v759
    %1329 = vmatpush1.msra.mxu0 %v758
    %1330 = vmatprep.subr.mxu0 %v763
    %1331 = vmatpush1.msra.mxu0 %v762
    %1332 = vmatprep.subr.mxu0 %v767
    %1333 = vmatpush1.msra.mxu0 %v766
    %1334 = vmatprep.subr.mxu0 %v771
    %1335 = vmatpush1.msra.mxu0 %v770
    %1336 = vmatprep.subr.mxu0 %v775
    %1337 = vmatpush1.msra.mxu0 %v774
    %1338 = vmatprep.subr.mxu0 %v779
    %1339 = vmatpush1.msra.mxu0 %v778
    %1340 = vmatprep.subr.mxu0 %v783
    %1341 = vmatpush1.msra.mxu0 %v782
    %1342 = vmatprep.subr.mxu0 %v787
    %1343 = vmatpush1.msra.mxu0 %v786
    %1344 = vmatprep.subr.mxu0 %v791
    %1345 = vmatpush1.msra.mxu0 %v790
    %1346 = vmatprep.subr.mxu0 %v795
    %1347 = vmatpush1.msra.mxu0 %v794
    %1348 = vmatprep.subr.mxu0 %v799
    %1349 = vmatpush1.msra.mxu0 %v798
    %1350 = vmatprep.subr.mxu0 %v803
    %1351 = vmatpush1.msra.mxu0 %v802
    %1352 = vmatprep.subr.mxu0 %v807
    %1353 = vmatpush1.msra.mxu0 %v806
    %1354 = vmatprep.subr.mxu0 %v811
    %1355 = vmatpush1.msra.mxu0 %v810
    %1356 = vmatprep.subr.mxu0 %v815
    %1357 = vmatpush1.msra.mxu0 %v814
    %1358 = vmatprep.subr.mxu0 0.0
    %1359 = vmatpush1.msra.mxu0 0.0
    %1360 = vmatprep.subr.mxu0 0.0
    %1361 = vmatpush1.msra.mxu0 0.0
    %1362 = vmatprep.subr.mxu0 0.0
    %1363 = vmatpush1.msra.mxu0 0.0
    %1364 = vmatprep.subr.mxu0 0.0
    %1365 = vmatpush1.msra.mxu0 0.0
    %1366 = vmatprep.subr.mxu0 0.0
    %1367 = vmatpush1.msra.mxu0 0.0
    %1368 = vmatprep.subr.mxu0 0.0
    %1369 = vmatpush1.msra.mxu0 0.0
    %1370 = vmatprep.subr.mxu0 0.0
    %1371 = vmatpush1.msra.mxu0 0.0
    %1372 = vmatprep.subr.mxu0 0.0
    %1373 = vmatpush1.msra.mxu0 0.0
    %1374 = vmatprep.subr.mxu0 0.0
    %1375 = vmatpush1.msra.mxu0 0.0
    %1376 = vmatprep.subr.mxu0 0.0
    %1377 = vmatpush1.msra.mxu0 0.0
    %1378 = vmatprep.subr.mxu0 0.0
    %1379 = vmatpush1.msra.mxu0 0.0
    %1380 = vmatprep.subr.mxu0 0.0
    %1381 = vmatpush1.msra.mxu0 0.0
    %1382 = vmatprep.subr.mxu0 0.0
    %1383 = vmatpush1.msra.mxu0 0.0
    %1384 = vmatprep.subr.mxu0 0.0
    %1385 = vmatpush1.msra.mxu0 0.0
    %1386 = vmatprep.subr.mxu0 0.0
    %1387 = vmatpush1.msra.mxu0 0.0
    %1388 = vmatprep.subr.mxu0 0.0
    %1389 = vmatpush1.msra.mxu0 0.0
    %1390 = vmatprep.mubr.f32.mxu0 0.0
    %1391 = vmatmul.mubr.f32.gmra.mrb[0].mxu0 %v1151
    %v1392 = vpop.f32.mrb[0].mxu0
    %v1393 = vadd.f32 0.0, %v1392
    %v1394 = vpop.f32.mrb[0].mxu0
    %v1395 = vadd.f32 0.0, %v1394
    %1396 = vdwg.mxu0
    %1397 = vmatprep.subr.mxu0 %v757
    %1398 = vmatpush1.msra.mxu0 %v756
    %1399 = vmatprep.subr.mxu0 %v761
    %1400 = vmatpush1.msra.mxu0 %v760
    %1401 = vmatprep.subr.mxu0 %v765
    %1402 = vmatpush1.msra.mxu0 %v764
    %1403 = vmatprep.subr.mxu0 %v769
    %1404 = vmatpush1.msra.mxu0 %v768
    %1405 = vmatprep.subr.mxu0 %v773
    %1406 = vmatpush1.msra.mxu0 %v772
    %1407 = vmatprep.subr.mxu0 %v777
    %1408 = vmatpush1.msra.mxu0 %v776
    %1409 = vmatprep.subr.mxu0 %v781
    %1410 = vmatpush1.msra.mxu0 %v780
    %1411 = vmatprep.subr.mxu0 %v785
    %1412 = vmatpush1.msra.mxu0 %v784
    %1413 = vmatprep.subr.mxu0 %v789
    %1414 = vmatpush1.msra.mxu0 %v788
    %1415 = vmatprep.subr.mxu0 %v793
    %1416 = vmatpush1.msra.mxu0 %v792
    %1417 = vmatprep.subr.mxu0 %v797
    %1418 = vmatpush1.msra.mxu0 %v796
    %1419 = vmatprep.subr.mxu0 %v801
    %1420 = vmatpush1.msra.mxu0 %v800
    %1421 = vmatprep.subr.mxu0 %v805
    %1422 = vmatpush1.msra.mxu0 %v804
    %1423 = vmatprep.subr.mxu0 %v809
    %1424 = vmatpush1.msra.mxu0 %v808
    %1425 = vmatprep.subr.mxu0 %v813
    %1426 = vmatpush1.msra.mxu0 %v812
    %1427 = vmatprep.subr.mxu0 %v817
    %1428 = vmatpush1.msra.mxu0 %v816
    %1429 = vmatprep.subr.mxu0 0.0
    %1430 = vmatpush1.msra.mxu0 0.0
    %1431 = vmatprep.subr.mxu0 0.0
    %1432 = vmatpush1.msra.mxu0 0.0
    %1433 = vmatprep.subr.mxu0 0.0
    %1434 = vmatpush1.msra.mxu0 0.0
    %1435 = vmatprep.subr.mxu0 0.0
    %1436 = vmatpush1.msra.mxu0 0.0
    %1437 = vmatprep.subr.mxu0 0.0
    %1438 = vmatpush1.msra.mxu0 0.0
    %1439 = vmatprep.subr.mxu0 0.0
    %1440 = vmatpush1.msra.mxu0 0.0
    %1441 = vmatprep.subr.mxu0 0.0
    %1442 = vmatpush1.msra.mxu0 0.0
    %1443 = vmatprep.subr.mxu0 0.0
    %1444 = vmatpush1.msra.mxu0 0.0
    %1445 = vmatprep.subr.mxu0 0.0
    %1446 = vmatpush1.msra.mxu0 0.0
    %1447 = vmatprep.subr.mxu0 0.0
    %1448 = vmatpush1.msra.mxu0 0.0
    %1449 = vmatprep.subr.mxu0 0.0
    %1450 = vmatpush1.msra.mxu0 0.0
    %1451 = vmatprep.subr.mxu0 0.0
    %1452 = vmatpush1.msra.mxu0 0.0
    %1453 = vmatprep.subr.mxu0 0.0
    %1454 = vmatpush1.msra.mxu0 0.0
    %1455 = vmatprep.subr.mxu0 0.0
    %1456 = vmatpush1.msra.mxu0 0.0
    %1457 = vmatprep.subr.mxu0 0.0
    %1458 = vmatpush1.msra.mxu0 0.0
    %1459 = vmatprep.subr.mxu0 0.0
    %1460 = vmatpush1.msra.mxu0 0.0
    %1461 = vmatprep.mubr.f32.mxu0 0.0
    %1462 = vmatmul.mubr.f32.gmra.mrb[0].mxu0 %v1151
    %v1463 = vpop.f32.mrb[0].mxu0
    %v1464 = vadd.f32 0.0, %v1463
    %v1465 = vpop.f32.mrb[0].mxu0
    %v1466 = vadd.f32 0.0, %v1465
    %1467 = vdwg.mxu0
    %1468 = vmatprep.subr.mxu0 %v691
    %1469 = vmatpush1.msra.mxu0 %v690
    %1470 = vmatprep.subr.mxu0 %v695
    %1471 = vmatpush1.msra.mxu0 %v694
    %1472 = vmatprep.subr.mxu0 %v699
    %1473 = vmatpush1.msra.mxu0 %v698
    %1474 = vmatprep.subr.mxu0 %v703
    %1475 = vmatpush1.msra.mxu0 %v702
    %1476 = vmatprep.subr.mxu0 %v707
    %1477 = vmatpush1.msra.mxu0 %v706
    %1478 = vmatprep.subr.mxu0 %v711
    %1479 = vmatpush1.msra.mxu0 %v710
    %1480 = vmatprep.subr.mxu0 %v715
    %1481 = vmatpush1.msra.mxu0 %v714
    %1482 = vmatprep.subr.mxu0 %v719
    %1483 = vmatpush1.msra.mxu0 %v718
    %1484 = vmatprep.subr.mxu0 %v723
    %1485 = vmatpush1.msra.mxu0 %v722
    %1486 = vmatprep.subr.mxu0 %v727
    %1487 = vmatpush1.msra.mxu0 %v726
    %1488 = vmatprep.subr.mxu0 %v731
    %1489 = vmatpush1.msra.mxu0 %v730
    %1490 = vmatprep.subr.mxu0 %v735
    %1491 = vmatpush1.msra.mxu0 %v734
    %1492 = vmatprep.subr.mxu0 %v739
    %1493 = vmatpush1.msra.mxu0 %v738
    %1494 = vmatprep.subr.mxu0 %v743
    %1495 = vmatpush1.msra.mxu0 %v742
    %1496 = vmatprep.subr.mxu0 %v747
    %1497 = vmatpush1.msra.mxu0 %v746
    %1498 = vmatprep.subr.mxu0 %v751
    %1499 = vmatpush1.msra.mxu0 %v750
    %1500 = vmatprep.subr.mxu0 0.0
    %1501 = vmatpush1.msra.mxu0 0.0
    %1502 = vmatprep.subr.mxu0 0.0
    %1503 = vmatpush1.msra.mxu0 0.0
    %1504 = vmatprep.subr.mxu0 0.0
    %1505 = vmatpush1.msra.mxu0 0.0
    %1506 = vmatprep.subr.mxu0 0.0
    %1507 = vmatpush1.msra.mxu0 0.0
    %1508 = vmatprep.subr.mxu0 0.0
    %1509 = vmatpush1.msra.mxu0 0.0
    %1510 = vmatprep.subr.mxu0 0.0
    %1511 = vmatpush1.msra.mxu0 0.0
    %1512 = vmatprep.subr.mxu0 0.0
    %1513 = vmatpush1.msra.mxu0 0.0
    %1514 = vmatprep.subr.mxu0 0.0
    %1515 = vmatpush1.msra.mxu0 0.0
    %1516 = vmatprep.subr.mxu0 0.0
    %1517 = vmatpush1.msra.mxu0 0.0
    %1518 = vmatprep.subr.mxu0 0.0
    %1519 = vmatpush1.msra.mxu0 0.0
    %1520 = vmatprep.subr.mxu0 0.0
    %1521 = vmatpush1.msra.mxu0 0.0
    %1522 = vmatprep.subr.mxu0 0.0
    %1523 = vmatpush1.msra.mxu0 0.0
    %1524 = vmatprep.subr.mxu0 0.0
    %1525 = vmatpush1.msra.mxu0 0.0
    %1526 = vmatprep.subr.mxu0 0.0
    %1527 = vmatpush1.msra.mxu0 0.0
    %1528 = vmatprep.subr.mxu0 0.0
    %1529 = vmatpush1.msra.mxu0 0.0
    %1530 = vmatprep.subr.mxu0 0.0
    %1531 = vmatpush1.msra.mxu0 0.0
    %1532 = vmatprep.mubr.f32.mxu0 0.0
    %1533 = vmatmul.mubr.f32.gmra.mrb[0].mxu0 %v1325
    %v1534 = vpop.f32.mrb[0].mxu0
    %v1535 = vadd.f32 %v1393, %v1534
    %v1536 = vpop.f32.mrb[0].mxu0
    %v1537 = vadd.f32 %v1395, %v1536
    %1538 = vdwg.mxu0
    %1539 = vmatprep.subr.mxu0 %v693
    %1540 = vmatpush1.msra.mxu0 %v692
    %1541 = vmatprep.subr.mxu0 %v697
    %1542 = vmatpush1.msra.mxu0 %v696
    %1543 = vmatprep.subr.mxu0 %v701
    %1544 = vmatpush1.msra.mxu0 %v700
    %1545 = vmatprep.subr.mxu0 %v705
    %1546 = vmatpush1.msra.mxu0 %v704
    %1547 = vmatprep.subr.mxu0 %v709
    %1548 = vmatpush1.msra.mxu0 %v708
    %1549 = vmatprep.subr.mxu0 %v713
    %1550 = vmatpush1.msra.mxu0 %v712
    %1551 = vmatprep.subr.mxu0 %v717
    %1552 = vmatpush1.msra.mxu0 %v716
    %1553 = vmatprep.subr.mxu0 %v721
    %1554 = vmatpush1.msra.mxu0 %v720
    %1555 = vmatprep.subr.mxu0 %v725
    %1556 = vmatpush1.msra.mxu0 %v724
    %1557 = vmatprep.subr.mxu0 %v729
    %1558 = vmatpush1.msra.mxu0 %v728
    %1559 = vmatprep.subr.mxu0 %v733
    %1560 = vmatpush1.msra.mxu0 %v732
    %1561 = vmatprep.subr.mxu0 %v737
    %1562 = vmatpush1.msra.mxu0 %v736
    %1563 = vmatprep.subr.mxu0 %v741
    %1564 = vmatpush1.msra.mxu0 %v740
    %1565 = vmatprep.subr.mxu0 %v745
    %1566 = vmatpush1.msra.mxu0 %v744
    %1567 = vmatprep.subr.mxu0 %v749
    %1568 = vmatpush1.msra.mxu0 %v748
    %1569 = vmatprep.subr.mxu0 %v753
    %1570 = vmatpush1.msra.mxu0 %v752
    %1571 = vmatprep.subr.mxu0 0.0
    %1572 = vmatpush1.msra.mxu0 0.0
    %1573 = vmatprep.subr.mxu0 0.0
    %1574 = vmatpush1.msra.mxu0 0.0
    %1575 = vmatprep.subr.mxu0 0.0
    %1576 = vmatpush1.msra.mxu0 0.0
    %1577 = vmatprep.subr.mxu0 0.0
    %1578 = vmatpush1.msra.mxu0 0.0
    %1579 = vmatprep.subr.mxu0 0.0
    %1580 = vmatpush1.msra.mxu0 0.0
    %1581 = vmatprep.subr.mxu0 0.0
    %1582 = vmatpush1.msra.mxu0 0.0
    %1583 = vmatprep.subr.mxu0 0.0
    %1584 = vmatpush1.msra.mxu0 0.0
    %1585 = vmatprep.subr.mxu0 0.0
    %1586 = vmatpush1.msra.mxu0 0.0
    %1587 = vmatprep.subr.mxu0 0.0
    %1588 = vmatpush1.msra.mxu0 0.0
    %1589 = vmatprep.subr.mxu0 0.0
    %1590 = vmatpush1.msra.mxu0 0.0
    %1591 = vmatprep.subr.mxu0 0.0
    %1592 = vmatpush1.msra.mxu0 0.0
    %1593 = vmatprep.subr.mxu0 0.0
    %1594 = vmatpush1.msra.mxu0 0.0
    %1595 = vmatprep.subr.mxu0 0.0
    %1596 = vmatpush1.msra.mxu0 0.0
    %1597 = vmatprep.subr.mxu0 0.0
    %1598 = vmatpush1.msra.mxu0 0.0
    %1599 = vmatprep.subr.mxu0 0.0
    %1600 = vmatpush1.msra.mxu0 0.0
    %1601 = vmatprep.subr.mxu0 0.0
    %1602 = vmatpush1.msra.mxu0 0.0
    %1603 = vmatprep.mubr.f32.mxu0 0.0
    %1604 = vmatmul.mubr.f32.gmra.mrb[0].mxu0 %v1325
    %v1605 = vpop.f32.mrb[0].mxu0
    %v1606 = vadd.f32 %v1464, %v1605
    %v1607 = vpop.f32.mrb[0].mxu0
    %v1608 = vadd.f32 %v1466, %v1607
    %1609 = vdwg.mxu0
    %v1610 = vadd.f32 %v1535, %v1107
    %v1611 = vadd.f32 %v1537, %v1111
    %v1612 = vadd.f32 %v1606, %v1115
    %v1613 = vadd.f32 %v1608, %v1119
    %v1614 = vxor.u32 %v1610, 2147483648
    %v1615 = vxor.u32 %v1611, 2147483648
    %v1616 = vxor.u32 %v1612, 2147483648
    %v1617 = vmul.f32 %v1614, 1.442695
    %v1618 = vpow.pop %v1617
    %v1619 = vmul.f32 %v1615, 1.442695
    %v1620 = vpow.pop %v1619
    %v1621 = vmul.f32 %v1616, 1.442695
    %v1622 = vpow.pop %v1621
    %v1623 = vadd.f32 %v1618, 1.0
    %v1624 = vadd.f32 %v1620, 1.0
    %v1625 = vadd.f32 %v1622, 1.0
    %v1626 = vrcp.pop %v1623
    %v1627 = vmul.f32 1.0, %v1626
    %v1628 = vrcp.pop %v1624
    %v1629 = vmul.f32 1.0, %v1628
    %v1630 = vrcp.pop %v1625
    %v1631 = vmul.f32 1.0, %v1630
    %v1632 = vtanh.pop %v1613
    %v1633 = vmul.f32 %v1629, %v1149
    %v1634 = vmul.f32 %v1627, %v1632
    %v1635 = vadd.f32 %v1633, %v1634
    %v1636 = vtanh.pop %v1635
    %v1637 = vmul.f32 %v1631, %v1636
    %v1638 = vld [vmem:[#allocation2 + $0x40] sm:$0xff]
    %v1639 = vld [vmem:[#allocation2 + $0x48] sm:$0xff]
    %v1640 = vld [vmem:[#allocation2 + $0x50] sm:$0xff]
    %v1641 = vld [vmem:[#allocation2 + $0x58] sm:$0xff]
    %1642 = vmatprep.subr.mxu0 %v457
    %1643 = vmatpush1.msra.mxu0 %v456
    %1644 = vmatprep.subr.mxu0 %v461
    %1645 = vmatpush1.msra.mxu0 %v460
    %1646 = vmatprep.subr.mxu0 %v465
    %1647 = vmatpush1.msra.mxu0 %v464
    %1648 = vmatprep.subr.mxu0 %v469
    %1649 = vmatpush1.msra.mxu0 %v468
    %1650 = vmatprep.subr.mxu0 %v473
    %1651 = vmatpush1.msra.mxu0 %v472
    %1652 = vmatprep.subr.mxu0 %v477
    %1653 = vmatpush1.msra.mxu0 %v476
    %1654 = vmatprep.subr.mxu0 %v481
    %1655 = vmatpush1.msra.mxu0 %v480
    %1656 = vmatprep.subr.mxu0 %v485
    %1657 = vmatpush1.msra.mxu0 %v484
    %1658 = vmatprep.subr.mxu0 %v489
    %1659 = vmatpush1.msra.mxu0 %v488
    %1660 = vmatprep.subr.mxu0 %v493
    %1661 = vmatpush1.msra.mxu0 %v492
    %1662 = vmatprep.subr.mxu0 %v497
    %1663 = vmatpush1.msra.mxu0 %v496
    %1664 = vmatprep.subr.mxu0 %v501
    %1665 = vmatpush1.msra.mxu0 %v500
    %1666 = vmatprep.subr.mxu0 %v505
    %1667 = vmatpush1.msra.mxu0 %v504
    %1668 = vmatprep.subr.mxu0 %v509
    %1669 = vmatpush1.msra.mxu0 %v508
    %1670 = vmatprep.subr.mxu0 %v513
    %1671 = vmatpush1.msra.mxu0 %v512
    %1672 = vmatprep.subr.mxu0 %v517
    %1673 = vmatpush1.msra.mxu0 %v516
    %1674 = vmatprep.subr.mxu0 0.0
    %1675 = vmatpush1.msra.mxu0 0.0
    %1676 = vmatprep.subr.mxu0 0.0
    %1677 = vmatpush1.msra.mxu0 0.0
    %1678 = vmatprep.subr.mxu0 0.0
    %1679 = vmatpush1.msra.mxu0 0.0
    %1680 = vmatprep.subr.mxu0 0.0
    %1681 = vmatpush1.msra.mxu0 0.0
    %1682 = vmatprep.subr.mxu0 0.0
    %1683 = vmatpush1.msra.mxu0 0.0
    %1684 = vmatprep.subr.mxu0 0.0
    %1685 = vmatpush1.msra.mxu0 0.0
    %1686 = vmatprep.subr.mxu0 0.0
    %1687 = vmatpush1.msra.mxu0 0.0
    %1688 = vmatprep.subr.mxu0 0.0
    %1689 = vmatpush1.msra.mxu0 0.0
    %1690 = vmatprep.subr.mxu0 0.0
    %1691 = vmatpush1.msra.mxu0 0.0
    %1692 = vmatprep.subr.mxu0 0.0
    %1693 = vmatpush1.msra.mxu0 0.0
    %1694 = vmatprep.subr.mxu0 0.0
    %1695 = vmatpush1.msra.mxu0 0.0
    %1696 = vmatprep.subr.mxu0 0.0
    %1697 = vmatpush1.msra.mxu0 0.0
    %1698 = vmatprep.subr.mxu0 0.0
    %1699 = vmatpush1.msra.mxu0 0.0
    %1700 = vmatprep.subr.mxu0 0.0
    %1701 = vmatpush1.msra.mxu0 0.0
    %1702 = vmatprep.subr.mxu0 0.0
    %1703 = vmatpush1.msra.mxu0 0.0
    %1704 = vmatprep.subr.mxu0 0.0
    %1705 = vmatpush1.msra.mxu0 0.0
    %1706 = vmatprep.mubr.f32.mxu0 0.0
    %1707 = vmatmul.mubr.f32.gmra.mrb[0].mxu0 %v1325
    %v1708 = vpop.f32.mrb[0].mxu0
    %v1709 = vadd.f32 0.0, %v1708
    %v1710 = vpop.f32.mrb[0].mxu0
    %v1711 = vadd.f32 0.0, %v1710
    %1712 = vdwg.mxu0
    %1713 = vmatprep.subr.mxu0 %v459
    %1714 = vmatpush1.msra.mxu0 %v458
    %1715 = vmatprep.subr.mxu0 %v463
    %1716 = vmatpush1.msra.mxu0 %v462
    %1717 = vmatprep.subr.mxu0 %v467
    %1718 = vmatpush1.msra.mxu0 %v466
    %1719 = vmatprep.subr.mxu0 %v471
    %1720 = vmatpush1.msra.mxu0 %v470
    %1721 = vmatprep.subr.mxu0 %v475
    %1722 = vmatpush1.msra.mxu0 %v474
    %1723 = vmatprep.subr.mxu0 %v479
    %1724 = vmatpush1.msra.mxu0 %v478
    %1725 = vmatprep.subr.mxu0 %v483
    %1726 = vmatpush1.msra.mxu0 %v482
    %1727 = vmatprep.subr.mxu0 %v487
    %1728 = vmatpush1.msra.mxu0 %v486
    %1729 = vmatprep.subr.mxu0 %v491
    %1730 = vmatpush1.msra.mxu0 %v490
    %1731 = vmatprep.subr.mxu0 %v495
    %1732 = vmatpush1.msra.mxu0 %v494
    %1733 = vmatprep.subr.mxu0 %v499
    %1734 = vmatpush1.msra.mxu0 %v498
    %1735 = vmatprep.subr.mxu0 %v503
    %1736 = vmatpush1.msra.mxu0 %v502
    %1737 = vmatprep.subr.mxu0 %v507
    %1738 = vmatpush1.msra.mxu0 %v506
    %1739 = vmatprep.subr.mxu0 %v511
    %1740 = vmatpush1.msra.mxu0 %v510
    %1741 = vmatprep.subr.mxu0 %v515
    %1742 = vmatpush1.msra.mxu0 %v514
    %1743 = vmatprep.subr.mxu0 %v519
    %1744 = vmatpush1.msra.mxu0 %v518
    %1745 = vmatprep.subr.mxu0 0.0
    %1746 = vmatpush1.msra.mxu0 0.0
    %1747 = vmatprep.subr.mxu0 0.0
    %1748 = vmatpush1.msra.mxu0 0.0
    %1749 = vmatprep.subr.mxu0 0.0
    %1750 = vmatpush1.msra.mxu0 0.0
    %1751 = vmatprep.subr.mxu0 0.0
    %1752 = vmatpush1.msra.mxu0 0.0
    %1753 = vmatprep.subr.mxu0 0.0
    %1754 = vmatpush1.msra.mxu0 0.0
    %1755 = vmatprep.subr.mxu0 0.0
    %1756 = vmatpush1.msra.mxu0 0.0
    %1757 = vmatprep.subr.mxu0 0.0
    %1758 = vmatpush1.msra.mxu0 0.0
    %1759 = vmatprep.subr.mxu0 0.0
    %1760 = vmatpush1.msra.mxu0 0.0
    %1761 = vmatprep.subr.mxu0 0.0
    %1762 = vmatpush1.msra.mxu0 0.0
    %1763 = vmatprep.subr.mxu0 0.0
    %1764 = vmatpush1.msra.mxu0 0.0
    %1765 = vmatprep.subr.mxu0 0.0
    %1766 = vmatpush1.msra.mxu0 0.0
    %1767 = vmatprep.subr.mxu0 0.0
    %1768 = vmatpush1.msra.mxu0 0.0
    %1769 = vmatprep.subr.mxu0 0.0
    %1770 = vmatpush1.msra.mxu0 0.0
    %1771 = vmatprep.subr.mxu0 0.0
    %1772 = vmatpush1.msra.mxu0 0.0
    %1773 = vmatprep.subr.mxu0 0.0
    %1774 = vmatpush1.msra.mxu0 0.0
    %1775 = vmatprep.subr.mxu0 0.0
    %1776 = vmatpush1.msra.mxu0 0.0
    %1777 = vmatprep.mubr.f32.mxu0 0.0
    %1778 = vmatmul.mubr.f32.gmra.mrb[0].mxu0 %v1325
    %v1779 = vpop.f32.mrb[0].mxu0
    %v1780 = vadd.f32 0.0, %v1779
    %v1781 = vpop.f32.mrb[0].mxu0
    %v1782 = vadd.f32 0.0, %v1781
    %1783 = vdwg.mxu0
    %v1784 = vadd.f32 %v1638, %v1709
    %v1785 = vadd.f32 %v1639, %v1711
    %v1786 = vadd.f32 %v1640, %v1780
    %v1787 = vadd.f32 %v1641, %v1782
    %v1788 = vxor.u32 %v1784, 2147483648
    %v1789 = vxor.u32 %v1785, 2147483648
    %v1790 = vxor.u32 %v1786, 2147483648
    %v1791 = vmul.f32 %v1788, 1.442695
    %v1792 = vpow.pop %v1791
    %v1793 = vmul.f32 %v1789, 1.442695
    %v1794 = vpow.pop %v1793
    %v1795 = vmul.f32 %v1790, 1.442695
    %v1796 = vpow.pop %v1795
    %v1797 = vadd.f32 %v1792, 1.0
    %v1798 = vadd.f32 %v1794, 1.0
    %v1799 = vadd.f32 %v1796, 1.0
    %v1800 = vrcp.pop %v1797
    %v1801 = vmul.f32 1.0, %v1800
    %v1802 = vrcp.pop %v1798
    %v1803 = vmul.f32 1.0, %v1802
    %v1804 = vrcp.pop %v1799
    %v1805 = vmul.f32 1.0, %v1804
    %v1806 = vtanh.pop %v1787
    %v1807 = vmul.f32 %v1803, %v1323
    %v1808 = vmul.f32 %v1801, %v1806
    %v1809 = vadd.f32 %v1807, %v1808
    %v1810 = vtanh.pop %v1809
    %v1811 = vmul.f32 %v1805, %v1810
    %1812 = vmatprep.subr.mxu0 %v755
    %1813 = vmatpush1.msra.mxu0 %v754
    %1814 = vmatprep.subr.mxu0 %v759
    %1815 = vmatpush1.msra.mxu0 %v758
    %1816 = vmatprep.subr.mxu0 %v763
    %1817 = vmatpush1.msra.mxu0 %v762
    %1818 = vmatprep.subr.mxu0 %v767
    %1819 = vmatpush1.msra.mxu0 %v766
    %1820 = vmatprep.subr.mxu0 %v771
    %1821 = vmatpush1.msra.mxu0 %v770
    %1822 = vmatprep.subr.mxu0 %v775
    %1823 = vmatpush1.msra.mxu0 %v774
    %1824 = vmatprep.subr.mxu0 %v779
    %1825 = vmatpush1.msra.mxu0 %v778
    %1826 = vmatprep.subr.mxu0 %v783
    %1827 = vmatpush1.msra.mxu0 %v782
    %1828 = vmatprep.subr.mxu0 %v787
    %1829 = vmatpush1.msra.mxu0 %v786
    %1830 = vmatprep.subr.mxu0 %v791
    %1831 = vmatpush1.msra.mxu0 %v790
    %1832 = vmatprep.subr.mxu0 %v795
    %1833 = vmatpush1.msra.mxu0 %v794
    %1834 = vmatprep.subr.mxu0 %v799
    %1835 = vmatpush1.msra.mxu0 %v798
    %1836 = vmatprep.subr.mxu0 %v803
    %1837 = vmatpush1.msra.mxu0 %v802
    %1838 = vmatprep.subr.mxu0 %v807
    %1839 = vmatpush1.msra.mxu0 %v806
    %1840 = vmatprep.subr.mxu0 %v811
    %1841 = vmatpush1.msra.mxu0 %v810
    %1842 = vmatprep.subr.mxu0 %v815
    %1843 = vmatpush1.msra.mxu0 %v814
    %1844 = vmatprep.subr.mxu0 0.0
    %1845 = vmatpush1.msra.mxu0 0.0
    %1846 = vmatprep.subr.mxu0 0.0
    %1847 = vmatpush1.msra.mxu0 0.0
    %1848 = vmatprep.subr.mxu0 0.0
    %1849 = vmatpush1.msra.mxu0 0.0
    %1850 = vmatprep.subr.mxu0 0.0
    %1851 = vmatpush1.msra.mxu0 0.0
    %1852 = vmatprep.subr.mxu0 0.0
    %1853 = vmatpush1.msra.mxu0 0.0
    %1854 = vmatprep.subr.mxu0 0.0
    %1855 = vmatpush1.msra.mxu0 0.0
    %1856 = vmatprep.subr.mxu0 0.0
    %1857 = vmatpush1.msra.mxu0 0.0
    %1858 = vmatprep.subr.mxu0 0.0
    %1859 = vmatpush1.msra.mxu0 0.0
    %1860 = vmatprep.subr.mxu0 0.0
    %1861 = vmatpush1.msra.mxu0 0.0
    %1862 = vmatprep.subr.mxu0 0.0
    %1863 = vmatpush1.msra.mxu0 0.0
    %1864 = vmatprep.subr.mxu0 0.0
    %1865 = vmatpush1.msra.mxu0 0.0
    %1866 = vmatprep.subr.mxu0 0.0
    %1867 = vmatpush1.msra.mxu0 0.0
    %1868 = vmatprep.subr.mxu0 0.0
    %1869 = vmatpush1.msra.mxu0 0.0
    %1870 = vmatprep.subr.mxu0 0.0
    %1871 = vmatpush1.msra.mxu0 0.0
    %1872 = vmatprep.subr.mxu0 0.0
    %1873 = vmatpush1.msra.mxu0 0.0
    %1874 = vmatprep.subr.mxu0 0.0
    %1875 = vmatpush1.msra.mxu0 0.0
    %1876 = vmatprep.mubr.f32.mxu0 0.0
    %1877 = vmatmul.mubr.f32.gmra.mrb[0].mxu0 %v1637
    %v1878 = vpop.f32.mrb[0].mxu0
    %v1879 = vadd.f32 0.0, %v1878
    %v1880 = vpop.f32.mrb[0].mxu0
    %v1881 = vadd.f32 0.0, %v1880
    %1882 = vdwg.mxu0
    %1883 = vmatprep.subr.mxu0 %v757
    %1884 = vmatpush1.msra.mxu0 %v756
    %1885 = vmatprep.subr.mxu0 %v761
    %1886 = vmatpush1.msra.mxu0 %v760
    %1887 = vmatprep.subr.mxu0 %v765
    %1888 = vmatpush1.msra.mxu0 %v764
    %1889 = vmatprep.subr.mxu0 %v769
    %1890 = vmatpush1.msra.mxu0 %v768
    %1891 = vmatprep.subr.mxu0 %v773
    %1892 = vmatpush1.msra.mxu0 %v772
    %1893 = vmatprep.subr.mxu0 %v777
    %1894 = vmatpush1.msra.mxu0 %v776
    %1895 = vmatprep.subr.mxu0 %v781
    %1896 = vmatpush1.msra.mxu0 %v780
    %1897 = vmatprep.subr.mxu0 %v785
    %1898 = vmatpush1.msra.mxu0 %v784
    %1899 = vmatprep.subr.mxu0 %v789
    %1900 = vmatpush1.msra.mxu0 %v788
    %1901 = vmatprep.subr.mxu0 %v793
    %1902 = vmatpush1.msra.mxu0 %v792
    %1903 = vmatprep.subr.mxu0 %v797
    %1904 = vmatpush1.msra.mxu0 %v796
    %1905 = vmatprep.subr.mxu0 %v801
    %1906 = vmatpush1.msra.mxu0 %v800
    %1907 = vmatprep.subr.mxu0 %v805
    %1908 = vmatpush1.msra.mxu0 %v804
    %1909 = vmatprep.subr.mxu0 %v809
    %1910 = vmatpush1.msra.mxu0 %v808
    %1911 = vmatprep.subr.mxu0 %v813
    %1912 = vmatpush1.msra.mxu0 %v812
    %1913 = vmatprep.subr.mxu0 %v817
    %1914 = vmatpush1.msra.mxu0 %v816
    %1915 = vmatprep.subr.mxu0 0.0
    %1916 = vmatpush1.msra.mxu0 0.0
    %1917 = vmatprep.subr.mxu0 0.0
    %1918 = vmatpush1.msra.mxu0 0.0
    %1919 = vmatprep.subr.mxu0 0.0
    %1920 = vmatpush1.msra.mxu0 0.0
    %1921 = vmatprep.subr.mxu0 0.0
    %1922 = vmatpush1.msra.mxu0 0.0
    %1923 = vmatprep.subr.mxu0 0.0
    %1924 = vmatpush1.msra.mxu0 0.0
    %1925 = vmatprep.subr.mxu0 0.0
    %1926 = vmatpush1.msra.mxu0 0.0
    %1927 = vmatprep.subr.mxu0 0.0
    %1928 = vmatpush1.msra.mxu0 0.0
    %1929 = vmatprep.subr.mxu0 0.0
    %1930 = vmatpush1.msra.mxu0 0.0
    %1931 = vmatprep.subr.mxu0 0.0
    %1932 = vmatpush1.msra.mxu0 0.0
    %1933 = vmatprep.subr.mxu0 0.0
    %1934 = vmatpush1.msra.mxu0 0.0
    %1935 = vmatprep.subr.mxu0 0.0
    %1936 = vmatpush1.msra.mxu0 0.0
    %1937 = vmatprep.subr.mxu0 0.0
    %1938 = vmatpush1.msra.mxu0 0.0
    %1939 = vmatprep.subr.mxu0 0.0
    %1940 = vmatpush1.msra.mxu0 0.0
    %1941 = vmatprep.subr.mxu0 0.0
    %1942 = vmatpush1.msra.mxu0 0.0
    %1943 = vmatprep.subr.mxu0 0.0
    %1944 = vmatpush1.msra.mxu0 0.0
    %1945 = vmatprep.subr.mxu0 0.0
    %1946 = vmatpush1.msra.mxu0 0.0
    %1947 = vmatprep.mubr.f32.mxu0 0.0
    %1948 = vmatmul.mubr.f32.gmra.mrb[0].mxu0 %v1637
    %v1949 = vpop.f32.mrb[0].mxu0
    %v1950 = vadd.f32 0.0, %v1949
    %v1951 = vpop.f32.mrb[0].mxu0
    %v1952 = vadd.f32 0.0, %v1951
    %1953 = vdwg.mxu0
    %1954 = vmatprep.subr.mxu0 %v691
    %1955 = vmatpush1.msra.mxu0 %v690
    %1956 = vmatprep.subr.mxu0 %v695
    %1957 = vmatpush1.msra.mxu0 %v694
    %1958 = vmatprep.subr.mxu0 %v699
    %1959 = vmatpush1.msra.mxu0 %v698
    %1960 = vmatprep.subr.mxu0 %v703
    %1961 = vmatpush1.msra.mxu0 %v702
    %1962 = vmatprep.subr.mxu0 %v707
    %1963 = vmatpush1.msra.mxu0 %v706
    %1964 = vmatprep.subr.mxu0 %v711
    %1965 = vmatpush1.msra.mxu0 %v710
    %1966 = vmatprep.subr.mxu0 %v715
    %1967 = vmatpush1.msra.mxu0 %v714
    %1968 = vmatprep.subr.mxu0 %v719
    %1969 = vmatpush1.msra.mxu0 %v718
    %1970 = vmatprep.subr.mxu0 %v723
    %1971 = vmatpush1.msra.mxu0 %v722
    %1972 = vmatprep.subr.mxu0 %v727
    %1973 = vmatpush1.msra.mxu0 %v726
    %1974 = vmatprep.subr.mxu0 %v731
    %1975 = vmatpush1.msra.mxu0 %v730
    %1976 = vmatprep.subr.mxu0 %v735
    %1977 = vmatpush1.msra.mxu0 %v734
    %1978 = vmatprep.subr.mxu0 %v739
    %1979 = vmatpush1.msra.mxu0 %v738
    %1980 = vmatprep.subr.mxu0 %v743
    %1981 = vmatpush1.msra.mxu0 %v742
    %1982 = vmatprep.subr.mxu0 %v747
    %1983 = vmatpush1.msra.mxu0 %v746
    %1984 = vmatprep.subr.mxu0 %v751
    %1985 = vmatpush1.msra.mxu0 %v750
    %1986 = vmatprep.subr.mxu0 0.0
    %1987 = vmatpush1.msra.mxu0 0.0
    %1988 = vmatprep.subr.mxu0 0.0
    %1989 = vmatpush1.msra.mxu0 0.0
    %1990 = vmatprep.subr.mxu0 0.0
    %1991 = vmatpush1.msra.mxu0 0.0
    %1992 = vmatprep.subr.mxu0 0.0
    %1993 = vmatpush1.msra.mxu0 0.0
    %1994 = vmatprep.subr.mxu0 0.0
    %1995 = vmatpush1.msra.mxu0 0.0
    %1996 = vmatprep.subr.mxu0 0.0
    %1997 = vmatpush1.msra.mxu0 0.0
    %1998 = vmatprep.subr.mxu0 0.0
    %1999 = vmatpush1.msra.mxu0 0.0
    %2000 = vmatprep.subr.mxu0 0.0
    %2001 = vmatpush1.msra.mxu0 0.0
    %2002 = vmatprep.subr.mxu0 0.0
    %2003 = vmatpush1.msra.mxu0 0.0
    %2004 = vmatprep.subr.mxu0 0.0
    %2005 = vmatpush1.msra.mxu0 0.0
    %2006 = vmatprep.subr.mxu0 0.0
    %2007 = vmatpush1.msra.mxu0 0.0
    %2008 = vmatprep.subr.mxu0 0.0
    %2009 = vmatpush1.msra.mxu0 0.0
    %2010 = vmatprep.subr.mxu0 0.0
    %2011 = vmatpush1.msra.mxu0 0.0
    %2012 = vmatprep.subr.mxu0 0.0
    %2013 = vmatpush1.msra.mxu0 0.0
    %2014 = vmatprep.subr.mxu0 0.0
    %2015 = vmatpush1.msra.mxu0 0.0
    %2016 = vmatprep.subr.mxu0 0.0
    %2017 = vmatpush1.msra.mxu0 0.0
    %2018 = vmatprep.mubr.f32.mxu0 0.0
    %2019 = vmatmul.mubr.f32.gmra.mrb[0].mxu0 %v1811
    %v2020 = vpop.f32.mrb[0].mxu0
    %v2021 = vadd.f32 %v1879, %v2020
    %v2022 = vpop.f32.mrb[0].mxu0
    %v2023 = vadd.f32 %v1881, %v2022
    %2024 = vdwg.mxu0
    %2025 = vmatprep.subr.mxu0 %v693
    %2026 = vmatpush1.msra.mxu0 %v692
    %2027 = vmatprep.subr.mxu0 %v697
    %2028 = vmatpush1.msra.mxu0 %v696
    %2029 = vmatprep.subr.mxu0 %v701
    %2030 = vmatpush1.msra.mxu0 %v700
    %2031 = vmatprep.subr.mxu0 %v705
    %2032 = vmatpush1.msra.mxu0 %v704
    %2033 = vmatprep.subr.mxu0 %v709
    %2034 = vmatpush1.msra.mxu0 %v708
    %2035 = vmatprep.subr.mxu0 %v713
    %2036 = vmatpush1.msra.mxu0 %v712
    %2037 = vmatprep.subr.mxu0 %v717
    %2038 = vmatpush1.msra.mxu0 %v716
    %2039 = vmatprep.subr.mxu0 %v721
    %2040 = vmatpush1.msra.mxu0 %v720
    %2041 = vmatprep.subr.mxu0 %v725
    %2042 = vmatpush1.msra.mxu0 %v724
    %2043 = vmatprep.subr.mxu0 %v729
    %2044 = vmatpush1.msra.mxu0 %v728
    %2045 = vmatprep.subr.mxu0 %v733
    %2046 = vmatpush1.msra.mxu0 %v732
    %2047 = vmatprep.subr.mxu0 %v737
    %2048 = vmatpush1.msra.mxu0 %v736
    %2049 = vmatprep.subr.mxu0 %v741
    %2050 = vmatpush1.msra.mxu0 %v740
    %2051 = vmatprep.subr.mxu0 %v745
    %2052 = vmatpush1.msra.mxu0 %v744
    %2053 = vmatprep.subr.mxu0 %v749
    %2054 = vmatpush1.msra.mxu0 %v748
    %2055 = vmatprep.subr.mxu0 %v753
    %2056 = vmatpush1.msra.mxu0 %v752
    %2057 = vmatprep.subr.mxu0 0.0
    %2058 = vmatpush1.msra.mxu0 0.0
    %2059 = vmatprep.subr.mxu0 0.0
    %2060 = vmatpush1.msra.mxu0 0.0
    %2061 = vmatprep.subr.mxu0 0.0
    %2062 = vmatpush1.msra.mxu0 0.0
    %2063 = vmatprep.subr.mxu0 0.0
    %2064 = vmatpush1.msra.mxu0 0.0
    %2065 = vmatprep.subr.mxu0 0.0
    %2066 = vmatpush1.msra.mxu0 0.0
    %2067 = vmatprep.subr.mxu0 0.0
    %2068 = vmatpush1.msra.mxu0 0.0
    %2069 = vmatprep.subr.mxu0 0.0
    %2070 = vmatpush1.msra.mxu0 0.0
    %2071 = vmatprep.subr.mxu0 0.0
    %2072 = vmatpush1.msra.mxu0 0.0
    %2073 = vmatprep.subr.mxu0 0.0
    %2074 = vmatpush1.msra.mxu0 0.0
    %2075 = vmatprep.subr.mxu0 0.0
    %2076 = vmatpush1.msra.mxu0 0.0
    %2077 = vmatprep.subr.mxu0 0.0
    %2078 = vmatpush1.msra.mxu0 0.0
    %2079 = vmatprep.subr.mxu0 0.0
    %2080 = vmatpush1.msra.mxu0 0.0
    %2081 = vmatprep.subr.mxu0 0.0
    %2082 = vmatpush1.msra.mxu0 0.0
    %2083 = vmatprep.subr.mxu0 0.0
    %2084 = vmatpush1.msra.mxu0 0.0
    %2085 = vmatprep.subr.mxu0 0.0
    %2086 = vmatpush1.msra.mxu0 0.0
    %2087 = vmatprep.subr.mxu0 0.0
    %2088 = vmatpush1.msra.mxu0 0.0
    %2089 = vmatprep.mubr.f32.mxu0 0.0
    %2090 = vmatmul.mubr.f32.gmra.mrb[0].mxu0 %v1811
    %v2091 = vpop.f32.mrb[0].mxu0
    %v2092 = vadd.f32 %v1950, %v2091
    %v2093 = vpop.f32.mrb[0].mxu0
    %v2094 = vadd.f32 %v1952, %v2093
    %2095 = vdwg.mxu0
    %v2096 = vadd.f32 %v2021, %v1107
    %v2097 = vadd.f32 %v2023, %v1111
    %v2098 = vadd.f32 %v2092, %v1115
    %v2099 = vadd.f32 %v2094, %v1119
    %v2100 = vxor.u32 %v2096, 2147483648
    %v2101 = vxor.u32 %v2097, 2147483648
    %v2102 = vxor.u32 %v2098, 2147483648
    %v2103 = vmul.f32 %v2100, 1.442695
    %v2104 = vpow.pop %v2103
    %v2105 = vmul.f32 %v2101, 1.442695
    %v2106 = vpow.pop %v2105
    %v2107 = vmul.f32 %v2102, 1.442695
    %v2108 = vpow.pop %v2107
    %v2109 = vadd.f32 %v2104, 1.0
    %v2110 = vadd.f32 %v2106, 1.0
    %v2111 = vadd.f32 %v2108, 1.0
    %v2112 = vrcp.pop %v2109
    %v2113 = vmul.f32 1.0, %v2112
    %v2114 = vrcp.pop %v2110
    %v2115 = vmul.f32 1.0, %v2114
    %v2116 = vrcp.pop %v2111
    %v2117 = vmul.f32 1.0, %v2116
    %v2118 = vtanh.pop %v2099
    %v2119 = vmul.f32 %v2115, %v1635
    %v2120 = vmul.f32 %v2113, %v2118
    %v2121 = vadd.f32 %v2119, %v2120
    %v2122 = vtanh.pop %v2121
    %v2123 = vmul.f32 %v2117, %v2122
    %v2124 = vld [vmem:[#allocation2 + $0x60] sm:$0xff]
    %v2125 = vld [vmem:[#allocation2 + $0x68] sm:$0xff]
    %v2126 = vld [vmem:[#allocation2 + $0x70] sm:$0xff]
    %v2127 = vld [vmem:[#allocation2 + $0x78] sm:$0xff]
    %2128 = vmatprep.subr.mxu0 %v457
    %2129 = vmatpush1.msra.mxu0 %v456
    %2130 = vmatprep.subr.mxu0 %v461
    %2131 = vmatpush1.msra.mxu0 %v460
    %2132 = vmatprep.subr.mxu0 %v465
    %2133 = vmatpush1.msra.mxu0 %v464
    %2134 = vmatprep.subr.mxu0 %v469
    %2135 = vmatpush1.msra.mxu0 %v468
    %2136 = vmatprep.subr.mxu0 %v473
    %2137 = vmatpush1.msra.mxu0 %v472
    %2138 = vmatprep.subr.mxu0 %v477
    %2139 = vmatpush1.msra.mxu0 %v476
    %2140 = vmatprep.subr.mxu0 %v481
    %2141 = vmatpush1.msra.mxu0 %v480
    %2142 = vmatprep.subr.mxu0 %v485
    %2143 = vmatpush1.msra.mxu0 %v484
    %2144 = vmatprep.subr.mxu0 %v489
    %2145 = vmatpush1.msra.mxu0 %v488
    %2146 = vmatprep.subr.mxu0 %v493
    %2147 = vmatpush1.msra.mxu0 %v492
    %2148 = vmatprep.subr.mxu0 %v497
    %2149 = vmatpush1.msra.mxu0 %v496
    %2150 = vmatprep.subr.mxu0 %v501
    %2151 = vmatpush1.msra.mxu0 %v500
    %2152 = vmatprep.subr.mxu0 %v505
    %2153 = vmatpush1.msra.mxu0 %v504
    %2154 = vmatprep.subr.mxu0 %v509
    %2155 = vmatpush1.msra.mxu0 %v508
    %2156 = vmatprep.subr.mxu0 %v513
    %2157 = vmatpush1.msra.mxu0 %v512
    %2158 = vmatprep.subr.mxu0 %v517
    %2159 = vmatpush1.msra.mxu0 %v516
    %2160 = vmatprep.subr.mxu0 0.0
    %2161 = vmatpush1.msra.mxu0 0.0
    %2162 = vmatprep.subr.mxu0 0.0
    %2163 = vmatpush1.msra.mxu0 0.0
    %2164 = vmatprep.subr.mxu0 0.0
    %2165 = vmatpush1.msra.mxu0 0.0
    %2166 = vmatprep.subr.mxu0 0.0
    %2167 = vmatpush1.msra.mxu0 0.0
    %2168 = vmatprep.subr.mxu0 0.0
    %2169 = vmatpush1.msra.mxu0 0.0
    %2170 = vmatprep.subr.mxu0 0.0
    %2171 = vmatpush1.msra.mxu0 0.0
    %2172 = vmatprep.subr.mxu0 0.0
    %2173 = vmatpush1.msra.mxu0 0.0
    %2174 = vmatprep.subr.mxu0 0.0
    %2175 = vmatpush1.msra.mxu0 0.0
    %2176 = vmatprep.subr.mxu0 0.0
    %2177 = vmatpush1.msra.mxu0 0.0
    %2178 = vmatprep.subr.mxu0 0.0
    %2179 = vmatpush1.msra.mxu0 0.0
    %2180 = vmatprep.subr.mxu0 0.0
    %2181 = vmatpush1.msra.mxu0 0.0
    %2182 = vmatprep.subr.mxu0 0.0
    %2183 = vmatpush1.msra.mxu0 0.0
    %2184 = vmatprep.subr.mxu0 0.0
    %2185 = vmatpush1.msra.mxu0 0.0
    %2186 = vmatprep.subr.mxu0 0.0
    %2187 = vmatpush1.msra.mxu0 0.0
    %2188 = vmatprep.subr.mxu0 0.0
    %2189 = vmatpush1.msra.mxu0 0.0
    %2190 = vmatprep.subr.mxu0 0.0
    %2191 = vmatpush1.msra.mxu0 0.0
    %2192 = vmatprep.mubr.f32.mxu0 0.0
    %2193 = vmatmul.mubr.f32.gmra.mrb[0].mxu0 %v1811
    %v2194 = vpop.f32.mrb[0].mxu0
    %v2195 = vadd.f32 0.0, %v2194
    %v2196 = vpop.f32.mrb[0].mxu0
    %v2197 = vadd.f32 0.0, %v2196
    %2198 = vdwg.mxu0
    %2199 = vmatprep.subr.mxu0 %v459
    %2200 = vmatpush1.msra.mxu0 %v458
    %2201 = vmatprep.subr.mxu0 %v463
    %2202 = vmatpush1.msra.mxu0 %v462
    %2203 = vmatprep.subr.mxu0 %v467
    %2204 = vmatpush1.msra.mxu0 %v466
    %2205 = vmatprep.subr.mxu0 %v471
    %2206 = vmatpush1.msra.mxu0 %v470
    %2207 = vmatprep.subr.mxu0 %v475
    %2208 = vmatpush1.msra.mxu0 %v474
    %2209 = vmatprep.subr.mxu0 %v479
    %2210 = vmatpush1.msra.mxu0 %v478
    %2211 = vmatprep.subr.mxu0 %v483
    %2212 = vmatpush1.msra.mxu0 %v482
    %2213 = vmatprep.subr.mxu0 %v487
    %2214 = vmatpush1.msra.mxu0 %v486
    %2215 = vmatprep.subr.mxu0 %v491
    %2216 = vmatpush1.msra.mxu0 %v490
    %2217 = vmatprep.subr.mxu0 %v495
    %2218 = vmatpush1.msra.mxu0 %v494
    %2219 = vmatprep.subr.mxu0 %v499
    %2220 = vmatpush1.msra.mxu0 %v498
    %2221 = vmatprep.subr.mxu0 %v503
    %2222 = vmatpush1.msra.mxu0 %v502
    %2223 = vmatprep.subr.mxu0 %v507
    %2224 = vmatpush1.msra.mxu0 %v506
    %2225 = vmatprep.subr.mxu0 %v511
    %2226 = vmatpush1.msra.mxu0 %v510
    %2227 = vmatprep.subr.mxu0 %v515
    %2228 = vmatpush1.msra.mxu0 %v514
    %2229 = vmatprep.subr.mxu0 %v519
    %2230 = vmatpush1.msra.mxu0 %v518
    %2231 = vmatprep.subr.mxu0 0.0
    %2232 = vmatpush1.msra.mxu0 0.0
    %2233 = vmatprep.subr.mxu0 0.0
    %2234 = vmatpush1.msra.mxu0 0.0
    %2235 = vmatprep.subr.mxu0 0.0
    %2236 = vmatpush1.msra.mxu0 0.0
    %2237 = vmatprep.subr.mxu0 0.0
    %2238 = vmatpush1.msra.mxu0 0.0
    %2239 = vmatprep.subr.mxu0 0.0
    %2240 = vmatpush1.msra.mxu0 0.0
    %2241 = vmatprep.subr.mxu0 0.0
    %2242 = vmatpush1.msra.mxu0 0.0
    %2243 = vmatprep.subr.mxu0 0.0
    %2244 = vmatpush1.msra.mxu0 0.0
    %2245 = vmatprep.subr.mxu0 0.0
    %2246 = vmatpush1.msra.mxu0 0.0
    %2247 = vmatprep.subr.mxu0 0.0
    %2248 = vmatpush1.msra.mxu0 0.0
    %2249 = vmatprep.subr.mxu0 0.0
    %2250 = vmatpush1.msra.mxu0 0.0
    %2251 = vmatprep.subr.mxu0 0.0
    %2252 = vmatpush1.msra.mxu0 0.0
    %2253 = vmatprep.subr.mxu0 0.0
    %2254 = vmatpush1.msra.mxu0 0.0
    %2255 = vmatprep.subr.mxu0 0.0
    %2256 = vmatpush1.msra.mxu0 0.0
    %2257 = vmatprep.subr.mxu0 0.0
    %2258 = vmatpush1.msra.mxu0 0.0
    %2259 = vmatprep.subr.mxu0 0.0
    %2260 = vmatpush1.msra.mxu0 0.0
    %2261 = vmatprep.subr.mxu0 0.0
    %2262 = vmatpush1.msra.mxu0 0.0
    %2263 = vmatprep.mubr.f32.mxu0 0.0
    %2264 = vmatmul.mubr.f32.gmra.mrb[0].mxu0 %v1811
    %v2265 = vpop.f32.mrb[0].mxu0
    %v2266 = vadd.f32 0.0, %v2265
    %v2267 = vpop.f32.mrb[0].mxu0
    %v2268 = vadd.f32 0.0, %v2267
    %2269 = vdwg.mxu0
    %v2270 = vadd.f32 %v2124, %v2195
    %v2271 = vadd.f32 %v2125, %v2197
    %v2272 = vadd.f32 %v2126, %v2266
    %v2273 = vadd.f32 %v2127, %v2268
    %v2274 = vxor.u32 %v2270, 2147483648
    %v2275 = vxor.u32 %v2271, 2147483648
    %v2276 = vxor.u32 %v2272, 2147483648
    %v2277 = vmul.f32 %v2274, 1.442695
    %v2278 = vpow.pop %v2277
    %v2279 = vmul.f32 %v2275, 1.442695
    %v2280 = vpow.pop %v2279
    %v2281 = vmul.f32 %v2276, 1.442695
    %v2282 = vpow.pop %v2281
    %v2283 = vadd.f32 %v2278, 1.0
    %v2284 = vadd.f32 %v2280, 1.0
    %v2285 = vadd.f32 %v2282, 1.0
    %v2286 = vrcp.pop %v2283
    %v2287 = vmul.f32 1.0, %v2286
    %v2288 = vrcp.pop %v2284
    %v2289 = vmul.f32 1.0, %v2288
    %v2290 = vrcp.pop %v2285
    %v2291 = vmul.f32 1.0, %v2290
    %v2292 = vtanh.pop %v2273
    %v2293 = vmul.f32 %v2289, %v1809
    %v2294 = vmul.f32 %v2287, %v2292
    %v2295 = vadd.f32 %v2293, %v2294
    %v2296 = vtanh.pop %v2295
    %v2297 = vmul.f32 %v2291, %v2296
    %2298 = vmatprep.subr.mxu0 %v755
    %2299 = vmatpush1.msra.mxu0 %v754
    %2300 = vmatprep.subr.mxu0 %v759
    %2301 = vmatpush1.msra.mxu0 %v758
    %2302 = vmatprep.subr.mxu0 %v763
    %2303 = vmatpush1.msra.mxu0 %v762
    %2304 = vmatprep.subr.mxu0 %v767
    %2305 = vmatpush1.msra.mxu0 %v766
    %2306 = vmatprep.subr.mxu0 %v771
    %2307 = vmatpush1.msra.mxu0 %v770
    %2308 = vmatprep.subr.mxu0 %v775
    %2309 = vmatpush1.msra.mxu0 %v774
    %2310 = vmatprep.subr.mxu0 %v779
    %2311 = vmatpush1.msra.mxu0 %v778
    %2312 = vmatprep.subr.mxu0 %v783
    %2313 = vmatpush1.msra.mxu0 %v782
    %2314 = vmatprep.subr.mxu0 %v787
    %2315 = vmatpush1.msra.mxu0 %v786
    %2316 = vmatprep.subr.mxu0 %v791
    %2317 = vmatpush1.msra.mxu0 %v790
    %2318 = vmatprep.subr.mxu0 %v795
    %2319 = vmatpush1.msra.mxu0 %v794
    %2320 = vmatprep.subr.mxu0 %v799
    %2321 = vmatpush1.msra.mxu0 %v798
    %2322 = vmatprep.subr.mxu0 %v803
    %2323 = vmatpush1.msra.mxu0 %v802
    %2324 = vmatprep.subr.mxu0 %v807
    %2325 = vmatpush1.msra.mxu0 %v806
    %2326 = vmatprep.subr.mxu0 %v811
    %2327 = vmatpush1.msra.mxu0 %v810
    %2328 = vmatprep.subr.mxu0 %v815
    %2329 = vmatpush1.msra.mxu0 %v814
    %2330 = vmatprep.subr.mxu0 0.0
    %2331 = vmatpush1.msra.mxu0 0.0
    %2332 = vmatprep.subr.mxu0 0.0
    %2333 = vmatpush1.msra.mxu0 0.0
    %2334 = vmatprep.subr.mxu0 0.0
    %2335 = vmatpush1.msra.mxu0 0.0
    %2336 = vmatprep.subr.mxu0 0.0
    %2337 = vmatpush1.msra.mxu0 0.0
    %2338 = vmatprep.subr.mxu0 0.0
    %2339 = vmatpush1.msra.mxu0 0.0
    %2340 = vmatprep.subr.mxu0 0.0
    %2341 = vmatpush1.msra.mxu0 0.0
    %2342 = vmatprep.subr.mxu0 0.0
    %2343 = vmatpush1.msra.mxu0 0.0
    %2344 = vmatprep.subr.mxu0 0.0
    %2345 = vmatpush1.msra.mxu0 0.0
    %2346 = vmatprep.subr.mxu0 0.0
    %2347 = vmatpush1.msra.mxu0 0.0
    %2348 = vmatprep.subr.mxu0 0.0
    %2349 = vmatpush1.msra.mxu0 0.0
    %2350 = vmatprep.subr.mxu0 0.0
    %2351 = vmatpush1.msra.mxu0 0.0
    %2352 = vmatprep.subr.mxu0 0.0
    %2353 = vmatpush1.msra.mxu0 0.0
    %2354 = vmatprep.subr.mxu0 0.0
    %2355 = vmatpush1.msra.mxu0 0.0
    %2356 = vmatprep.subr.mxu0 0.0
    %2357 = vmatpush1.msra.mxu0 0.0
    %2358 = vmatprep.subr.mxu0 0.0
    %2359 = vmatpush1.msra.mxu0 0.0
    %2360 = vmatprep.subr.mxu0 0.0
    %2361 = vmatpush1.msra.mxu0 0.0
    %2362 = vmatprep.mubr.f32.mxu0 0.0
    %2363 = vmatmul.mubr.f32.gmra.mrb[0].mxu0 %v2123
    %v2364 = vpop.f32.mrb[0].mxu0
    %v2365 = vadd.f32 0.0, %v2364
    %v2366 = vpop.f32.mrb[0].mxu0
    %v2367 = vadd.f32 0.0, %v2366
    %2368 = vdwg.mxu0
    %2369 = vmatprep.subr.mxu0 %v757
    %2370 = vmatpush1.msra.mxu0 %v756
    %2371 = vmatprep.subr.mxu0 %v761
    %2372 = vmatpush1.msra.mxu0 %v760
    %2373 = vmatprep.subr.mxu0 %v765
    %2374 = vmatpush1.msra.mxu0 %v764
    %2375 = vmatprep.subr.mxu0 %v769
    %2376 = vmatpush1.msra.mxu0 %v768
    %2377 = vmatprep.subr.mxu0 %v773
    %2378 = vmatpush1.msra.mxu0 %v772
    %2379 = vmatprep.subr.mxu0 %v777
    %2380 = vmatpush1.msra.mxu0 %v776
    %2381 = vmatprep.subr.mxu0 %v781
    %2382 = vmatpush1.msra.mxu0 %v780
    %2383 = vmatprep.subr.mxu0 %v785
    %2384 = vmatpush1.msra.mxu0 %v784
    %2385 = vmatprep.subr.mxu0 %v789
    %2386 = vmatpush1.msra.mxu0 %v788
    %2387 = vmatprep.subr.mxu0 %v793
    %2388 = vmatpush1.msra.mxu0 %v792
    %2389 = vmatprep.subr.mxu0 %v797
    %2390 = vmatpush1.msra.mxu0 %v796
    %2391 = vmatprep.subr.mxu0 %v801
    %2392 = vmatpush1.msra.mxu0 %v800
    %2393 = vmatprep.subr.mxu0 %v805
    %2394 = vmatpush1.msra.mxu0 %v804
    %2395 = vmatprep.subr.mxu0 %v809
    %2396 = vmatpush1.msra.mxu0 %v808
    %2397 = vmatprep.subr.mxu0 %v813
    %2398 = vmatpush1.msra.mxu0 %v812
    %2399 = vmatprep.subr.mxu0 %v817
    %2400 = vmatpush1.msra.mxu0 %v816
    %2401 = vmatprep.subr.mxu0 0.0
    %2402 = vmatpush1.msra.mxu0 0.0
    %2403 = vmatprep.subr.mxu0 0.0
    %2404 = vmatpush1.msra.mxu0 0.0
    %2405 = vmatprep.subr.mxu0 0.0
    %2406 = vmatpush1.msra.mxu0 0.0
    %2407 = vmatprep.subr.mxu0 0.0
    %2408 = vmatpush1.msra.mxu0 0.0
    %2409 = vmatprep.subr.mxu0 0.0
    %2410 = vmatpush1.msra.mxu0 0.0
    %2411 = vmatprep.subr.mxu0 0.0
    %2412 = vmatpush1.msra.mxu0 0.0
    %2413 = vmatprep.subr.mxu0 0.0
    %2414 = vmatpush1.msra.mxu0 0.0
    %2415 = vmatprep.subr.mxu0 0.0
    %2416 = vmatpush1.msra.mxu0 0.0
    %2417 = vmatprep.subr.mxu0 0.0
    %2418 = vmatpush1.msra.mxu0 0.0
    %2419 = vmatprep.subr.mxu0 0.0
    %2420 = vmatpush1.msra.mxu0 0.0
    %2421 = vmatprep.subr.mxu0 0.0
    %2422 = vmatpush1.msra.mxu0 0.0
    %2423 = vmatprep.subr.mxu0 0.0
    %2424 = vmatpush1.msra.mxu0 0.0
    %2425 = vmatprep.subr.mxu0 0.0
    %2426 = vmatpush1.msra.mxu0 0.0
    %2427 = vmatprep.subr.mxu0 0.0
    %2428 = vmatpush1.msra.mxu0 0.0
    %2429 = vmatprep.subr.mxu0 0.0
    %2430 = vmatpush1.msra.mxu0 0.0
    %2431 = vmatprep.subr.mxu0 0.0
    %2432 = vmatpush1.msra.mxu0 0.0
    %2433 = vmatprep.mubr.f32.mxu0 0.0
    %2434 = vmatmul.mubr.f32.gmra.mrb[0].mxu0 %v2123
    %v2435 = vpop.f32.mrb[0].mxu0
    %v2436 = vadd.f32 0.0, %v2435
    %v2437 = vpop.f32.mrb[0].mxu0
    %v2438 = vadd.f32 0.0, %v2437
    %2439 = vdwg.mxu0
    %2440 = vmatprep.subr.mxu0 %v691
    %2441 = vmatpush1.msra.mxu0 %v690
    %2442 = vmatprep.subr.mxu0 %v695
    %2443 = vmatpush1.msra.mxu0 %v694
    %2444 = vmatprep.subr.mxu0 %v699
    %2445 = vmatpush1.msra.mxu0 %v698
    %2446 = vmatprep.subr.mxu0 %v703
    %2447 = vmatpush1.msra.mxu0 %v702
    %2448 = vmatprep.subr.mxu0 %v707
    %2449 = vmatpush1.msra.mxu0 %v706
    %2450 = vmatprep.subr.mxu0 %v711
    %2451 = vmatpush1.msra.mxu0 %v710
    %2452 = vmatprep.subr.mxu0 %v715
    %2453 = vmatpush1.msra.mxu0 %v714
    %2454 = vmatprep.subr.mxu0 %v719
    %2455 = vmatpush1.msra.mxu0 %v718
    %2456 = vmatprep.subr.mxu0 %v723
    %2457 = vmatpush1.msra.mxu0 %v722
    %2458 = vmatprep.subr.mxu0 %v727
    %2459 = vmatpush1.msra.mxu0 %v726
    %2460 = vmatprep.subr.mxu0 %v731
    %2461 = vmatpush1.msra.mxu0 %v730
    %2462 = vmatprep.subr.mxu0 %v735
    %2463 = vmatpush1.msra.mxu0 %v734
    %2464 = vmatprep.subr.mxu0 %v739
    %2465 = vmatpush1.msra.mxu0 %v738
    %2466 = vmatprep.subr.mxu0 %v743
    %2467 = vmatpush1.msra.mxu0 %v742
    %2468 = vmatprep.subr.mxu0 %v747
    %2469 = vmatpush1.msra.mxu0 %v746
    %2470 = vmatprep.subr.mxu0 %v751
    %2471 = vmatpush1.msra.mxu0 %v750
    %2472 = vmatprep.subr.mxu0 0.0
    %2473 = vmatpush1.msra.mxu0 0.0
    %2474 = vmatprep.subr.mxu0 0.0
    %2475 = vmatpush1.msra.mxu0 0.0
    %2476 = vmatprep.subr.mxu0 0.0
    %2477 = vmatpush1.msra.mxu0 0.0
    %2478 = vmatprep.subr.mxu0 0.0
    %2479 = vmatpush1.msra.mxu0 0.0
    %2480 = vmatprep.subr.mxu0 0.0
    %2481 = vmatpush1.msra.mxu0 0.0
    %2482 = vmatprep.subr.mxu0 0.0
    %2483 = vmatpush1.msra.mxu0 0.0
    %2484 = vmatprep.subr.mxu0 0.0
    %2485 = vmatpush1.msra.mxu0 0.0
    %2486 = vmatprep.subr.mxu0 0.0
    %2487 = vmatpush1.msra.mxu0 0.0
    %2488 = vmatprep.subr.mxu0 0.0
    %2489 = vmatpush1.msra.mxu0 0.0
    %2490 = vmatprep.subr.mxu0 0.0
    %2491 = vmatpush1.msra.mxu0 0.0
    %2492 = vmatprep.subr.mxu0 0.0
    %2493 = vmatpush1.msra.mxu0 0.0
    %2494 = vmatprep.subr.mxu0 0.0
    %2495 = vmatpush1.msra.mxu0 0.0
    %2496 = vmatprep.subr.mxu0 0.0
    %2497 = vmatpush1.msra.mxu0 0.0
    %2498 = vmatprep.subr.mxu0 0.0
    %2499 = vmatpush1.msra.mxu0 0.0
    %2500 = vmatprep.subr.mxu0 0.0
    %2501 = vmatpush1.msra.mxu0 0.0
    %2502 = vmatprep.subr.mxu0 0.0
    %2503 = vmatpush1.msra.mxu0 0.0
    %2504 = vmatprep.mubr.f32.mxu0 0.0
    %2505 = vmatmul.mubr.f32.gmra.mrb[0].mxu0 %v2297
    %v2506 = vpop.f32.mrb[0].mxu0
    %v2507 = vadd.f32 %v2365, %v2506
    %v2508 = vpop.f32.mrb[0].mxu0
    %v2509 = vadd.f32 %v2367, %v2508
    %2510 = vdwg.mxu0
    %2511 = vmatprep.subr.mxu0 %v693
    %2512 = vmatpush1.msra.mxu0 %v692
    %2513 = vmatprep.subr.mxu0 %v697
    %2514 = vmatpush1.msra.mxu0 %v696
    %2515 = vmatprep.subr.mxu0 %v701
    %2516 = vmatpush1.msra.mxu0 %v700
    %2517 = vmatprep.subr.mxu0 %v705
    %2518 = vmatpush1.msra.mxu0 %v704
    %2519 = vmatprep.subr.mxu0 %v709
    %2520 = vmatpush1.msra.mxu0 %v708
    %2521 = vmatprep.subr.mxu0 %v713
    %2522 = vmatpush1.msra.mxu0 %v712
    %2523 = vmatprep.subr.mxu0 %v717
    %2524 = vmatpush1.msra.mxu0 %v716
    %2525 = vmatprep.subr.mxu0 %v721
    %2526 = vmatpush1.msra.mxu0 %v720
    %2527 = vmatprep.subr.mxu0 %v725
    %2528 = vmatpush1.msra.mxu0 %v724
    %2529 = vmatprep.subr.mxu0 %v729
    %2530 = vmatpush1.msra.mxu0 %v728
    %2531 = vmatprep.subr.mxu0 %v733
    %2532 = vmatpush1.msra.mxu0 %v732
    %2533 = vmatprep.subr.mxu0 %v737
    %2534 = vmatpush1.msra.mxu0 %v736
    %2535 = vmatprep.subr.mxu0 %v741
    %2536 = vmatpush1.msra.mxu0 %v740
    %2537 = vmatprep.subr.mxu0 %v745
    %2538 = vmatpush1.msra.mxu0 %v744
    %2539 = vmatprep.subr.mxu0 %v749
    %2540 = vmatpush1.msra.mxu0 %v748
    %2541 = vmatprep.subr.mxu0 %v753
    %2542 = vmatpush1.msra.mxu0 %v752
    %2543 = vmatprep.subr.mxu0 0.0
    %2544 = vmatpush1.msra.mxu0 0.0
    %2545 = vmatprep.subr.mxu0 0.0
    %2546 = vmatpush1.msra.mxu0 0.0
    %2547 = vmatprep.subr.mxu0 0.0
    %2548 = vmatpush1.msra.mxu0 0.0
    %2549 = vmatprep.subr.mxu0 0.0
    %2550 = vmatpush1.msra.mxu0 0.0
    %2551 = vmatprep.subr.mxu0 0.0
    %2552 = vmatpush1.msra.mxu0 0.0
    %2553 = vmatprep.subr.mxu0 0.0
    %2554 = vmatpush1.msra.mxu0 0.0
    %2555 = vmatprep.subr.mxu0 0.0
    %2556 = vmatpush1.msra.mxu0 0.0
    %2557 = vmatprep.subr.mxu0 0.0
    %2558 = vmatpush1.msra.mxu0 0.0
    %2559 = vmatprep.subr.mxu0 0.0
    %2560 = vmatpush1.msra.mxu0 0.0
    %2561 = vmatprep.subr.mxu0 0.0
    %2562 = vmatpush1.msra.mxu0 0.0
    %2563 = vmatprep.subr.mxu0 0.0
    %2564 = vmatpush1.msra.mxu0 0.0
    %2565 = vmatprep.subr.mxu0 0.0
    %2566 = vmatpush1.msra.mxu0 0.0
    %2567 = vmatprep.subr.mxu0 0.0
    %2568 = vmatpush1.msra.mxu0 0.0
    %2569 = vmatprep.subr.mxu0 0.0
    %2570 = vmatpush1.msra.mxu0 0.0
    %2571 = vmatprep.subr.mxu0 0.0
    %2572 = vmatpush1.msra.mxu0 0.0
    %2573 = vmatprep.subr.mxu0 0.0
    %2574 = vmatpush1.msra.mxu0 0.0
    %2575 = vmatprep.mubr.f32.mxu0 0.0
    %2576 = vmatmul.mubr.f32.gmra.mrb[0].mxu0 %v2297
    %v2577 = vpop.f32.mrb[0].mxu0
    %v2578 = vadd.f32 %v2436, %v2577
    %v2579 = vpop.f32.mrb[0].mxu0
    %v2580 = vadd.f32 %v2438, %v2579
    %2581 = vdwg.mxu0
    %v2582 = vadd.f32 %v2507, %v1107
    %v2583 = vadd.f32 %v2509, %v1111
    %v2584 = vadd.f32 %v2578, %v1115
    %v2585 = vadd.f32 %v2580, %v1119
    %v2586 = vxor.u32 %v2582, 2147483648
    %v2587 = vxor.u32 %v2583, 2147483648
    %v2588 = vxor.u32 %v2584, 2147483648
    %v2589 = vmul.f32 %v2586, 1.442695
    %v2590 = vpow.pop %v2589
    %v2591 = vmul.f32 %v2587, 1.442695
    %v2592 = vpow.pop %v2591
    %v2593 = vmul.f32 %v2588, 1.442695
    %v2594 = vpow.pop %v2593
    %v2595 = vadd.f32 %v2590, 1.0
    %v2596 = vadd.f32 %v2592, 1.0
    %v2597 = vadd.f32 %v2594, 1.0
    %v2598 = vrcp.pop %v2595
    %v2599 = vmul.f32 1.0, %v2598
    %v2600 = vrcp.pop %v2596
    %v2601 = vmul.f32 1.0, %v2600
    %v2602 = vrcp.pop %v2597
    %v2603 = vmul.f32 1.0, %v2602
    %v2604 = vtanh.pop %v2585
    %v2605 = vmul.f32 %v2601, %v2121
    %v2606 = vmul.f32 %v2599, %v2604
    %v2607 = vadd.f32 %v2605, %v2606
    %v2608 = vtanh.pop %v2607
    %v2609 = vmul.f32 %v2603, %v2608
    %v2610 = vld [vmem:[#allocation2 + $0x80] sm:$0xff]
    %v2611 = vld [vmem:[#allocation2 + $0x88] sm:$0xff]
    %v2612 = vld [vmem:[#allocation2 + $0x90] sm:$0xff]
    %v2613 = vld [vmem:[#allocation2 + $0x98] sm:$0xff]
    %2614 = vmatprep.subr.mxu0 %v457
    %2615 = vmatpush1.msra.mxu0 %v456
    %2616 = vmatprep.subr.mxu0 %v461
    %2617 = vmatpush1.msra.mxu0 %v460
    %2618 = vmatprep.subr.mxu0 %v465
    %2619 = vmatpush1.msra.mxu0 %v464
    %2620 = vmatprep.subr.mxu0 %v469
    %2621 = vmatpush1.msra.mxu0 %v468
    %2622 = vmatprep.subr.mxu0 %v473
    %2623 = vmatpush1.msra.mxu0 %v472
    %2624 = vmatprep.subr.mxu0 %v477
    %2625 = vmatpush1.msra.mxu0 %v476
    %2626 = vmatprep.subr.mxu0 %v481
    %2627 = vmatpush1.msra.mxu0 %v480
    %2628 = vmatprep.subr.mxu0 %v485
    %2629 = vmatpush1.msra.mxu0 %v484
    %2630 = vmatprep.subr.mxu0 %v489
    %2631 = vmatpush1.msra.mxu0 %v488
    %2632 = vmatprep.subr.mxu0 %v493
    %2633 = vmatpush1.msra.mxu0 %v492
    %2634 = vmatprep.subr.mxu0 %v497
    %2635 = vmatpush1.msra.mxu0 %v496
    %2636 = vmatprep.subr.mxu0 %v501
    %2637 = vmatpush1.msra.mxu0 %v500
    %2638 = vmatprep.subr.mxu0 %v505
    %2639 = vmatpush1.msra.mxu0 %v504
    %2640 = vmatprep.subr.mxu0 %v509
    %2641 = vmatpush1.msra.mxu0 %v508
    %2642 = vmatprep.subr.mxu0 %v513
    %2643 = vmatpush1.msra.mxu0 %v512
    %2644 = vmatprep.subr.mxu0 %v517
    %2645 = vmatpush1.msra.mxu0 %v516
    %2646 = vmatprep.subr.mxu0 0.0
    %2647 = vmatpush1.msra.mxu0 0.0
    %2648 = vmatprep.subr.mxu0 0.0
    %2649 = vmatpush1.msra.mxu0 0.0
    %2650 = vmatprep.subr.mxu0 0.0
    %2651 = vmatpush1.msra.mxu0 0.0
    %2652 = vmatprep.subr.mxu0 0.0
    %2653 = vmatpush1.msra.mxu0 0.0
    %2654 = vmatprep.subr.mxu0 0.0
    %2655 = vmatpush1.msra.mxu0 0.0
    %2656 = vmatprep.subr.mxu0 0.0
    %2657 = vmatpush1.msra.mxu0 0.0
    %2658 = vmatprep.subr.mxu0 0.0
    %2659 = vmatpush1.msra.mxu0 0.0
    %2660 = vmatprep.subr.mxu0 0.0
    %2661 = vmatpush1.msra.mxu0 0.0
    %2662 = vmatprep.subr.mxu0 0.0
    %2663 = vmatpush1.msra.mxu0 0.0
    %2664 = vmatprep.subr.mxu0 0.0
    %2665 = vmatpush1.msra.mxu0 0.0
    %2666 = vmatprep.subr.mxu0 0.0
    %2667 = vmatpush1.msra.mxu0 0.0
    %2668 = vmatprep.subr.mxu0 0.0
    %2669 = vmatpush1.msra.mxu0 0.0
    %2670 = vmatprep.subr.mxu0 0.0
    %2671 = vmatpush1.msra.mxu0 0.0
    %2672 = vmatprep.subr.mxu0 0.0
    %2673 = vmatpush1.msra.mxu0 0.0
    %2674 = vmatprep.subr.mxu0 0.0
    %2675 = vmatpush1.msra.mxu0 0.0
    %2676 = vmatprep.subr.mxu0 0.0
    %2677 = vmatpush1.msra.mxu0 0.0
    %2678 = vmatprep.mubr.f32.mxu0 0.0
    %2679 = vmatmul.mubr.f32.gmra.mrb[0].mxu0 %v2297
    %v2680 = vpop.f32.mrb[0].mxu0
    %v2681 = vadd.f32 0.0, %v2680
    %v2682 = vpop.f32.mrb[0].mxu0
    %v2683 = vadd.f32 0.0, %v2682
    %2684 = vdwg.mxu0
    %2685 = vmatprep.subr.mxu0 %v459
    %2686 = vmatpush1.msra.mxu0 %v458
    %2687 = vmatprep.subr.mxu0 %v463
    %2688 = vmatpush1.msra.mxu0 %v462
    %2689 = vmatprep.subr.mxu0 %v467
    %2690 = vmatpush1.msra.mxu0 %v466
    %2691 = vmatprep.subr.mxu0 %v471
    %2692 = vmatpush1.msra.mxu0 %v470
    %2693 = vmatprep.subr.mxu0 %v475
    %2694 = vmatpush1.msra.mxu0 %v474
    %2695 = vmatprep.subr.mxu0 %v479
    %2696 = vmatpush1.msra.mxu0 %v478
    %2697 = vmatprep.subr.mxu0 %v483
    %2698 = vmatpush1.msra.mxu0 %v482
    %2699 = vmatprep.subr.mxu0 %v487
    %2700 = vmatpush1.msra.mxu0 %v486
    %2701 = vmatprep.subr.mxu0 %v491
    %2702 = vmatpush1.msra.mxu0 %v490
    %2703 = vmatprep.subr.mxu0 %v495
    %2704 = vmatpush1.msra.mxu0 %v494
    %2705 = vmatprep.subr.mxu0 %v499
    %2706 = vmatpush1.msra.mxu0 %v498
    %2707 = vmatprep.subr.mxu0 %v503
    %2708 = vmatpush1.msra.mxu0 %v502
    %2709 = vmatprep.subr.mxu0 %v507
    %2710 = vmatpush1.msra.mxu0 %v506
    %2711 = vmatprep.subr.mxu0 %v511
    %2712 = vmatpush1.msra.mxu0 %v510
    %2713 = vmatprep.subr.mxu0 %v515
    %2714 = vmatpush1.msra.mxu0 %v514
    %2715 = vmatprep.subr.mxu0 %v519
    %2716 = vmatpush1.msra.mxu0 %v518
    %2717 = vmatprep.subr.mxu0 0.0
    %2718 = vmatpush1.msra.mxu0 0.0
    %2719 = vmatprep.subr.mxu0 0.0
    %2720 = vmatpush1.msra.mxu0 0.0
    %2721 = vmatprep.subr.mxu0 0.0
    %2722 = vmatpush1.msra.mxu0 0.0
    %2723 = vmatprep.subr.mxu0 0.0
    %2724 = vmatpush1.msra.mxu0 0.0
    %2725 = vmatprep.subr.mxu0 0.0
    %2726 = vmatpush1.msra.mxu0 0.0
    %2727 = vmatprep.subr.mxu0 0.0
    %2728 = vmatpush1.msra.mxu0 0.0
    %2729 = vmatprep.subr.mxu0 0.0
    %2730 = vmatpush1.msra.mxu0 0.0
    %2731 = vmatprep.subr.mxu0 0.0
    %2732 = vmatpush1.msra.mxu0 0.0
    %2733 = vmatprep.subr.mxu0 0.0
    %2734 = vmatpush1.msra.mxu0 0.0
    %2735 = vmatprep.subr.mxu0 0.0
    %2736 = vmatpush1.msra.mxu0 0.0
    %2737 = vmatprep.subr.mxu0 0.0
    %2738 = vmatpush1.msra.mxu0 0.0
    %2739 = vmatprep.subr.mxu0 0.0
    %2740 = vmatpush1.msra.mxu0 0.0
    %2741 = vmatprep.subr.mxu0 0.0
    %2742 = vmatpush1.msra.mxu0 0.0
    %2743 = vmatprep.subr.mxu0 0.0
    %2744 = vmatpush1.msra.mxu0 0.0
    %2745 = vmatprep.subr.mxu0 0.0
    %2746 = vmatpush1.msra.mxu0 0.0
    %2747 = vmatprep.subr.mxu0 0.0
    %2748 = vmatpush1.msra.mxu0 0.0
    %2749 = vmatprep.mubr.f32.mxu0 0.0
    %2750 = vmatmul.mubr.f32.gmra.mrb[0].mxu0 %v2297
    %v2751 = vpop.f32.mrb[0].mxu0
    %v2752 = vadd.f32 0.0, %v2751
    %v2753 = vpop.f32.mrb[0].mxu0
    %v2754 = vadd.f32 0.0, %v2753
    %2755 = vdwg.mxu0
    %v2756 = vadd.f32 %v2610, %v2681
    %v2757 = vadd.f32 %v2611, %v2683
    %v2758 = vadd.f32 %v2612, %v2752
    %v2759 = vadd.f32 %v2613, %v2754
    %v2760 = vxor.u32 %v2756, 2147483648
    %v2761 = vxor.u32 %v2757, 2147483648
    %v2762 = vxor.u32 %v2758, 2147483648
    %v2763 = vmul.f32 %v2760, 1.442695
    %v2764 = vpow.pop %v2763
    %v2765 = vmul.f32 %v2761, 1.442695
    %v2766 = vpow.pop %v2765
    %v2767 = vmul.f32 %v2762, 1.442695
    %v2768 = vpow.pop %v2767
    %v2769 = vadd.f32 %v2764, 1.0
    %v2770 = vadd.f32 %v2766, 1.0
    %v2771 = vadd.f32 %v2768, 1.0
    %v2772 = vrcp.pop %v2769
    %v2773 = vmul.f32 1.0, %v2772
    %v2774 = vrcp.pop %v2770
    %v2775 = vmul.f32 1.0, %v2774
    %v2776 = vrcp.pop %v2771
    %v2777 = vmul.f32 1.0, %v2776
    %v2778 = vtanh.pop %v2759
    %v2779 = vmul.f32 %v2775, %v2295
    %v2780 = vmul.f32 %v2773, %v2778
    %v2781 = vadd.f32 %v2779, %v2780
    %v2782 = vtanh.pop %v2781
    %v2783 = vmul.f32 %v2777, %v2782
    %2784 = vmatprep.subr.mxu0 %v755
    %2785 = vmatpush1.msra.mxu0 %v754
    %2786 = vmatprep.subr.mxu0 %v759
    %2787 = vmatpush1.msra.mxu0 %v758
    %2788 = vmatprep.subr.mxu0 %v763
    %2789 = vmatpush1.msra.mxu0 %v762
    %2790 = vmatprep.subr.mxu0 %v767
    %2791 = vmatpush1.msra.mxu0 %v766
    %2792 = vmatprep.subr.mxu0 %v771
    %2793 = vmatpush1.msra.mxu0 %v770
    %2794 = vmatprep.subr.mxu0 %v775
    %2795 = vmatpush1.msra.mxu0 %v774
    %2796 = vmatprep.subr.mxu0 %v779
    %2797 = vmatpush1.msra.mxu0 %v778
    %2798 = vmatprep.subr.mxu0 %v783
    %2799 = vmatpush1.msra.mxu0 %v782
    %2800 = vmatprep.subr.mxu0 %v787
    %2801 = vmatpush1.msra.mxu0 %v786
    %2802 = vmatprep.subr.mxu0 %v791
    %2803 = vmatpush1.msra.mxu0 %v790
    %2804 = vmatprep.subr.mxu0 %v795
    %2805 = vmatpush1.msra.mxu0 %v794
    %2806 = vmatprep.subr.mxu0 %v799
    %2807 = vmatpush1.msra.mxu0 %v798
    %2808 = vmatprep.subr.mxu0 %v803
    %2809 = vmatpush1.msra.mxu0 %v802
    %2810 = vmatprep.subr.mxu0 %v807
    %2811 = vmatpush1.msra.mxu0 %v806
    %2812 = vmatprep.subr.mxu0 %v811
    %2813 = vmatpush1.msra.mxu0 %v810
    %2814 = vmatprep.subr.mxu0 %v815
    %2815 = vmatpush1.msra.mxu0 %v814
    %2816 = vmatprep.subr.mxu0 0.0
    %2817 = vmatpush1.msra.mxu0 0.0
    %2818 = vmatprep.subr.mxu0 0.0
    %2819 = vmatpush1.msra.mxu0 0.0
    %2820 = vmatprep.subr.mxu0 0.0
    %2821 = vmatpush1.msra.mxu0 0.0
    %2822 = vmatprep.subr.mxu0 0.0
    %2823 = vmatpush1.msra.mxu0 0.0
    %2824 = vmatprep.subr.mxu0 0.0
    %2825 = vmatpush1.msra.mxu0 0.0
    %2826 = vmatprep.subr.mxu0 0.0
    %2827 = vmatpush1.msra.mxu0 0.0
    %2828 = vmatprep.subr.mxu0 0.0
    %2829 = vmatpush1.msra.mxu0 0.0
    %2830 = vmatprep.subr.mxu0 0.0
    %2831 = vmatpush1.msra.mxu0 0.0
    %2832 = vmatprep.subr.mxu0 0.0
    %2833 = vmatpush1.msra.mxu0 0.0
    %2834 = vmatprep.subr.mxu0 0.0
    %2835 = vmatpush1.msra.mxu0 0.0
    %2836 = vmatprep.subr.mxu0 0.0
    %2837 = vmatpush1.msra.mxu0 0.0
    %2838 = vmatprep.subr.mxu0 0.0
    %2839 = vmatpush1.msra.mxu0 0.0
    %2840 = vmatprep.subr.mxu0 0.0
    %2841 = vmatpush1.msra.mxu0 0.0
    %2842 = vmatprep.subr.mxu0 0.0
    %2843 = vmatpush1.msra.mxu0 0.0
    %2844 = vmatprep.subr.mxu0 0.0
    %2845 = vmatpush1.msra.mxu0 0.0
    %2846 = vmatprep.subr.mxu0 0.0
    %2847 = vmatpush1.msra.mxu0 0.0
    %2848 = vmatprep.mubr.f32.mxu0 0.0
    %2849 = vmatmul.mubr.f32.gmra.mrb[0].mxu0 %v2609
    %v2850 = vpop.f32.mrb[0].mxu0
    %v2851 = vadd.f32 0.0, %v2850
    %v2852 = vpop.f32.mrb[0].mxu0
    %v2853 = vadd.f32 0.0, %v2852
    %2854 = vdwg.mxu0
    %2855 = vmatprep.subr.mxu0 %v757
    %2856 = vmatpush1.msra.mxu0 %v756
    %2857 = vmatprep.subr.mxu0 %v761
    %2858 = vmatpush1.msra.mxu0 %v760
    %2859 = vmatprep.subr.mxu0 %v765
    %2860 = vmatpush1.msra.mxu0 %v764
    %2861 = vmatprep.subr.mxu0 %v769
    %2862 = vmatpush1.msra.mxu0 %v768
    %2863 = vmatprep.subr.mxu0 %v773
    %2864 = vmatpush1.msra.mxu0 %v772
    %2865 = vmatprep.subr.mxu0 %v777
    %2866 = vmatpush1.msra.mxu0 %v776
    %2867 = vmatprep.subr.mxu0 %v781
    %2868 = vmatpush1.msra.mxu0 %v780
    %2869 = vmatprep.subr.mxu0 %v785
    %2870 = vmatpush1.msra.mxu0 %v784
    %2871 = vmatprep.subr.mxu0 %v789
    %2872 = vmatpush1.msra.mxu0 %v788
    %2873 = vmatprep.subr.mxu0 %v793
    %2874 = vmatpush1.msra.mxu0 %v792
    %2875 = vmatprep.subr.mxu0 %v797
    %2876 = vmatpush1.msra.mxu0 %v796
    %2877 = vmatprep.subr.mxu0 %v801
    %2878 = vmatpush1.msra.mxu0 %v800
    %2879 = vmatprep.subr.mxu0 %v805
    %2880 = vmatpush1.msra.mxu0 %v804
    %2881 = vmatprep.subr.mxu0 %v809
    %2882 = vmatpush1.msra.mxu0 %v808
    %2883 = vmatprep.subr.mxu0 %v813
    %2884 = vmatpush1.msra.mxu0 %v812
    %2885 = vmatprep.subr.mxu0 %v817
    %2886 = vmatpush1.msra.mxu0 %v816
    %2887 = vmatprep.subr.mxu0 0.0
    %2888 = vmatpush1.msra.mxu0 0.0
    %2889 = vmatprep.subr.mxu0 0.0
    %2890 = vmatpush1.msra.mxu0 0.0
    %2891 = vmatprep.subr.mxu0 0.0
    %2892 = vmatpush1.msra.mxu0 0.0
    %2893 = vmatprep.subr.mxu0 0.0
    %2894 = vmatpush1.msra.mxu0 0.0
    %2895 = vmatprep.subr.mxu0 0.0
    %2896 = vmatpush1.msra.mxu0 0.0
    %2897 = vmatprep.subr.mxu0 0.0
    %2898 = vmatpush1.msra.mxu0 0.0
    %2899 = vmatprep.subr.mxu0 0.0
    %2900 = vmatpush1.msra.mxu0 0.0
    %2901 = vmatprep.subr.mxu0 0.0
    %2902 = vmatpush1.msra.mxu0 0.0
    %2903 = vmatprep.subr.mxu0 0.0
    %2904 = vmatpush1.msra.mxu0 0.0
    %2905 = vmatprep.subr.mxu0 0.0
    %2906 = vmatpush1.msra.mxu0 0.0
    %2907 = vmatprep.subr.mxu0 0.0
    %2908 = vmatpush1.msra.mxu0 0.0
    %2909 = vmatprep.subr.mxu0 0.0
    %2910 = vmatpush1.msra.mxu0 0.0
    %2911 = vmatprep.subr.mxu0 0.0
    %2912 = vmatpush1.msra.mxu0 0.0
    %2913 = vmatprep.subr.mxu0 0.0
    %2914 = vmatpush1.msra.mxu0 0.0
    %2915 = vmatprep.subr.mxu0 0.0
    %2916 = vmatpush1.msra.mxu0 0.0
    %2917 = vmatprep.subr.mxu0 0.0
    %2918 = vmatpush1.msra.mxu0 0.0
    %2919 = vmatprep.mubr.f32.mxu0 0.0
    %2920 = vmatmul.mubr.f32.gmra.mrb[0].mxu0 %v2609
    %v2921 = vpop.f32.mrb[0].mxu0
    %v2922 = vadd.f32 0.0, %v2921
    %v2923 = vpop.f32.mrb[0].mxu0
    %v2924 = vadd.f32 0.0, %v2923
    %2925 = vdwg.mxu0
    %2926 = vmatprep.subr.mxu0 %v691
    %2927 = vmatpush1.msra.mxu0 %v690
    %2928 = vmatprep.subr.mxu0 %v695
    %2929 = vmatpush1.msra.mxu0 %v694
    %2930 = vmatprep.subr.mxu0 %v699
    %2931 = vmatpush1.msra.mxu0 %v698
    %2932 = vmatprep.subr.mxu0 %v703
    %2933 = vmatpush1.msra.mxu0 %v702
    %2934 = vmatprep.subr.mxu0 %v707
    %2935 = vmatpush1.msra.mxu0 %v706
    %2936 = vmatprep.subr.mxu0 %v711
    %2937 = vmatpush1.msra.mxu0 %v710
    %2938 = vmatprep.subr.mxu0 %v715
    %2939 = vmatpush1.msra.mxu0 %v714
    %2940 = vmatprep.subr.mxu0 %v719
    %2941 = vmatpush1.msra.mxu0 %v718
    %2942 = vmatprep.subr.mxu0 %v723
    %2943 = vmatpush1.msra.mxu0 %v722
    %2944 = vmatprep.subr.mxu0 %v727
    %2945 = vmatpush1.msra.mxu0 %v726
    %2946 = vmatprep.subr.mxu0 %v731
    %2947 = vmatpush1.msra.mxu0 %v730
    %2948 = vmatprep.subr.mxu0 %v735
    %2949 = vmatpush1.msra.mxu0 %v734
    %2950 = vmatprep.subr.mxu0 %v739
    %2951 = vmatpush1.msra.mxu0 %v738
    %2952 = vmatprep.subr.mxu0 %v743
    %2953 = vmatpush1.msra.mxu0 %v742
    %2954 = vmatprep.subr.mxu0 %v747
    %2955 = vmatpush1.msra.mxu0 %v746
    %2956 = vmatprep.subr.mxu0 %v751
    %2957 = vmatpush1.msra.mxu0 %v750
    %2958 = vmatprep.subr.mxu0 0.0
    %2959 = vmatpush1.msra.mxu0 0.0
    %2960 = vmatprep.subr.mxu0 0.0
    %2961 = vmatpush1.msra.mxu0 0.0
    %2962 = vmatprep.subr.mxu0 0.0
    %2963 = vmatpush1.msra.mxu0 0.0
    %2964 = vmatprep.subr.mxu0 0.0
    %2965 = vmatpush1.msra.mxu0 0.0
    %2966 = vmatprep.subr.mxu0 0.0
    %2967 = vmatpush1.msra.mxu0 0.0
    %2968 = vmatprep.subr.mxu0 0.0
    %2969 = vmatpush1.msra.mxu0 0.0
    %2970 = vmatprep.subr.mxu0 0.0
    %2971 = vmatpush1.msra.mxu0 0.0
    %2972 = vmatprep.subr.mxu0 0.0
    %2973 = vmatpush1.msra.mxu0 0.0
    %2974 = vmatprep.subr.mxu0 0.0
    %2975 = vmatpush1.msra.mxu0 0.0
    %2976 = vmatprep.subr.mxu0 0.0
    %2977 = vmatpush1.msra.mxu0 0.0
    %2978 = vmatprep.subr.mxu0 0.0
    %2979 = vmatpush1.msra.mxu0 0.0
    %2980 = vmatprep.subr.mxu0 0.0
    %2981 = vmatpush1.msra.mxu0 0.0
    %2982 = vmatprep.subr.mxu0 0.0
    %2983 = vmatpush1.msra.mxu0 0.0
    %2984 = vmatprep.subr.mxu0 0.0
    %2985 = vmatpush1.msra.mxu0 0.0
    %2986 = vmatprep.subr.mxu0 0.0
    %2987 = vmatpush1.msra.mxu0 0.0
    %2988 = vmatprep.subr.mxu0 0.0
    %2989 = vmatpush1.msra.mxu0 0.0
    %2990 = vmatprep.mubr.f32.mxu0 0.0
    %2991 = vmatmul.mubr.f32.gmra.mrb[0].mxu0 %v2783
    %v2992 = vpop.f32.mrb[0].mxu0
    %v2993 = vadd.f32 %v2851, %v2992
    %v2994 = vpop.f32.mrb[0].mxu0
    %v2995 = vadd.f32 %v2853, %v2994
    %2996 = vdwg.mxu0
    %2997 = vmatprep.subr.mxu0 %v693
    %2998 = vmatpush1.msra.mxu0 %v692
    %2999 = vmatprep.subr.mxu0 %v697
    %3000 = vmatpush1.msra.mxu0 %v696
    %3001 = vmatprep.subr.mxu0 %v701
    %3002 = vmatpush1.msra.mxu0 %v700
    %3003 = vmatprep.subr.mxu0 %v705
    %3004 = vmatpush1.msra.mxu0 %v704
    %3005 = vmatprep.subr.mxu0 %v709
    %3006 = vmatpush1.msra.mxu0 %v708
    %3007 = vmatprep.subr.mxu0 %v713
    %3008 = vmatpush1.msra.mxu0 %v712
    %3009 = vmatprep.subr.mxu0 %v717
    %3010 = vmatpush1.msra.mxu0 %v716
    %3011 = vmatprep.subr.mxu0 %v721
    %3012 = vmatpush1.msra.mxu0 %v720
    %3013 = vmatprep.subr.mxu0 %v725
    %3014 = vmatpush1.msra.mxu0 %v724
    %3015 = vmatprep.subr.mxu0 %v729
    %3016 = vmatpush1.msra.mxu0 %v728
    %3017 = vmatprep.subr.mxu0 %v733
    %3018 = vmatpush1.msra.mxu0 %v732
    %3019 = vmatprep.subr.mxu0 %v737
    %3020 = vmatpush1.msra.mxu0 %v736
    %3021 = vmatprep.subr.mxu0 %v741
    %3022 = vmatpush1.msra.mxu0 %v740
    %3023 = vmatprep.subr.mxu0 %v745
    %3024 = vmatpush1.msra.mxu0 %v744
    %3025 = vmatprep.subr.mxu0 %v749
    %3026 = vmatpush1.msra.mxu0 %v748
    %3027 = vmatprep.subr.mxu0 %v753
    %3028 = vmatpush1.msra.mxu0 %v752
    %3029 = vmatprep.subr.mxu0 0.0
    %3030 = vmatpush1.msra.mxu0 0.0
    %3031 = vmatprep.subr.mxu0 0.0
    %3032 = vmatpush1.msra.mxu0 0.0
    %3033 = vmatprep.subr.mxu0 0.0
    %3034 = vmatpush1.msra.mxu0 0.0
    %3035 = vmatprep.subr.mxu0 0.0
    %3036 = vmatpush1.msra.mxu0 0.0
    %3037 = vmatprep.subr.mxu0 0.0
    %3038 = vmatpush1.msra.mxu0 0.0
    %3039 = vmatprep.subr.mxu0 0.0
    %3040 = vmatpush1.msra.mxu0 0.0
    %3041 = vmatprep.subr.mxu0 0.0
    %3042 = vmatpush1.msra.mxu0 0.0
    %3043 = vmatprep.subr.mxu0 0.0
    %3044 = vmatpush1.msra.mxu0 0.0
    %3045 = vmatprep.subr.mxu0 0.0
    %3046 = vmatpush1.msra.mxu0 0.0
    %3047 = vmatprep.subr.mxu0 0.0
    %3048 = vmatpush1.msra.mxu0 0.0
    %3049 = vmatprep.subr.mxu0 0.0
    %3050 = vmatpush1.msra.mxu0 0.0
    %3051 = vmatprep.subr.mxu0 0.0
    %3052 = vmatpush1.msra.mxu0 0.0
    %3053 = vmatprep.subr.mxu0 0.0
    %3054 = vmatpush1.msra.mxu0 0.0
    %3055 = vmatprep.subr.mxu0 0.0
    %3056 = vmatpush1.msra.mxu0 0.0
    %3057 = vmatprep.subr.mxu0 0.0
    %3058 = vmatpush1.msra.mxu0 0.0
    %3059 = vmatprep.subr.mxu0 0.0
    %3060 = vmatpush1.msra.mxu0 0.0
    %3061 = vmatprep.mubr.f32.mxu0 0.0
    %3062 = vmatmul.mubr.f32.gmra.mrb[0].mxu0 %v2783
    %v3063 = vpop.f32.mrb[0].mxu0
    %v3064 = vadd.f32 %v2922, %v3063
    %v3065 = vpop.f32.mrb[0].mxu0
    %v3066 = vadd.f32 %v2924, %v3065
    %3067 = vdwg.mxu0
    %v3068 = vadd.f32 %v2993, %v1107
    %v3069 = vadd.f32 %v2995, %v1111
    %v3070 = vadd.f32 %v3064, %v1115
    %v3071 = vadd.f32 %v3066, %v1119
    %v3072 = vxor.u32 %v3068, 2147483648
    %v3073 = vxor.u32 %v3069, 2147483648
    %v3074 = vxor.u32 %v3070, 2147483648
    %v3075 = vmul.f32 %v3072, 1.442695
    %v3076 = vpow.pop %v3075
    %v3077 = vmul.f32 %v3073, 1.442695
    %v3078 = vpow.pop %v3077
    %v3079 = vmul.f32 %v3074, 1.442695
    %v3080 = vpow.pop %v3079
    %v3081 = vadd.f32 %v3076, 1.0
    %v3082 = vadd.f32 %v3078, 1.0
    %v3083 = vadd.f32 %v3080, 1.0
    %v3084 = vrcp.pop %v3081
    %v3085 = vmul.f32 1.0, %v3084
    %v3086 = vrcp.pop %v3082
    %v3087 = vmul.f32 1.0, %v3086
    %v3088 = vrcp.pop %v3083
    %v3089 = vmul.f32 1.0, %v3088
    %v3090 = vtanh.pop %v3071
    %v3091 = vmul.f32 %v3087, %v2607
    %v3092 = vmul.f32 %v3085, %v3090
    %v3093 = vadd.f32 %v3091, %v3092
    %v3094 = vtanh.pop %v3093
    %v3095 = vmul.f32 %v3089, %v3094
    %v3096 = vld [vmem:[#allocation2 + $0xa0] sm:$0xff]
    %v3097 = vld [vmem:[#allocation2 + $0xa8] sm:$0xff]
    %v3098 = vld [vmem:[#allocation2 + $0xb0] sm:$0xff]
    %v3099 = vld [vmem:[#allocation2 + $0xb8] sm:$0xff]
    %3100 = vmatprep.subr.mxu0 %v457
    %3101 = vmatpush1.msra.mxu0 %v456
    %3102 = vmatprep.subr.mxu0 %v461
    %3103 = vmatpush1.msra.mxu0 %v460
    %3104 = vmatprep.subr.mxu0 %v465
    %3105 = vmatpush1.msra.mxu0 %v464
    %3106 = vmatprep.subr.mxu0 %v469
    %3107 = vmatpush1.msra.mxu0 %v468
    %3108 = vmatprep.subr.mxu0 %v473
    %3109 = vmatpush1.msra.mxu0 %v472
    %3110 = vmatprep.subr.mxu0 %v477
    %3111 = vmatpush1.msra.mxu0 %v476
    %3112 = vmatprep.subr.mxu0 %v481
    %3113 = vmatpush1.msra.mxu0 %v480
    %3114 = vmatprep.subr.mxu0 %v485
    %3115 = vmatpush1.msra.mxu0 %v484
    %3116 = vmatprep.subr.mxu0 %v489
    %3117 = vmatpush1.msra.mxu0 %v488
    %3118 = vmatprep.subr.mxu0 %v493
    %3119 = vmatpush1.msra.mxu0 %v492
    %3120 = vmatprep.subr.mxu0 %v497
    %3121 = vmatpush1.msra.mxu0 %v496
    %3122 = vmatprep.subr.mxu0 %v501
    %3123 = vmatpush1.msra.mxu0 %v500
    %3124 = vmatprep.subr.mxu0 %v505
    %3125 = vmatpush1.msra.mxu0 %v504
    %3126 = vmatprep.subr.mxu0 %v509
    %3127 = vmatpush1.msra.mxu0 %v508
    %3128 = vmatprep.subr.mxu0 %v513
    %3129 = vmatpush1.msra.mxu0 %v512
    %3130 = vmatprep.subr.mxu0 %v517
    %3131 = vmatpush1.msra.mxu0 %v516
    %3132 = vmatprep.subr.mxu0 0.0
    %3133 = vmatpush1.msra.mxu0 0.0
    %3134 = vmatprep.subr.mxu0 0.0
    %3135 = vmatpush1.msra.mxu0 0.0
    %3136 = vmatprep.subr.mxu0 0.0
    %3137 = vmatpush1.msra.mxu0 0.0
    %3138 = vmatprep.subr.mxu0 0.0
    %3139 = vmatpush1.msra.mxu0 0.0
    %3140 = vmatprep.subr.mxu0 0.0
    %3141 = vmatpush1.msra.mxu0 0.0
    %3142 = vmatprep.subr.mxu0 0.0
    %3143 = vmatpush1.msra.mxu0 0.0
    %3144 = vmatprep.subr.mxu0 0.0
    %3145 = vmatpush1.msra.mxu0 0.0
    %3146 = vmatprep.subr.mxu0 0.0
    %3147 = vmatpush1.msra.mxu0 0.0
    %3148 = vmatprep.subr.mxu0 0.0
    %3149 = vmatpush1.msra.mxu0 0.0
    %3150 = vmatprep.subr.mxu0 0.0
    %3151 = vmatpush1.msra.mxu0 0.0
    %3152 = vmatprep.subr.mxu0 0.0
    %3153 = vmatpush1.msra.mxu0 0.0
    %3154 = vmatprep.subr.mxu0 0.0
    %3155 = vmatpush1.msra.mxu0 0.0
    %3156 = vmatprep.subr.mxu0 0.0
    %3157 = vmatpush1.msra.mxu0 0.0
    %3158 = vmatprep.subr.mxu0 0.0
    %3159 = vmatpush1.msra.mxu0 0.0
    %3160 = vmatprep.subr.mxu0 0.0
    %3161 = vmatpush1.msra.mxu0 0.0
    %3162 = vmatprep.subr.mxu0 0.0
    %3163 = vmatpush1.msra.mxu0 0.0
    %3164 = vmatprep.mubr.f32.mxu0 0.0
    %3165 = vmatmul.mubr.f32.gmra.mrb[0].mxu0 %v2783
    %v3166 = vpop.f32.mrb[0].mxu0
    %v3167 = vadd.f32 0.0, %v3166
    %v3168 = vpop.f32.mrb[0].mxu0
    %v3169 = vadd.f32 0.0, %v3168
    %3170 = vdwg.mxu0
    %3171 = vmatprep.subr.mxu0 %v459
    %3172 = vmatpush1.msra.mxu0 %v458
    %3173 = vmatprep.subr.mxu0 %v463
    %3174 = vmatpush1.msra.mxu0 %v462
    %3175 = vmatprep.subr.mxu0 %v467
    %3176 = vmatpush1.msra.mxu0 %v466
    %3177 = vmatprep.subr.mxu0 %v471
    %3178 = vmatpush1.msra.mxu0 %v470
    %3179 = vmatprep.subr.mxu0 %v475
    %3180 = vmatpush1.msra.mxu0 %v474
    %3181 = vmatprep.subr.mxu0 %v479
    %3182 = vmatpush1.msra.mxu0 %v478
    %3183 = vmatprep.subr.mxu0 %v483
    %3184 = vmatpush1.msra.mxu0 %v482
    %3185 = vmatprep.subr.mxu0 %v487
    %3186 = vmatpush1.msra.mxu0 %v486
    %3187 = vmatprep.subr.mxu0 %v491
    %3188 = vmatpush1.msra.mxu0 %v490
    %3189 = vmatprep.subr.mxu0 %v495
    %3190 = vmatpush1.msra.mxu0 %v494
    %3191 = vmatprep.subr.mxu0 %v499
    %3192 = vmatpush1.msra.mxu0 %v498
    %3193 = vmatprep.subr.mxu0 %v503
    %3194 = vmatpush1.msra.mxu0 %v502
    %3195 = vmatprep.subr.mxu0 %v507
    %3196 = vmatpush1.msra.mxu0 %v506
    %3197 = vmatprep.subr.mxu0 %v511
    %3198 = vmatpush1.msra.mxu0 %v510
    %3199 = vmatprep.subr.mxu0 %v515
    %3200 = vmatpush1.msra.mxu0 %v514
    %3201 = vmatprep.subr.mxu0 %v519
    %3202 = vmatpush1.msra.mxu0 %v518
    %3203 = vmatprep.subr.mxu0 0.0
    %3204 = vmatpush1.msra.mxu0 0.0
    %3205 = vmatprep.subr.mxu0 0.0
    %3206 = vmatpush1.msra.mxu0 0.0
    %3207 = vmatprep.subr.mxu0 0.0
    %3208 = vmatpush1.msra.mxu0 0.0
    %3209 = vmatprep.subr.mxu0 0.0
    %3210 = vmatpush1.msra.mxu0 0.0
    %3211 = vmatprep.subr.mxu0 0.0
    %3212 = vmatpush1.msra.mxu0 0.0
    %3213 = vmatprep.subr.mxu0 0.0
    %3214 = vmatpush1.msra.mxu0 0.0
    %3215 = vmatprep.subr.mxu0 0.0
    %3216 = vmatpush1.msra.mxu0 0.0
    %3217 = vmatprep.subr.mxu0 0.0
    %3218 = vmatpush1.msra.mxu0 0.0
    %3219 = vmatprep.subr.mxu0 0.0
    %3220 = vmatpush1.msra.mxu0 0.0
    %3221 = vmatprep.subr.mxu0 0.0
    %3222 = vmatpush1.msra.mxu0 0.0
    %3223 = vmatprep.subr.mxu0 0.0
    %3224 = vmatpush1.msra.mxu0 0.0
    %3225 = vmatprep.subr.mxu0 0.0
    %3226 = vmatpush1.msra.mxu0 0.0
    %3227 = vmatprep.subr.mxu0 0.0
    %3228 = vmatpush1.msra.mxu0 0.0
    %3229 = vmatprep.subr.mxu0 0.0
    %3230 = vmatpush1.msra.mxu0 0.0
    %3231 = vmatprep.subr.mxu0 0.0
    %3232 = vmatpush1.msra.mxu0 0.0
    %3233 = vmatprep.subr.mxu0 0.0
    %3234 = vmatpush1.msra.mxu0 0.0
    %3235 = vmatprep.mubr.f32.mxu0 0.0
    %3236 = vmatmul.mubr.f32.gmra.mrb[0].mxu0 %v2783
    %v3237 = vpop.f32.mrb[0].mxu0
    %v3238 = vadd.f32 0.0, %v3237
    %v3239 = vpop.f32.mrb[0].mxu0
    %v3240 = vadd.f32 0.0, %v3239
    %3241 = vdwg.mxu0
    %v3242 = vadd.f32 %v3096, %v3167
    %v3243 = vadd.f32 %v3097, %v3169
    %v3244 = vadd.f32 %v3098, %v3238
    %v3245 = vadd.f32 %v3099, %v3240
    %v3246 = vxor.u32 %v3242, 2147483648
    %v3247 = vxor.u32 %v3243, 2147483648
    %v3248 = vxor.u32 %v3244, 2147483648
    %v3249 = vmul.f32 %v3246, 1.442695
    %v3250 = vpow.pop %v3249
    %v3251 = vmul.f32 %v3247, 1.442695
    %v3252 = vpow.pop %v3251
    %v3253 = vmul.f32 %v3248, 1.442695
    %v3254 = vpow.pop %v3253
    %v3255 = vadd.f32 %v3250, 1.0
    %v3256 = vadd.f32 %v3252, 1.0
    %v3257 = vadd.f32 %v3254, 1.0
    %v3258 = vrcp.pop %v3255
    %v3259 = vmul.f32 1.0, %v3258
    %v3260 = vrcp.pop %v3256
    %v3261 = vmul.f32 1.0, %v3260
    %v3262 = vrcp.pop %v3257
    %v3263 = vmul.f32 1.0, %v3262
    %v3264 = vtanh.pop %v3245
    %v3265 = vmul.f32 %v3261, %v2781
    %v3266 = vmul.f32 %v3259, %v3264
    %v3267 = vadd.f32 %v3265, %v3266
    %v3268 = vtanh.pop %v3267
    %v3269 = vmul.f32 %v3263, %v3268
    %3270 = vmatprep.subr.mxu0 %v755
    %3271 = vmatpush1.msra.mxu0 %v754
    %3272 = vmatprep.subr.mxu0 %v759
    %3273 = vmatpush1.msra.mxu0 %v758
    %3274 = vmatprep.subr.mxu0 %v763
    %3275 = vmatpush1.msra.mxu0 %v762
    %3276 = vmatprep.subr.mxu0 %v767
    %3277 = vmatpush1.msra.mxu0 %v766
    %3278 = vmatprep.subr.mxu0 %v771
    %3279 = vmatpush1.msra.mxu0 %v770
    %3280 = vmatprep.subr.mxu0 %v775
    %3281 = vmatpush1.msra.mxu0 %v774
    %3282 = vmatprep.subr.mxu0 %v779
    %3283 = vmatpush1.msra.mxu0 %v778
    %3284 = vmatprep.subr.mxu0 %v783
    %3285 = vmatpush1.msra.mxu0 %v782
    %3286 = vmatprep.subr.mxu0 %v787
    %3287 = vmatpush1.msra.mxu0 %v786
    %3288 = vmatprep.subr.mxu0 %v791
    %3289 = vmatpush1.msra.mxu0 %v790
    %3290 = vmatprep.subr.mxu0 %v795
    %3291 = vmatpush1.msra.mxu0 %v794
    %3292 = vmatprep.subr.mxu0 %v799
    %3293 = vmatpush1.msra.mxu0 %v798
    %3294 = vmatprep.subr.mxu0 %v803
    %3295 = vmatpush1.msra.mxu0 %v802
    %3296 = vmatprep.subr.mxu0 %v807
    %3297 = vmatpush1.msra.mxu0 %v806
    %3298 = vmatprep.subr.mxu0 %v811
    %3299 = vmatpush1.msra.mxu0 %v810
    %3300 = vmatprep.subr.mxu0 %v815
    %3301 = vmatpush1.msra.mxu0 %v814
    %3302 = vmatprep.subr.mxu0 0.0
    %3303 = vmatpush1.msra.mxu0 0.0
    %3304 = vmatprep.subr.mxu0 0.0
    %3305 = vmatpush1.msra.mxu0 0.0
    %3306 = vmatprep.subr.mxu0 0.0
    %3307 = vmatpush1.msra.mxu0 0.0
    %3308 = vmatprep.subr.mxu0 0.0
    %3309 = vmatpush1.msra.mxu0 0.0
    %3310 = vmatprep.subr.mxu0 0.0
    %3311 = vmatpush1.msra.mxu0 0.0
    %3312 = vmatprep.subr.mxu0 0.0
    %3313 = vmatpush1.msra.mxu0 0.0
    %3314 = vmatprep.subr.mxu0 0.0
    %3315 = vmatpush1.msra.mxu0 0.0
    %3316 = vmatprep.subr.mxu0 0.0
    %3317 = vmatpush1.msra.mxu0 0.0
    %3318 = vmatprep.subr.mxu0 0.0
    %3319 = vmatpush1.msra.mxu0 0.0
    %3320 = vmatprep.subr.mxu0 0.0
    %3321 = vmatpush1.msra.mxu0 0.0
    %3322 = vmatprep.subr.mxu0 0.0
    %3323 = vmatpush1.msra.mxu0 0.0
    %3324 = vmatprep.subr.mxu0 0.0
    %3325 = vmatpush1.msra.mxu0 0.0
    %3326 = vmatprep.subr.mxu0 0.0
    %3327 = vmatpush1.msra.mxu0 0.0
    %3328 = vmatprep.subr.mxu0 0.0
    %3329 = vmatpush1.msra.mxu0 0.0
    %3330 = vmatprep.subr.mxu0 0.0
    %3331 = vmatpush1.msra.mxu0 0.0
    %3332 = vmatprep.subr.mxu0 0.0
    %3333 = vmatpush1.msra.mxu0 0.0
    %3334 = vmatprep.mubr.f32.mxu0 0.0
    %3335 = vmatmul.mubr.f32.gmra.mrb[0].mxu0 %v3095
    %v3336 = vpop.f32.mrb[0].mxu0
    %v3337 = vadd.f32 0.0, %v3336
    %v3338 = vpop.f32.mrb[0].mxu0
    %v3339 = vadd.f32 0.0, %v3338
    %3340 = vdwg.mxu0
    %3341 = vmatprep.subr.mxu0 %v757
    %3342 = vmatpush1.msra.mxu0 %v756
    %3343 = vmatprep.subr.mxu0 %v761
    %3344 = vmatpush1.msra.mxu0 %v760
    %3345 = vmatprep.subr.mxu0 %v765
    %3346 = vmatpush1.msra.mxu0 %v764
    %3347 = vmatprep.subr.mxu0 %v769
    %3348 = vmatpush1.msra.mxu0 %v768
    %3349 = vmatprep.subr.mxu0 %v773
    %3350 = vmatpush1.msra.mxu0 %v772
    %3351 = vmatprep.subr.mxu0 %v777
    %3352 = vmatpush1.msra.mxu0 %v776
    %3353 = vmatprep.subr.mxu0 %v781
    %3354 = vmatpush1.msra.mxu0 %v780
    %3355 = vmatprep.subr.mxu0 %v785
    %3356 = vmatpush1.msra.mxu0 %v784
    %3357 = vmatprep.subr.mxu0 %v789
    %3358 = vmatpush1.msra.mxu0 %v788
    %3359 = vmatprep.subr.mxu0 %v793
    %3360 = vmatpush1.msra.mxu0 %v792
    %3361 = vmatprep.subr.mxu0 %v797
    %3362 = vmatpush1.msra.mxu0 %v796
    %3363 = vmatprep.subr.mxu0 %v801
    %3364 = vmatpush1.msra.mxu0 %v800
    %3365 = vmatprep.subr.mxu0 %v805
    %3366 = vmatpush1.msra.mxu0 %v804
    %3367 = vmatprep.subr.mxu0 %v809
    %3368 = vmatpush1.msra.mxu0 %v808
    %3369 = vmatprep.subr.mxu0 %v813
    %3370 = vmatpush1.msra.mxu0 %v812
    %3371 = vmatprep.subr.mxu0 %v817
    %3372 = vmatpush1.msra.mxu0 %v816
    %3373 = vmatprep.subr.mxu0 0.0
    %3374 = vmatpush1.msra.mxu0 0.0
    %3375 = vmatprep.subr.mxu0 0.0
    %3376 = vmatpush1.msra.mxu0 0.0
    %3377 = vmatprep.subr.mxu0 0.0
    %3378 = vmatpush1.msra.mxu0 0.0
    %3379 = vmatprep.subr.mxu0 0.0
    %3380 = vmatpush1.msra.mxu0 0.0
    %3381 = vmatprep.subr.mxu0 0.0
    %3382 = vmatpush1.msra.mxu0 0.0
    %3383 = vmatprep.subr.mxu0 0.0
    %3384 = vmatpush1.msra.mxu0 0.0
    %3385 = vmatprep.subr.mxu0 0.0
    %3386 = vmatpush1.msra.mxu0 0.0
    %3387 = vmatprep.subr.mxu0 0.0
    %3388 = vmatpush1.msra.mxu0 0.0
    %3389 = vmatprep.subr.mxu0 0.0
    %3390 = vmatpush1.msra.mxu0 0.0
    %3391 = vmatprep.subr.mxu0 0.0
    %3392 = vmatpush1.msra.mxu0 0.0
    %3393 = vmatprep.subr.mxu0 0.0
    %3394 = vmatpush1.msra.mxu0 0.0
    %3395 = vmatprep.subr.mxu0 0.0
    %3396 = vmatpush1.msra.mxu0 0.0
    %3397 = vmatprep.subr.mxu0 0.0
    %3398 = vmatpush1.msra.mxu0 0.0
    %3399 = vmatprep.subr.mxu0 0.0
    %3400 = vmatpush1.msra.mxu0 0.0
    %3401 = vmatprep.subr.mxu0 0.0
    %3402 = vmatpush1.msra.mxu0 0.0
    %3403 = vmatprep.subr.mxu0 0.0
    %3404 = vmatpush1.msra.mxu0 0.0
    %3405 = vmatprep.mubr.f32.mxu0 0.0
    %3406 = vmatmul.mubr.f32.gmra.mrb[0].mxu0 %v3095
    %v3407 = vpop.f32.mrb[0].mxu0
    %v3408 = vadd.f32 0.0, %v3407
    %v3409 = vpop.f32.mrb[0].mxu0
    %v3410 = vadd.f32 0.0, %v3409
    %3411 = vdwg.mxu0
    %3412 = vmatprep.subr.mxu0 %v691
    %3413 = vmatpush1.msra.mxu0 %v690
    %3414 = vmatprep.subr.mxu0 %v695
    %3415 = vmatpush1.msra.mxu0 %v694
    %3416 = vmatprep.subr.mxu0 %v699
    %3417 = vmatpush1.msra.mxu0 %v698
    %3418 = vmatprep.subr.mxu0 %v703
    %3419 = vmatpush1.msra.mxu0 %v702
    %3420 = vmatprep.subr.mxu0 %v707
    %3421 = vmatpush1.msra.mxu0 %v706
    %3422 = vmatprep.subr.mxu0 %v711
    %3423 = vmatpush1.msra.mxu0 %v710
    %3424 = vmatprep.subr.mxu0 %v715
    %3425 = vmatpush1.msra.mxu0 %v714
    %3426 = vmatprep.subr.mxu0 %v719
    %3427 = vmatpush1.msra.mxu0 %v718
    %3428 = vmatprep.subr.mxu0 %v723
    %3429 = vmatpush1.msra.mxu0 %v722
    %3430 = vmatprep.subr.mxu0 %v727
    %3431 = vmatpush1.msra.mxu0 %v726
    %3432 = vmatprep.subr.mxu0 %v731
    %3433 = vmatpush1.msra.mxu0 %v730
    %3434 = vmatprep.subr.mxu0 %v735
    %3435 = vmatpush1.msra.mxu0 %v734
    %3436 = vmatprep.subr.mxu0 %v739
    %3437 = vmatpush1.msra.mxu0 %v738
    %3438 = vmatprep.subr.mxu0 %v743
    %3439 = vmatpush1.msra.mxu0 %v742
    %3440 = vmatprep.subr.mxu0 %v747
    %3441 = vmatpush1.msra.mxu0 %v746
    %3442 = vmatprep.subr.mxu0 %v751
    %3443 = vmatpush1.msra.mxu0 %v750
    %3444 = vmatprep.subr.mxu0 0.0
    %3445 = vmatpush1.msra.mxu0 0.0
    %3446 = vmatprep.subr.mxu0 0.0
    %3447 = vmatpush1.msra.mxu0 0.0
    %3448 = vmatprep.subr.mxu0 0.0
    %3449 = vmatpush1.msra.mxu0 0.0
    %3450 = vmatprep.subr.mxu0 0.0
    %3451 = vmatpush1.msra.mxu0 0.0
    %3452 = vmatprep.subr.mxu0 0.0
    %3453 = vmatpush1.msra.mxu0 0.0
    %3454 = vmatprep.subr.mxu0 0.0
    %3455 = vmatpush1.msra.mxu0 0.0
    %3456 = vmatprep.subr.mxu0 0.0
    %3457 = vmatpush1.msra.mxu0 0.0
    %3458 = vmatprep.subr.mxu0 0.0
    %3459 = vmatpush1.msra.mxu0 0.0
    %3460 = vmatprep.subr.mxu0 0.0
    %3461 = vmatpush1.msra.mxu0 0.0
    %3462 = vmatprep.subr.mxu0 0.0
    %3463 = vmatpush1.msra.mxu0 0.0
    %3464 = vmatprep.subr.mxu0 0.0
    %3465 = vmatpush1.msra.mxu0 0.0
    %3466 = vmatprep.subr.mxu0 0.0
    %3467 = vmatpush1.msra.mxu0 0.0
    %3468 = vmatprep.subr.mxu0 0.0
    %3469 = vmatpush1.msra.mxu0 0.0
    %3470 = vmatprep.subr.mxu0 0.0
    %3471 = vmatpush1.msra.mxu0 0.0
    %3472 = vmatprep.subr.mxu0 0.0
    %3473 = vmatpush1.msra.mxu0 0.0
    %3474 = vmatprep.subr.mxu0 0.0
    %3475 = vmatpush1.msra.mxu0 0.0
    %3476 = vmatprep.mubr.f32.mxu0 0.0
    %3477 = vmatmul.mubr.f32.gmra.mrb[0].mxu0 %v3269
    %v3478 = vpop.f32.mrb[0].mxu0
    %v3479 = vadd.f32 %v3337, %v3478
    %v3480 = vpop.f32.mrb[0].mxu0
    %v3481 = vadd.f32 %v3339, %v3480
    %3482 = vdwg.mxu0
    %3483 = vmatprep.subr.mxu0 %v693
    %3484 = vmatpush1.msra.mxu0 %v692
    %3485 = vmatprep.subr.mxu0 %v697
    %3486 = vmatpush1.msra.mxu0 %v696
    %3487 = vmatprep.subr.mxu0 %v701
    %3488 = vmatpush1.msra.mxu0 %v700
    %3489 = vmatprep.subr.mxu0 %v705
    %3490 = vmatpush1.msra.mxu0 %v704
    %3491 = vmatprep.subr.mxu0 %v709
    %3492 = vmatpush1.msra.mxu0 %v708
    %3493 = vmatprep.subr.mxu0 %v713
    %3494 = vmatpush1.msra.mxu0 %v712
    %3495 = vmatprep.subr.mxu0 %v717
    %3496 = vmatpush1.msra.mxu0 %v716
    %3497 = vmatprep.subr.mxu0 %v721
    %3498 = vmatpush1.msra.mxu0 %v720
    %3499 = vmatprep.subr.mxu0 %v725
    %3500 = vmatpush1.msra.mxu0 %v724
    %3501 = vmatprep.subr.mxu0 %v729
    %3502 = vmatpush1.msra.mxu0 %v728
    %3503 = vmatprep.subr.mxu0 %v733
    %3504 = vmatpush1.msra.mxu0 %v732
    %3505 = vmatprep.subr.mxu0 %v737
    %3506 = vmatpush1.msra.mxu0 %v736
    %3507 = vmatprep.subr.mxu0 %v741
    %3508 = vmatpush1.msra.mxu0 %v740
    %3509 = vmatprep.subr.mxu0 %v745
    %3510 = vmatpush1.msra.mxu0 %v744
    %3511 = vmatprep.subr.mxu0 %v749
    %3512 = vmatpush1.msra.mxu0 %v748
    %3513 = vmatprep.subr.mxu0 %v753
    %3514 = vmatpush1.msra.mxu0 %v752
    %3515 = vmatprep.subr.mxu0 0.0
    %3516 = vmatpush1.msra.mxu0 0.0
    %3517 = vmatprep.subr.mxu0 0.0
    %3518 = vmatpush1.msra.mxu0 0.0
    %3519 = vmatprep.subr.mxu0 0.0
    %3520 = vmatpush1.msra.mxu0 0.0
    %3521 = vmatprep.subr.mxu0 0.0
    %3522 = vmatpush1.msra.mxu0 0.0
    %3523 = vmatprep.subr.mxu0 0.0
    %3524 = vmatpush1.msra.mxu0 0.0
    %3525 = vmatprep.subr.mxu0 0.0
    %3526 = vmatpush1.msra.mxu0 0.0
    %3527 = vmatprep.subr.mxu0 0.0
    %3528 = vmatpush1.msra.mxu0 0.0
    %3529 = vmatprep.subr.mxu0 0.0
    %3530 = vmatpush1.msra.mxu0 0.0
    %3531 = vmatprep.subr.mxu0 0.0
    %3532 = vmatpush1.msra.mxu0 0.0
    %3533 = vmatprep.subr.mxu0 0.0
    %3534 = vmatpush1.msra.mxu0 0.0
    %3535 = vmatprep.subr.mxu0 0.0
    %3536 = vmatpush1.msra.mxu0 0.0
    %3537 = vmatprep.subr.mxu0 0.0
    %3538 = vmatpush1.msra.mxu0 0.0
    %3539 = vmatprep.subr.mxu0 0.0
    %3540 = vmatpush1.msra.mxu0 0.0
    %3541 = vmatprep.subr.mxu0 0.0
    %3542 = vmatpush1.msra.mxu0 0.0
    %3543 = vmatprep.subr.mxu0 0.0
    %3544 = vmatpush1.msra.mxu0 0.0
    %3545 = vmatprep.subr.mxu0 0.0
    %3546 = vmatpush1.msra.mxu0 0.0
    %3547 = vmatprep.mubr.f32.mxu0 0.0
    %3548 = vmatmul.mubr.f32.gmra.mrb[0].mxu0 %v3269
    %v3549 = vpop.f32.mrb[0].mxu0
    %v3550 = vadd.f32 %v3408, %v3549
    %v3551 = vpop.f32.mrb[0].mxu0
    %v3552 = vadd.f32 %v3410, %v3551
    %3553 = vdwg.mxu0
    %v3554 = vadd.f32 %v3479, %v1107
    %v3555 = vadd.f32 %v3481, %v1111
    %v3556 = vadd.f32 %v3550, %v1115
    %v3557 = vadd.f32 %v3552, %v1119
    %v3558 = vxor.u32 %v3554, 2147483648
    %v3559 = vxor.u32 %v3555, 2147483648
    %v3560 = vxor.u32 %v3556, 2147483648
    %v3561 = vmul.f32 %v3558, 1.442695
    %v3562 = vpow.pop %v3561
    %v3563 = vmul.f32 %v3559, 1.442695
    %v3564 = vpow.pop %v3563
    %v3565 = vmul.f32 %v3560, 1.442695
    %v3566 = vpow.pop %v3565
    %v3567 = vadd.f32 %v3562, 1.0
    %v3568 = vadd.f32 %v3564, 1.0
    %v3569 = vadd.f32 %v3566, 1.0
    %v3570 = vrcp.pop %v3567
    %v3571 = vmul.f32 1.0, %v3570
    %v3572 = vrcp.pop %v3568
    %v3573 = vmul.f32 1.0, %v3572
    %v3574 = vrcp.pop %v3569
    %v3575 = vmul.f32 1.0, %v3574
    %v3576 = vtanh.pop %v3557
    %v3577 = vmul.f32 %v3573, %v3093
    %v3578 = vmul.f32 %v3571, %v3576
    %v3579 = vadd.f32 %v3577, %v3578
    %v3580 = vtanh.pop %v3579
    %v3581 = vmul.f32 %v3575, %v3580
    %v3582 = vld [vmem:[#allocation2 + $0xc0] sm:$0xff]
    %v3583 = vld [vmem:[#allocation2 + $0xc8] sm:$0xff]
    %v3584 = vld [vmem:[#allocation2 + $0xd0] sm:$0xff]
    %v3585 = vld [vmem:[#allocation2 + $0xd8] sm:$0xff]
    %3586 = vmatprep.subr.mxu0 %v457
    %3587 = vmatpush1.msra.mxu0 %v456
    %3588 = vmatprep.subr.mxu0 %v461
    %3589 = vmatpush1.msra.mxu0 %v460
    %3590 = vmatprep.subr.mxu0 %v465
    %3591 = vmatpush1.msra.mxu0 %v464
    %3592 = vmatprep.subr.mxu0 %v469
    %3593 = vmatpush1.msra.mxu0 %v468
    %3594 = vmatprep.subr.mxu0 %v473
    %3595 = vmatpush1.msra.mxu0 %v472
    %3596 = vmatprep.subr.mxu0 %v477
    %3597 = vmatpush1.msra.mxu0 %v476
    %3598 = vmatprep.subr.mxu0 %v481
    %3599 = vmatpush1.msra.mxu0 %v480
    %3600 = vmatprep.subr.mxu0 %v485
    %3601 = vmatpush1.msra.mxu0 %v484
    %3602 = vmatprep.subr.mxu0 %v489
    %3603 = vmatpush1.msra.mxu0 %v488
    %3604 = vmatprep.subr.mxu0 %v493
    %3605 = vmatpush1.msra.mxu0 %v492
    %3606 = vmatprep.subr.mxu0 %v497
    %3607 = vmatpush1.msra.mxu0 %v496
    %3608 = vmatprep.subr.mxu0 %v501
    %3609 = vmatpush1.msra.mxu0 %v500
    %3610 = vmatprep.subr.mxu0 %v505
    %3611 = vmatpush1.msra.mxu0 %v504
    %3612 = vmatprep.subr.mxu0 %v509
    %3613 = vmatpush1.msra.mxu0 %v508
    %3614 = vmatprep.subr.mxu0 %v513
    %3615 = vmatpush1.msra.mxu0 %v512
    %3616 = vmatprep.subr.mxu0 %v517
    %3617 = vmatpush1.msra.mxu0 %v516
    %3618 = vmatprep.subr.mxu0 0.0
    %3619 = vmatpush1.msra.mxu0 0.0
    %3620 = vmatprep.subr.mxu0 0.0
    %3621 = vmatpush1.msra.mxu0 0.0
    %3622 = vmatprep.subr.mxu0 0.0
    %3623 = vmatpush1.msra.mxu0 0.0
    %3624 = vmatprep.subr.mxu0 0.0
    %3625 = vmatpush1.msra.mxu0 0.0
    %3626 = vmatprep.subr.mxu0 0.0
    %3627 = vmatpush1.msra.mxu0 0.0
    %3628 = vmatprep.subr.mxu0 0.0
    %3629 = vmatpush1.msra.mxu0 0.0
    %3630 = vmatprep.subr.mxu0 0.0
    %3631 = vmatpush1.msra.mxu0 0.0
    %3632 = vmatprep.subr.mxu0 0.0
    %3633 = vmatpush1.msra.mxu0 0.0
    %3634 = vmatprep.subr.mxu0 0.0
    %3635 = vmatpush1.msra.mxu0 0.0
    %3636 = vmatprep.subr.mxu0 0.0
    %3637 = vmatpush1.msra.mxu0 0.0
    %3638 = vmatprep.subr.mxu0 0.0
    %3639 = vmatpush1.msra.mxu0 0.0
    %3640 = vmatprep.subr.mxu0 0.0
    %3641 = vmatpush1.msra.mxu0 0.0
    %3642 = vmatprep.subr.mxu0 0.0
    %3643 = vmatpush1.msra.mxu0 0.0
    %3644 = vmatprep.subr.mxu0 0.0
    %3645 = vmatpush1.msra.mxu0 0.0
    %3646 = vmatprep.subr.mxu0 0.0
    %3647 = vmatpush1.msra.mxu0 0.0
    %3648 = vmatprep.subr.mxu0 0.0
    %3649 = vmatpush1.msra.mxu0 0.0
    %3650 = vmatprep.mubr.f32.mxu0 0.0
    %3651 = vmatmul.mubr.f32.gmra.mrb[0].mxu0 %v3269
    %v3652 = vpop.f32.mrb[0].mxu0
    %v3653 = vadd.f32 0.0, %v3652
    %v3654 = vpop.f32.mrb[0].mxu0
    %v3655 = vadd.f32 0.0, %v3654
    %3656 = vdwg.mxu0
    %3657 = vmatprep.subr.mxu0 %v459
    %3658 = vmatpush1.msra.mxu0 %v458
    %3659 = vmatprep.subr.mxu0 %v463
    %3660 = vmatpush1.msra.mxu0 %v462
    %3661 = vmatprep.subr.mxu0 %v467
    %3662 = vmatpush1.msra.mxu0 %v466
    %3663 = vmatprep.subr.mxu0 %v471
    %3664 = vmatpush1.msra.mxu0 %v470
    %3665 = vmatprep.subr.mxu0 %v475
    %3666 = vmatpush1.msra.mxu0 %v474
    %3667 = vmatprep.subr.mxu0 %v479
    %3668 = vmatpush1.msra.mxu0 %v478
    %3669 = vmatprep.subr.mxu0 %v483
    %3670 = vmatpush1.msra.mxu0 %v482
    %3671 = vmatprep.subr.mxu0 %v487
    %3672 = vmatpush1.msra.mxu0 %v486
    %3673 = vmatprep.subr.mxu0 %v491
    %3674 = vmatpush1.msra.mxu0 %v490
    %3675 = vmatprep.subr.mxu0 %v495
    %3676 = vmatpush1.msra.mxu0 %v494
    %3677 = vmatprep.subr.mxu0 %v499
    %3678 = vmatpush1.msra.mxu0 %v498
    %3679 = vmatprep.subr.mxu0 %v503
    %3680 = vmatpush1.msra.mxu0 %v502
    %3681 = vmatprep.subr.mxu0 %v507
    %3682 = vmatpush1.msra.mxu0 %v506
    %3683 = vmatprep.subr.mxu0 %v511
    %3684 = vmatpush1.msra.mxu0 %v510
    %3685 = vmatprep.subr.mxu0 %v515
    %3686 = vmatpush1.msra.mxu0 %v514
    %3687 = vmatprep.subr.mxu0 %v519
    %3688 = vmatpush1.msra.mxu0 %v518
    %3689 = vmatprep.subr.mxu0 0.0
    %3690 = vmatpush1.msra.mxu0 0.0
    %3691 = vmatprep.subr.mxu0 0.0
    %3692 = vmatpush1.msra.mxu0 0.0
    %3693 = vmatprep.subr.mxu0 0.0
    %3694 = vmatpush1.msra.mxu0 0.0
    %3695 = vmatprep.subr.mxu0 0.0
    %3696 = vmatpush1.msra.mxu0 0.0
    %3697 = vmatprep.subr.mxu0 0.0
    %3698 = vmatpush1.msra.mxu0 0.0
    %3699 = vmatprep.subr.mxu0 0.0
    %3700 = vmatpush1.msra.mxu0 0.0
    %3701 = vmatprep.subr.mxu0 0.0
    %3702 = vmatpush1.msra.mxu0 0.0
    %3703 = vmatprep.subr.mxu0 0.0
    %3704 = vmatpush1.msra.mxu0 0.0
    %3705 = vmatprep.subr.mxu0 0.0
    %3706 = vmatpush1.msra.mxu0 0.0
    %3707 = vmatprep.subr.mxu0 0.0
    %3708 = vmatpush1.msra.mxu0 0.0
    %3709 = vmatprep.subr.mxu0 0.0
    %3710 = vmatpush1.msra.mxu0 0.0
    %3711 = vmatprep.subr.mxu0 0.0
    %3712 = vmatpush1.msra.mxu0 0.0
    %3713 = vmatprep.subr.mxu0 0.0
    %3714 = vmatpush1.msra.mxu0 0.0
    %3715 = vmatprep.subr.mxu0 0.0
    %3716 = vmatpush1.msra.mxu0 0.0
    %3717 = vmatprep.subr.mxu0 0.0
    %3718 = vmatpush1.msra.mxu0 0.0
    %3719 = vmatprep.subr.mxu0 0.0
    %3720 = vmatpush1.msra.mxu0 0.0
    %3721 = vmatprep.mubr.f32.mxu0 0.0
    %3722 = vmatmul.mubr.f32.gmra.mrb[0].mxu0 %v3269
    %v3723 = vpop.f32.mrb[0].mxu0
    %v3724 = vadd.f32 0.0, %v3723
    %v3725 = vpop.f32.mrb[0].mxu0
    %v3726 = vadd.f32 0.0, %v3725
    %3727 = vdwg.mxu0
    %v3728 = vadd.f32 %v3582, %v3653
    %v3729 = vadd.f32 %v3583, %v3655
    %v3730 = vadd.f32 %v3584, %v3724
    %v3731 = vadd.f32 %v3585, %v3726
    %v3732 = vxor.u32 %v3728, 2147483648
    %v3733 = vxor.u32 %v3729, 2147483648
    %v3734 = vxor.u32 %v3730, 2147483648
    %v3735 = vmul.f32 %v3732, 1.442695
    %v3736 = vpow.pop %v3735
    %v3737 = vmul.f32 %v3733, 1.442695
    %v3738 = vpow.pop %v3737
    %v3739 = vmul.f32 %v3734, 1.442695
    %v3740 = vpow.pop %v3739
    %v3741 = vadd.f32 %v3736, 1.0
    %v3742 = vadd.f32 %v3738, 1.0
    %v3743 = vadd.f32 %v3740, 1.0
    %v3744 = vrcp.pop %v3741
    %v3745 = vmul.f32 1.0, %v3744
    %v3746 = vrcp.pop %v3742
    %v3747 = vmul.f32 1.0, %v3746
    %v3748 = vrcp.pop %v3743
    %v3749 = vmul.f32 1.0, %v3748
    %v3750 = vtanh.pop %v3731
    %v3751 = vmul.f32 %v3747, %v3267
    %v3752 = vmul.f32 %v3745, %v3750
    %v3753 = vadd.f32 %v3751, %v3752
    %v3754 = vtanh.pop %v3753
    %v3755 = vmul.f32 %v3749, %v3754
    %3756 = vmatprep.subr.mxu0 %v755
    %3757 = vmatpush1.msra.mxu0 %v754
    %3758 = vmatprep.subr.mxu0 %v759
    %3759 = vmatpush1.msra.mxu0 %v758
    %3760 = vmatprep.subr.mxu0 %v763
    %3761 = vmatpush1.msra.mxu0 %v762
    %3762 = vmatprep.subr.mxu0 %v767
    %3763 = vmatpush1.msra.mxu0 %v766
    %3764 = vmatprep.subr.mxu0 %v771
    %3765 = vmatpush1.msra.mxu0 %v770
    %3766 = vmatprep.subr.mxu0 %v775
    %3767 = vmatpush1.msra.mxu0 %v774
    %3768 = vmatprep.subr.mxu0 %v779
    %3769 = vmatpush1.msra.mxu0 %v778
    %3770 = vmatprep.subr.mxu0 %v783
    %3771 = vmatpush1.msra.mxu0 %v782
    %3772 = vmatprep.subr.mxu0 %v787
    %3773 = vmatpush1.msra.mxu0 %v786
    %3774 = vmatprep.subr.mxu0 %v791
    %3775 = vmatpush1.msra.mxu0 %v790
    %3776 = vmatprep.subr.mxu0 %v795
    %3777 = vmatpush1.msra.mxu0 %v794
    %3778 = vmatprep.subr.mxu0 %v799
    %3779 = vmatpush1.msra.mxu0 %v798
    %3780 = vmatprep.subr.mxu0 %v803
    %3781 = vmatpush1.msra.mxu0 %v802
    %3782 = vmatprep.subr.mxu0 %v807
    %3783 = vmatpush1.msra.mxu0 %v806
    %3784 = vmatprep.subr.mxu0 %v811
    %3785 = vmatpush1.msra.mxu0 %v810
    %3786 = vmatprep.subr.mxu0 %v815
    %3787 = vmatpush1.msra.mxu0 %v814
    %3788 = vmatprep.subr.mxu0 0.0
    %3789 = vmatpush1.msra.mxu0 0.0
    %3790 = vmatprep.subr.mxu0 0.0
    %3791 = vmatpush1.msra.mxu0 0.0
    %3792 = vmatprep.subr.mxu0 0.0
    %3793 = vmatpush1.msra.mxu0 0.0
    %3794 = vmatprep.subr.mxu0 0.0
    %3795 = vmatpush1.msra.mxu0 0.0
    %3796 = vmatprep.subr.mxu0 0.0
    %3797 = vmatpush1.msra.mxu0 0.0
    %3798 = vmatprep.subr.mxu0 0.0
    %3799 = vmatpush1.msra.mxu0 0.0
    %3800 = vmatprep.subr.mxu0 0.0
    %3801 = vmatpush1.msra.mxu0 0.0
    %3802 = vmatprep.subr.mxu0 0.0
    %3803 = vmatpush1.msra.mxu0 0.0
    %3804 = vmatprep.subr.mxu0 0.0
    %3805 = vmatpush1.msra.mxu0 0.0
    %3806 = vmatprep.subr.mxu0 0.0
    %3807 = vmatpush1.msra.mxu0 0.0
    %3808 = vmatprep.subr.mxu0 0.0
    %3809 = vmatpush1.msra.mxu0 0.0
    %3810 = vmatprep.subr.mxu0 0.0
    %3811 = vmatpush1.msra.mxu0 0.0
    %3812 = vmatprep.subr.mxu0 0.0
    %3813 = vmatpush1.msra.mxu0 0.0
    %3814 = vmatprep.subr.mxu0 0.0
    %3815 = vmatpush1.msra.mxu0 0.0
    %3816 = vmatprep.subr.mxu0 0.0
    %3817 = vmatpush1.msra.mxu0 0.0
    %3818 = vmatprep.subr.mxu0 0.0
    %3819 = vmatpush1.msra.mxu0 0.0
    %3820 = vmatprep.mubr.f32.mxu0 0.0
    %3821 = vmatmul.mubr.f32.gmra.mrb[0].mxu0 %v3581
    %v3822 = vpop.f32.mrb[0].mxu0
    %v3823 = vadd.f32 0.0, %v3822
    %v3824 = vpop.f32.mrb[0].mxu0
    %v3825 = vadd.f32 0.0, %v3824
    %3826 = vdwg.mxu0
    %3827 = vmatprep.subr.mxu0 %v757
    %3828 = vmatpush1.msra.mxu0 %v756
    %3829 = vmatprep.subr.mxu0 %v761
    %3830 = vmatpush1.msra.mxu0 %v760
    %3831 = vmatprep.subr.mxu0 %v765
    %3832 = vmatpush1.msra.mxu0 %v764
    %3833 = vmatprep.subr.mxu0 %v769
    %3834 = vmatpush1.msra.mxu0 %v768
    %3835 = vmatprep.subr.mxu0 %v773
    %3836 = vmatpush1.msra.mxu0 %v772
    %3837 = vmatprep.subr.mxu0 %v777
    %3838 = vmatpush1.msra.mxu0 %v776
    %3839 = vmatprep.subr.mxu0 %v781
    %3840 = vmatpush1.msra.mxu0 %v780
    %3841 = vmatprep.subr.mxu0 %v785
    %3842 = vmatpush1.msra.mxu0 %v784
    %3843 = vmatprep.subr.mxu0 %v789
    %3844 = vmatpush1.msra.mxu0 %v788
    %3845 = vmatprep.subr.mxu0 %v793
    %3846 = vmatpush1.msra.mxu0 %v792
    %3847 = vmatprep.subr.mxu0 %v797
    %3848 = vmatpush1.msra.mxu0 %v796
    %3849 = vmatprep.subr.mxu0 %v801
    %3850 = vmatpush1.msra.mxu0 %v800
    %3851 = vmatprep.subr.mxu0 %v805
    %3852 = vmatpush1.msra.mxu0 %v804
    %3853 = vmatprep.subr.mxu0 %v809
    %3854 = vmatpush1.msra.mxu0 %v808
    %3855 = vmatprep.subr.mxu0 %v813
    %3856 = vmatpush1.msra.mxu0 %v812
    %3857 = vmatprep.subr.mxu0 %v817
    %3858 = vmatpush1.msra.mxu0 %v816
    %3859 = vmatprep.subr.mxu0 0.0
    %3860 = vmatpush1.msra.mxu0 0.0
    %3861 = vmatprep.subr.mxu0 0.0
    %3862 = vmatpush1.msra.mxu0 0.0
    %3863 = vmatprep.subr.mxu0 0.0
    %3864 = vmatpush1.msra.mxu0 0.0
    %3865 = vmatprep.subr.mxu0 0.0
    %3866 = vmatpush1.msra.mxu0 0.0
    %3867 = vmatprep.subr.mxu0 0.0
    %3868 = vmatpush1.msra.mxu0 0.0
    %3869 = vmatprep.subr.mxu0 0.0
    %3870 = vmatpush1.msra.mxu0 0.0
    %3871 = vmatprep.subr.mxu0 0.0
    %3872 = vmatpush1.msra.mxu0 0.0
    %3873 = vmatprep.subr.mxu0 0.0
    %3874 = vmatpush1.msra.mxu0 0.0
    %3875 = vmatprep.subr.mxu0 0.0
    %3876 = vmatpush1.msra.mxu0 0.0
    %3877 = vmatprep.subr.mxu0 0.0
    %3878 = vmatpush1.msra.mxu0 0.0
    %3879 = vmatprep.subr.mxu0 0.0
    %3880 = vmatpush1.msra.mxu0 0.0
    %3881 = vmatprep.subr.mxu0 0.0
    %3882 = vmatpush1.msra.mxu0 0.0
    %3883 = vmatprep.subr.mxu0 0.0
    %3884 = vmatpush1.msra.mxu0 0.0
    %3885 = vmatprep.subr.mxu0 0.0
    %3886 = vmatpush1.msra.mxu0 0.0
    %3887 = vmatprep.subr.mxu0 0.0
    %3888 = vmatpush1.msra.mxu0 0.0
    %3889 = vmatprep.subr.mxu0 0.0
    %3890 = vmatpush1.msra.mxu0 0.0
    %3891 = vmatprep.mubr.f32.mxu0 0.0
    %3892 = vmatmul.mubr.f32.gmra.mrb[0].mxu0 %v3581
    %v3893 = vpop.f32.mrb[0].mxu0
    %v3894 = vadd.f32 0.0, %v3893
    %v3895 = vpop.f32.mrb[0].mxu0
    %v3896 = vadd.f32 0.0, %v3895
    %3897 = vdwg.mxu0
    %3898 = vmatprep.subr.mxu0 %v691
    %3899 = vmatpush1.msra.mxu0 %v690
    %3900 = vmatprep.subr.mxu0 %v695
    %3901 = vmatpush1.msra.mxu0 %v694
    %3902 = vmatprep.subr.mxu0 %v699
    %3903 = vmatpush1.msra.mxu0 %v698
    %3904 = vmatprep.subr.mxu0 %v703
    %3905 = vmatpush1.msra.mxu0 %v702
    %3906 = vmatprep.subr.mxu0 %v707
    %3907 = vmatpush1.msra.mxu0 %v706
    %3908 = vmatprep.subr.mxu0 %v711
    %3909 = vmatpush1.msra.mxu0 %v710
    %3910 = vmatprep.subr.mxu0 %v715
    %3911 = vmatpush1.msra.mxu0 %v714
    %3912 = vmatprep.subr.mxu0 %v719
    %3913 = vmatpush1.msra.mxu0 %v718
    %3914 = vmatprep.subr.mxu0 %v723
    %3915 = vmatpush1.msra.mxu0 %v722
    %3916 = vmatprep.subr.mxu0 %v727
    %3917 = vmatpush1.msra.mxu0 %v726
    %3918 = vmatprep.subr.mxu0 %v731
    %3919 = vmatpush1.msra.mxu0 %v730
    %3920 = vmatprep.subr.mxu0 %v735
    %3921 = vmatpush1.msra.mxu0 %v734
    %3922 = vmatprep.subr.mxu0 %v739
    %3923 = vmatpush1.msra.mxu0 %v738
    %3924 = vmatprep.subr.mxu0 %v743
    %3925 = vmatpush1.msra.mxu0 %v742
    %3926 = vmatprep.subr.mxu0 %v747
    %3927 = vmatpush1.msra.mxu0 %v746
    %3928 = vmatprep.subr.mxu0 %v751
    %3929 = vmatpush1.msra.mxu0 %v750
    %3930 = vmatprep.subr.mxu0 0.0
    %3931 = vmatpush1.msra.mxu0 0.0
    %3932 = vmatprep.subr.mxu0 0.0
    %3933 = vmatpush1.msra.mxu0 0.0
    %3934 = vmatprep.subr.mxu0 0.0
    %3935 = vmatpush1.msra.mxu0 0.0
    %3936 = vmatprep.subr.mxu0 0.0
    %3937 = vmatpush1.msra.mxu0 0.0
    %3938 = vmatprep.subr.mxu0 0.0
    %3939 = vmatpush1.msra.mxu0 0.0
    %3940 = vmatprep.subr.mxu0 0.0
    %3941 = vmatpush1.msra.mxu0 0.0
    %3942 = vmatprep.subr.mxu0 0.0
    %3943 = vmatpush1.msra.mxu0 0.0
    %3944 = vmatprep.subr.mxu0 0.0
    %3945 = vmatpush1.msra.mxu0 0.0
    %3946 = vmatprep.subr.mxu0 0.0
    %3947 = vmatpush1.msra.mxu0 0.0
    %3948 = vmatprep.subr.mxu0 0.0
    %3949 = vmatpush1.msra.mxu0 0.0
    %3950 = vmatprep.subr.mxu0 0.0
    %3951 = vmatpush1.msra.mxu0 0.0
    %3952 = vmatprep.subr.mxu0 0.0
    %3953 = vmatpush1.msra.mxu0 0.0
    %3954 = vmatprep.subr.mxu0 0.0
    %3955 = vmatpush1.msra.mxu0 0.0
    %3956 = vmatprep.subr.mxu0 0.0
    %3957 = vmatpush1.msra.mxu0 0.0
    %3958 = vmatprep.subr.mxu0 0.0
    %3959 = vmatpush1.msra.mxu0 0.0
    %3960 = vmatprep.subr.mxu0 0.0
    %3961 = vmatpush1.msra.mxu0 0.0
    %3962 = vmatprep.mubr.f32.mxu0 0.0
    %3963 = vmatmul.mubr.f32.gmra.mrb[0].mxu0 %v3755
    %v3964 = vpop.f32.mrb[0].mxu0
    %v3965 = vadd.f32 %v3823, %v3964
    %v3966 = vpop.f32.mrb[0].mxu0
    %v3967 = vadd.f32 %v3825, %v3966
    %3968 = vdwg.mxu0
    %3969 = vmatprep.subr.mxu0 %v693
    %3970 = vmatpush1.msra.mxu0 %v692
    %3971 = vmatprep.subr.mxu0 %v697
    %3972 = vmatpush1.msra.mxu0 %v696
    %3973 = vmatprep.subr.mxu0 %v701
    %3974 = vmatpush1.msra.mxu0 %v700
    %3975 = vmatprep.subr.mxu0 %v705
    %3976 = vmatpush1.msra.mxu0 %v704
    %3977 = vmatprep.subr.mxu0 %v709
    %3978 = vmatpush1.msra.mxu0 %v708
    %3979 = vmatprep.subr.mxu0 %v713
    %3980 = vmatpush1.msra.mxu0 %v712
    %3981 = vmatprep.subr.mxu0 %v717
    %3982 = vmatpush1.msra.mxu0 %v716
    %3983 = vmatprep.subr.mxu0 %v721
    %3984 = vmatpush1.msra.mxu0 %v720
    %3985 = vmatprep.subr.mxu0 %v725
    %3986 = vmatpush1.msra.mxu0 %v724
    %3987 = vmatprep.subr.mxu0 %v729
    %3988 = vmatpush1.msra.mxu0 %v728
    %3989 = vmatprep.subr.mxu0 %v733
    %3990 = vmatpush1.msra.mxu0 %v732
    %3991 = vmatprep.subr.mxu0 %v737
    %3992 = vmatpush1.msra.mxu0 %v736
    %3993 = vmatprep.subr.mxu0 %v741
    %3994 = vmatpush1.msra.mxu0 %v740
    %3995 = vmatprep.subr.mxu0 %v745
    %3996 = vmatpush1.msra.mxu0 %v744
    %3997 = vmatprep.subr.mxu0 %v749
    %3998 = vmatpush1.msra.mxu0 %v748
    %3999 = vmatprep.subr.mxu0 %v753
    %4000 = vmatpush1.msra.mxu0 %v752
    %4001 = vmatprep.subr.mxu0 0.0
    %4002 = vmatpush1.msra.mxu0 0.0
    %4003 = vmatprep.subr.mxu0 0.0
    %4004 = vmatpush1.msra.mxu0 0.0
    %4005 = vmatprep.subr.mxu0 0.0
    %4006 = vmatpush1.msra.mxu0 0.0
    %4007 = vmatprep.subr.mxu0 0.0
    %4008 = vmatpush1.msra.mxu0 0.0
    %4009 = vmatprep.subr.mxu0 0.0
    %4010 = vmatpush1.msra.mxu0 0.0
    %4011 = vmatprep.subr.mxu0 0.0
    %4012 = vmatpush1.msra.mxu0 0.0
    %4013 = vmatprep.subr.mxu0 0.0
    %4014 = vmatpush1.msra.mxu0 0.0
    %4015 = vmatprep.subr.mxu0 0.0
    %4016 = vmatpush1.msra.mxu0 0.0
    %4017 = vmatprep.subr.mxu0 0.0
    %4018 = vmatpush1.msra.mxu0 0.0
    %4019 = vmatprep.subr.mxu0 0.0
    %4020 = vmatpush1.msra.mxu0 0.0
    %4021 = vmatprep.subr.mxu0 0.0
    %4022 = vmatpush1.msra.mxu0 0.0
    %4023 = vmatprep.subr.mxu0 0.0
    %4024 = vmatpush1.msra.mxu0 0.0
    %4025 = vmatprep.subr.mxu0 0.0
    %4026 = vmatpush1.msra.mxu0 0.0
    %4027 = vmatprep.subr.mxu0 0.0
    %4028 = vmatpush1.msra.mxu0 0.0
    %4029 = vmatprep.subr.mxu0 0.0
    %4030 = vmatpush1.msra.mxu0 0.0
    %4031 = vmatprep.subr.mxu0 0.0
    %4032 = vmatpush1.msra.mxu0 0.0
    %4033 = vmatprep.mubr.f32.mxu0 0.0
    %4034 = vmatmul.mubr.f32.gmra.mrb[0].mxu0 %v3755
    %v4035 = vpop.f32.mrb[0].mxu0
    %v4036 = vadd.f32 %v3894, %v4035
    %v4037 = vpop.f32.mrb[0].mxu0
    %v4038 = vadd.f32 %v3896, %v4037
    %4039 = vdwg.mxu0
    %v4040 = vadd.f32 %v3965, %v1107
    %v4041 = vadd.f32 %v3967, %v1111
    %v4042 = vadd.f32 %v4036, %v1115
    %v4043 = vadd.f32 %v4038, %v1119
    %v4044 = vxor.u32 %v4040, 2147483648
    %v4045 = vxor.u32 %v4041, 2147483648
    %v4046 = vxor.u32 %v4042, 2147483648
    %v4047 = vmul.f32 %v4044, 1.442695
    %v4048 = vpow.pop %v4047
    %v4049 = vmul.f32 %v4045, 1.442695
    %v4050 = vpow.pop %v4049
    %v4051 = vmul.f32 %v4046, 1.442695
    %v4052 = vpow.pop %v4051
    %v4053 = vadd.f32 %v4048, 1.0
    %v4054 = vadd.f32 %v4050, 1.0
    %v4055 = vadd.f32 %v4052, 1.0
    %v4056 = vrcp.pop %v4053
    %v4057 = vmul.f32 1.0, %v4056
    %v4058 = vrcp.pop %v4054
    %v4059 = vmul.f32 1.0, %v4058
    %v4060 = vrcp.pop %v4055
    %v4061 = vmul.f32 1.0, %v4060
    %v4062 = vtanh.pop %v4043
    %v4063 = vmul.f32 %v4059, %v3579
    %v4064 = vmul.f32 %v4057, %v4062
    %v4065 = vadd.f32 %v4063, %v4064
    %v4066 = vtanh.pop %v4065
    %v4067 = vmul.f32 %v4061, %v4066
    %v4068 = vld [vmem:[#allocation2 + $0xe0] sm:$0xff]
    %v4069 = vld [vmem:[#allocation2 + $0xe8] sm:$0xff]
    %v4070 = vld [vmem:[#allocation2 + $0xf0] sm:$0xff]
    %v4071 = vld [vmem:[#allocation2 + $0xf8] sm:$0xff]
    %4072 = vmatprep.subr.mxu0 %v457
    %4073 = vmatpush1.msra.mxu0 %v456
    %4074 = vmatprep.subr.mxu0 %v461
    %4075 = vmatpush1.msra.mxu0 %v460
    %4076 = vmatprep.subr.mxu0 %v465
    %4077 = vmatpush1.msra.mxu0 %v464
    %4078 = vmatprep.subr.mxu0 %v469
    %4079 = vmatpush1.msra.mxu0 %v468
    %4080 = vmatprep.subr.mxu0 %v473
    %4081 = vmatpush1.msra.mxu0 %v472
    %4082 = vmatprep.subr.mxu0 %v477
    %4083 = vmatpush1.msra.mxu0 %v476
    %4084 = vmatprep.subr.mxu0 %v481
    %4085 = vmatpush1.msra.mxu0 %v480
    %4086 = vmatprep.subr.mxu0 %v485
    %4087 = vmatpush1.msra.mxu0 %v484
    %4088 = vmatprep.subr.mxu0 %v489
    %4089 = vmatpush1.msra.mxu0 %v488
    %4090 = vmatprep.subr.mxu0 %v493
    %4091 = vmatpush1.msra.mxu0 %v492
    %4092 = vmatprep.subr.mxu0 %v497
    %4093 = vmatpush1.msra.mxu0 %v496
    %4094 = vmatprep.subr.mxu0 %v501
    %4095 = vmatpush1.msra.mxu0 %v500
    %4096 = vmatprep.subr.mxu0 %v505
    %4097 = vmatpush1.msra.mxu0 %v504
    %4098 = vmatprep.subr.mxu0 %v509
    %4099 = vmatpush1.msra.mxu0 %v508
    %4100 = vmatprep.subr.mxu0 %v513
    %4101 = vmatpush1.msra.mxu0 %v512
    %4102 = vmatprep.subr.mxu0 %v517
    %4103 = vmatpush1.msra.mxu0 %v516
    %4104 = vmatprep.subr.mxu0 0.0
    %4105 = vmatpush1.msra.mxu0 0.0
    %4106 = vmatprep.subr.mxu0 0.0
    %4107 = vmatpush1.msra.mxu0 0.0
    %4108 = vmatprep.subr.mxu0 0.0
    %4109 = vmatpush1.msra.mxu0 0.0
    %4110 = vmatprep.subr.mxu0 0.0
    %4111 = vmatpush1.msra.mxu0 0.0
    %4112 = vmatprep.subr.mxu0 0.0
    %4113 = vmatpush1.msra.mxu0 0.0
    %4114 = vmatprep.subr.mxu0 0.0
    %4115 = vmatpush1.msra.mxu0 0.0
    %4116 = vmatprep.subr.mxu0 0.0
    %4117 = vmatpush1.msra.mxu0 0.0
    %4118 = vmatprep.subr.mxu0 0.0
    %4119 = vmatpush1.msra.mxu0 0.0
    %4120 = vmatprep.subr.mxu0 0.0
    %4121 = vmatpush1.msra.mxu0 0.0
    %4122 = vmatprep.subr.mxu0 0.0
    %4123 = vmatpush1.msra.mxu0 0.0
    %4124 = vmatprep.subr.mxu0 0.0
    %4125 = vmatpush1.msra.mxu0 0.0
    %4126 = vmatprep.subr.mxu0 0.0
    %4127 = vmatpush1.msra.mxu0 0.0
    %4128 = vmatprep.subr.mxu0 0.0
    %4129 = vmatpush1.msra.mxu0 0.0
    %4130 = vmatprep.subr.mxu0 0.0
    %4131 = vmatpush1.msra.mxu0 0.0
    %4132 = vmatprep.subr.mxu0 0.0
    %4133 = vmatpush1.msra.mxu0 0.0
    %4134 = vmatprep.subr.mxu0 0.0
    %4135 = vmatpush1.msra.mxu0 0.0
    %4136 = vmatprep.mubr.f32.mxu0 0.0
    %4137 = vmatmul.mubr.f32.gmra.mrb[0].mxu0 %v3755
    %v4138 = vpop.f32.mrb[0].mxu0
    %v4139 = vadd.f32 0.0, %v4138
    %v4140 = vpop.f32.mrb[0].mxu0
    %v4141 = vadd.f32 0.0, %v4140
    %4142 = vdwg.mxu0
    %4143 = vmatprep.subr.mxu0 %v459
    %4144 = vmatpush1.msra.mxu0 %v458
    %4145 = vmatprep.subr.mxu0 %v463
    %4146 = vmatpush1.msra.mxu0 %v462
    %4147 = vmatprep.subr.mxu0 %v467
    %4148 = vmatpush1.msra.mxu0 %v466
    %4149 = vmatprep.subr.mxu0 %v471
    %4150 = vmatpush1.msra.mxu0 %v470
    %4151 = vmatprep.subr.mxu0 %v475
    %4152 = vmatpush1.msra.mxu0 %v474
    %4153 = vmatprep.subr.mxu0 %v479
    %4154 = vmatpush1.msra.mxu0 %v478
    %4155 = vmatprep.subr.mxu0 %v483
    %4156 = vmatpush1.msra.mxu0 %v482
    %4157 = vmatprep.subr.mxu0 %v487
    %4158 = vmatpush1.msra.mxu0 %v486
    %4159 = vmatprep.subr.mxu0 %v491
    %4160 = vmatpush1.msra.mxu0 %v490
    %4161 = vmatprep.subr.mxu0 %v495
    %4162 = vmatpush1.msra.mxu0 %v494
    %4163 = vmatprep.subr.mxu0 %v499
    %4164 = vmatpush1.msra.mxu0 %v498
    %4165 = vmatprep.subr.mxu0 %v503
    %4166 = vmatpush1.msra.mxu0 %v502
    %4167 = vmatprep.subr.mxu0 %v507
    %4168 = vmatpush1.msra.mxu0 %v506
    %4169 = vmatprep.subr.mxu0 %v511
    %4170 = vmatpush1.msra.mxu0 %v510
    %4171 = vmatprep.subr.mxu0 %v515
    %4172 = vmatpush1.msra.mxu0 %v514
    %4173 = vmatprep.subr.mxu0 %v519
    %4174 = vmatpush1.msra.mxu0 %v518
    %4175 = vmatprep.subr.mxu0 0.0
    %4176 = vmatpush1.msra.mxu0 0.0
    %4177 = vmatprep.subr.mxu0 0.0
    %4178 = vmatpush1.msra.mxu0 0.0
    %4179 = vmatprep.subr.mxu0 0.0
    %4180 = vmatpush1.msra.mxu0 0.0
    %4181 = vmatprep.subr.mxu0 0.0
    %4182 = vmatpush1.msra.mxu0 0.0
    %4183 = vmatprep.subr.mxu0 0.0
    %4184 = vmatpush1.msra.mxu0 0.0
    %4185 = vmatprep.subr.mxu0 0.0
    %4186 = vmatpush1.msra.mxu0 0.0
    %4187 = vmatprep.subr.mxu0 0.0
    %4188 = vmatpush1.msra.mxu0 0.0
    %4189 = vmatprep.subr.mxu0 0.0
    %4190 = vmatpush1.msra.mxu0 0.0
    %4191 = vmatprep.subr.mxu0 0.0
    %4192 = vmatpush1.msra.mxu0 0.0
    %4193 = vmatprep.subr.mxu0 0.0
    %4194 = vmatpush1.msra.mxu0 0.0
    %4195 = vmatprep.subr.mxu0 0.0
    %4196 = vmatpush1.msra.mxu0 0.0
    %4197 = vmatprep.subr.mxu0 0.0
    %4198 = vmatpush1.msra.mxu0 0.0
    %4199 = vmatprep.subr.mxu0 0.0
    %4200 = vmatpush1.msra.mxu0 0.0
    %4201 = vmatprep.subr.mxu0 0.0
    %4202 = vmatpush1.msra.mxu0 0.0
    %4203 = vmatprep.subr.mxu0 0.0
    %4204 = vmatpush1.msra.mxu0 0.0
    %4205 = vmatprep.subr.mxu0 0.0
    %4206 = vmatpush1.msra.mxu0 0.0
    %4207 = vmatprep.mubr.f32.mxu0 0.0
    %4208 = vmatmul.mubr.f32.gmra.mrb[0].mxu0 %v3755
    %v4209 = vpop.f32.mrb[0].mxu0
    %v4210 = vadd.f32 0.0, %v4209
    %v4211 = vpop.f32.mrb[0].mxu0
    %v4212 = vadd.f32 0.0, %v4211
    %4213 = vdwg.mxu0
    %v4214 = vadd.f32 %v4068, %v4139
    %v4215 = vadd.f32 %v4069, %v4141
    %v4216 = vadd.f32 %v4070, %v4210
    %v4217 = vadd.f32 %v4071, %v4212
    %v4218 = vxor.u32 %v4214, 2147483648
    %v4219 = vxor.u32 %v4215, 2147483648
    %v4220 = vxor.u32 %v4216, 2147483648
    %v4221 = vmul.f32 %v4218, 1.442695
    %v4222 = vpow.pop %v4221
    %v4223 = vmul.f32 %v4219, 1.442695
    %v4224 = vpow.pop %v4223
    %v4225 = vmul.f32 %v4220, 1.442695
    %v4226 = vpow.pop %v4225
    %v4227 = vadd.f32 %v4222, 1.0
    %v4228 = vadd.f32 %v4224, 1.0
    %v4229 = vadd.f32 %v4226, 1.0
    %v4230 = vrcp.pop %v4227
    %v4231 = vmul.f32 1.0, %v4230
    %v4232 = vrcp.pop %v4228
    %v4233 = vmul.f32 1.0, %v4232
    %v4234 = vrcp.pop %v4229
    %v4235 = vmul.f32 1.0, %v4234
    %v4236 = vtanh.pop %v4217
    %v4237 = vmul.f32 %v4233, %v3753
    %v4238 = vmul.f32 %v4231, %v4236
    %v4239 = vadd.f32 %v4237, %v4238
    %v4240 = vtanh.pop %v4239
    %v4241 = vmul.f32 %v4235, %v4240
    %4242 = vmatprep.subr.mxu0 %v755
    %4243 = vmatpush1.msra.mxu0 %v754
    %4244 = vmatprep.subr.mxu0 %v759
    %4245 = vmatpush1.msra.mxu0 %v758
    %4246 = vmatprep.subr.mxu0 %v763
    %4247 = vmatpush1.msra.mxu0 %v762
    %4248 = vmatprep.subr.mxu0 %v767
    %4249 = vmatpush1.msra.mxu0 %v766
    %4250 = vmatprep.subr.mxu0 %v771
    %4251 = vmatpush1.msra.mxu0 %v770
    %4252 = vmatprep.subr.mxu0 %v775
    %4253 = vmatpush1.msra.mxu0 %v774
    %4254 = vmatprep.subr.mxu0 %v779
    %4255 = vmatpush1.msra.mxu0 %v778
    %4256 = vmatprep.subr.mxu0 %v783
    %4257 = vmatpush1.msra.mxu0 %v782
    %4258 = vmatprep.subr.mxu0 %v787
    %4259 = vmatpush1.msra.mxu0 %v786
    %4260 = vmatprep.subr.mxu0 %v791
    %4261 = vmatpush1.msra.mxu0 %v790
    %4262 = vmatprep.subr.mxu0 %v795
    %4263 = vmatpush1.msra.mxu0 %v794
    %4264 = vmatprep.subr.mxu0 %v799
    %4265 = vmatpush1.msra.mxu0 %v798
    %4266 = vmatprep.subr.mxu0 %v803
    %4267 = vmatpush1.msra.mxu0 %v802
    %4268 = vmatprep.subr.mxu0 %v807
    %4269 = vmatpush1.msra.mxu0 %v806
    %4270 = vmatprep.subr.mxu0 %v811
    %4271 = vmatpush1.msra.mxu0 %v810
    %4272 = vmatprep.subr.mxu0 %v815
    %4273 = vmatpush1.msra.mxu0 %v814
    %4274 = vmatprep.subr.mxu0 0.0
    %4275 = vmatpush1.msra.mxu0 0.0
    %4276 = vmatprep.subr.mxu0 0.0
    %4277 = vmatpush1.msra.mxu0 0.0
    %4278 = vmatprep.subr.mxu0 0.0
    %4279 = vmatpush1.msra.mxu0 0.0
    %4280 = vmatprep.subr.mxu0 0.0
    %4281 = vmatpush1.msra.mxu0 0.0
    %4282 = vmatprep.subr.mxu0 0.0
    %4283 = vmatpush1.msra.mxu0 0.0
    %4284 = vmatprep.subr.mxu0 0.0
    %4285 = vmatpush1.msra.mxu0 0.0
    %4286 = vmatprep.subr.mxu0 0.0
    %4287 = vmatpush1.msra.mxu0 0.0
    %4288 = vmatprep.subr.mxu0 0.0
    %4289 = vmatpush1.msra.mxu0 0.0
    %4290 = vmatprep.subr.mxu0 0.0
    %4291 = vmatpush1.msra.mxu0 0.0
    %4292 = vmatprep.subr.mxu0 0.0
    %4293 = vmatpush1.msra.mxu0 0.0
    %4294 = vmatprep.subr.mxu0 0.0
    %4295 = vmatpush1.msra.mxu0 0.0
    %4296 = vmatprep.subr.mxu0 0.0
    %4297 = vmatpush1.msra.mxu0 0.0
    %4298 = vmatprep.subr.mxu0 0.0
    %4299 = vmatpush1.msra.mxu0 0.0
    %4300 = vmatprep.subr.mxu0 0.0
    %4301 = vmatpush1.msra.mxu0 0.0
    %4302 = vmatprep.subr.mxu0 0.0
    %4303 = vmatpush1.msra.mxu0 0.0
    %4304 = vmatprep.subr.mxu0 0.0
    %4305 = vmatpush1.msra.mxu0 0.0
    %4306 = vmatprep.mubr.f32.mxu0 0.0
    %4307 = vmatmul.mubr.f32.gmra.mrb[0].mxu0 %v4067
    %v4308 = vpop.f32.mrb[0].mxu0
    %v4309 = vadd.f32 0.0, %v4308
    %v4310 = vpop.f32.mrb[0].mxu0
    %v4311 = vadd.f32 0.0, %v4310
    %4312 = vdwg.mxu0
    %4313 = vmatprep.subr.mxu0 %v757
    %4314 = vmatpush1.msra.mxu0 %v756
    %4315 = vmatprep.subr.mxu0 %v761
    %4316 = vmatpush1.msra.mxu0 %v760
    %4317 = vmatprep.subr.mxu0 %v765
    %4318 = vmatpush1.msra.mxu0 %v764
    %4319 = vmatprep.subr.mxu0 %v769
    %4320 = vmatpush1.msra.mxu0 %v768
    %4321 = vmatprep.subr.mxu0 %v773
    %4322 = vmatpush1.msra.mxu0 %v772
    %4323 = vmatprep.subr.mxu0 %v777
    %4324 = vmatpush1.msra.mxu0 %v776
    %4325 = vmatprep.subr.mxu0 %v781
    %4326 = vmatpush1.msra.mxu0 %v780
    %4327 = vmatprep.subr.mxu0 %v785
    %4328 = vmatpush1.msra.mxu0 %v784
    %4329 = vmatprep.subr.mxu0 %v789
    %4330 = vmatpush1.msra.mxu0 %v788
    %4331 = vmatprep.subr.mxu0 %v793
    %4332 = vmatpush1.msra.mxu0 %v792
    %4333 = vmatprep.subr.mxu0 %v797
    %4334 = vmatpush1.msra.mxu0 %v796
    %4335 = vmatprep.subr.mxu0 %v801
    %4336 = vmatpush1.msra.mxu0 %v800
    %4337 = vmatprep.subr.mxu0 %v805
    %4338 = vmatpush1.msra.mxu0 %v804
    %4339 = vmatprep.subr.mxu0 %v809
    %4340 = vmatpush1.msra.mxu0 %v808
    %4341 = vmatprep.subr.mxu0 %v813
    %4342 = vmatpush1.msra.mxu0 %v812
    %4343 = vmatprep.subr.mxu0 %v817
    %4344 = vmatpush1.msra.mxu0 %v816
    %4345 = vmatprep.subr.mxu0 0.0
    %4346 = vmatpush1.msra.mxu0 0.0
    %4347 = vmatprep.subr.mxu0 0.0
    %4348 = vmatpush1.msra.mxu0 0.0
    %4349 = vmatprep.subr.mxu0 0.0
    %4350 = vmatpush1.msra.mxu0 0.0
    %4351 = vmatprep.subr.mxu0 0.0
    %4352 = vmatpush1.msra.mxu0 0.0
    %4353 = vmatprep.subr.mxu0 0.0
    %4354 = vmatpush1.msra.mxu0 0.0
    %4355 = vmatprep.subr.mxu0 0.0
    %4356 = vmatpush1.msra.mxu0 0.0
    %4357 = vmatprep.subr.mxu0 0.0
    %4358 = vmatpush1.msra.mxu0 0.0
    %4359 = vmatprep.subr.mxu0 0.0
    %4360 = vmatpush1.msra.mxu0 0.0
    %4361 = vmatprep.subr.mxu0 0.0
    %4362 = vmatpush1.msra.mxu0 0.0
    %4363 = vmatprep.subr.mxu0 0.0
    %4364 = vmatpush1.msra.mxu0 0.0
    %4365 = vmatprep.subr.mxu0 0.0
    %4366 = vmatpush1.msra.mxu0 0.0
    %4367 = vmatprep.subr.mxu0 0.0
    %4368 = vmatpush1.msra.mxu0 0.0
    %4369 = vmatprep.subr.mxu0 0.0
    %4370 = vmatpush1.msra.mxu0 0.0
    %4371 = vmatprep.subr.mxu0 0.0
    %4372 = vmatpush1.msra.mxu0 0.0
    %4373 = vmatprep.subr.mxu0 0.0
    %4374 = vmatpush1.msra.mxu0 0.0
    %4375 = vmatprep.subr.mxu0 0.0
    %4376 = vmatpush1.msra.mxu0 0.0
    %4377 = vmatprep.mubr.f32.mxu0 0.0
    %4378 = vmatmul.mubr.f32.gmra.mrb[0].mxu0 %v4067
    %v4379 = vpop.f32.mrb[0].mxu0
    %v4380 = vadd.f32 0.0, %v4379
    %v4381 = vpop.f32.mrb[0].mxu0
    %v4382 = vadd.f32 0.0, %v4381
    %4383 = vdwg.mxu0
    %4384 = vmatprep.subr.mxu0 %v691
    %4385 = vmatpush1.msra.mxu0 %v690
    %4386 = vmatprep.subr.mxu0 %v695
    %4387 = vmatpush1.msra.mxu0 %v694
    %4388 = vmatprep.subr.mxu0 %v699
    %4389 = vmatpush1.msra.mxu0 %v698
    %4390 = vmatprep.subr.mxu0 %v703
    %4391 = vmatpush1.msra.mxu0 %v702
    %4392 = vmatprep.subr.mxu0 %v707
    %4393 = vmatpush1.msra.mxu0 %v706
    %4394 = vmatprep.subr.mxu0 %v711
    %4395 = vmatpush1.msra.mxu0 %v710
    %4396 = vmatprep.subr.mxu0 %v715
    %4397 = vmatpush1.msra.mxu0 %v714
    %4398 = vmatprep.subr.mxu0 %v719
    %4399 = vmatpush1.msra.mxu0 %v718
    %4400 = vmatprep.subr.mxu0 %v723
    %4401 = vmatpush1.msra.mxu0 %v722
    %4402 = vmatprep.subr.mxu0 %v727
    %4403 = vmatpush1.msra.mxu0 %v726
    %4404 = vmatprep.subr.mxu0 %v731
    %4405 = vmatpush1.msra.mxu0 %v730
    %4406 = vmatprep.subr.mxu0 %v735
    %4407 = vmatpush1.msra.mxu0 %v734
    %4408 = vmatprep.subr.mxu0 %v739
    %4409 = vmatpush1.msra.mxu0 %v738
    %4410 = vmatprep.subr.mxu0 %v743
    %4411 = vmatpush1.msra.mxu0 %v742
    %4412 = vmatprep.subr.mxu0 %v747
    %4413 = vmatpush1.msra.mxu0 %v746
    %4414 = vmatprep.subr.mxu0 %v751
    %4415 = vmatpush1.msra.mxu0 %v750
    %4416 = vmatprep.subr.mxu0 0.0
    %4417 = vmatpush1.msra.mxu0 0.0
    %4418 = vmatprep.subr.mxu0 0.0
    %4419 = vmatpush1.msra.mxu0 0.0
    %4420 = vmatprep.subr.mxu0 0.0
    %4421 = vmatpush1.msra.mxu0 0.0
    %4422 = vmatprep.subr.mxu0 0.0
    %4423 = vmatpush1.msra.mxu0 0.0
    %4424 = vmatprep.subr.mxu0 0.0
    %4425 = vmatpush1.msra.mxu0 0.0
    %4426 = vmatprep.subr.mxu0 0.0
    %4427 = vmatpush1.msra.mxu0 0.0
    %4428 = vmatprep.subr.mxu0 0.0
    %4429 = vmatpush1.msra.mxu0 0.0
    %4430 = vmatprep.subr.mxu0 0.0
    %4431 = vmatpush1.msra.mxu0 0.0
    %4432 = vmatprep.subr.mxu0 0.0
    %4433 = vmatpush1.msra.mxu0 0.0
    %4434 = vmatprep.subr.mxu0 0.0
    %4435 = vmatpush1.msra.mxu0 0.0
    %4436 = vmatprep.subr.mxu0 0.0
    %4437 = vmatpush1.msra.mxu0 0.0
    %4438 = vmatprep.subr.mxu0 0.0
    %4439 = vmatpush1.msra.mxu0 0.0
    %4440 = vmatprep.subr.mxu0 0.0
    %4441 = vmatpush1.msra.mxu0 0.0
    %4442 = vmatprep.subr.mxu0 0.0
    %4443 = vmatpush1.msra.mxu0 0.0
    %4444 = vmatprep.subr.mxu0 0.0
    %4445 = vmatpush1.msra.mxu0 0.0
    %4446 = vmatprep.subr.mxu0 0.0
    %4447 = vmatpush1.msra.mxu0 0.0
    %4448 = vmatprep.mubr.f32.mxu0 0.0
    %4449 = vmatmul.mubr.f32.gmra.mrb[0].mxu0 %v4241
    %v4450 = vpop.f32.mrb[0].mxu0
    %v4451 = vadd.f32 %v4309, %v4450
    %v4452 = vpop.f32.mrb[0].mxu0
    %v4453 = vadd.f32 %v4311, %v4452
    %4454 = vdwg.mxu0
    %4455 = vmatprep.subr.mxu0 %v693
    %4456 = vmatpush1.msra.mxu0 %v692
    %4457 = vmatprep.subr.mxu0 %v697
    %4458 = vmatpush1.msra.mxu0 %v696
    %4459 = vmatprep.subr.mxu0 %v701
    %4460 = vmatpush1.msra.mxu0 %v700
    %4461 = vmatprep.subr.mxu0 %v705
    %4462 = vmatpush1.msra.mxu0 %v704
    %4463 = vmatprep.subr.mxu0 %v709
    %4464 = vmatpush1.msra.mxu0 %v708
    %4465 = vmatprep.subr.mxu0 %v713
    %4466 = vmatpush1.msra.mxu0 %v712
    %4467 = vmatprep.subr.mxu0 %v717
    %4468 = vmatpush1.msra.mxu0 %v716
    %4469 = vmatprep.subr.mxu0 %v721
    %4470 = vmatpush1.msra.mxu0 %v720
    %4471 = vmatprep.subr.mxu0 %v725
    %4472 = vmatpush1.msra.mxu0 %v724
    %4473 = vmatprep.subr.mxu0 %v729
    %4474 = vmatpush1.msra.mxu0 %v728
    %4475 = vmatprep.subr.mxu0 %v733
    %4476 = vmatpush1.msra.mxu0 %v732
    %4477 = vmatprep.subr.mxu0 %v737
    %4478 = vmatpush1.msra.mxu0 %v736
    %4479 = vmatprep.subr.mxu0 %v741
    %4480 = vmatpush1.msra.mxu0 %v740
    %4481 = vmatprep.subr.mxu0 %v745
    %4482 = vmatpush1.msra.mxu0 %v744
    %4483 = vmatprep.subr.mxu0 %v749
    %4484 = vmatpush1.msra.mxu0 %v748
    %4485 = vmatprep.subr.mxu0 %v753
    %4486 = vmatpush1.msra.mxu0 %v752
    %4487 = vmatprep.subr.mxu0 0.0
    %4488 = vmatpush1.msra.mxu0 0.0
    %4489 = vmatprep.subr.mxu0 0.0
    %4490 = vmatpush1.msra.mxu0 0.0
    %4491 = vmatprep.subr.mxu0 0.0
    %4492 = vmatpush1.msra.mxu0 0.0
    %4493 = vmatprep.subr.mxu0 0.0
    %4494 = vmatpush1.msra.mxu0 0.0
    %4495 = vmatprep.subr.mxu0 0.0
    %4496 = vmatpush1.msra.mxu0 0.0
    %4497 = vmatprep.subr.mxu0 0.0
    %4498 = vmatpush1.msra.mxu0 0.0
    %4499 = vmatprep.subr.mxu0 0.0
    %4500 = vmatpush1.msra.mxu0 0.0
    %4501 = vmatprep.subr.mxu0 0.0
    %4502 = vmatpush1.msra.mxu0 0.0
    %4503 = vmatprep.subr.mxu0 0.0
    %4504 = vmatpush1.msra.mxu0 0.0
    %4505 = vmatprep.subr.mxu0 0.0
    %4506 = vmatpush1.msra.mxu0 0.0
    %4507 = vmatprep.subr.mxu0 0.0
    %4508 = vmatpush1.msra.mxu0 0.0
    %4509 = vmatprep.subr.mxu0 0.0
    %4510 = vmatpush1.msra.mxu0 0.0
    %4511 = vmatprep.subr.mxu0 0.0
    %4512 = vmatpush1.msra.mxu0 0.0
    %4513 = vmatprep.subr.mxu0 0.0
    %4514 = vmatpush1.msra.mxu0 0.0
    %4515 = vmatprep.subr.mxu0 0.0
    %4516 = vmatpush1.msra.mxu0 0.0
    %4517 = vmatprep.subr.mxu0 0.0
    %4518 = vmatpush1.msra.mxu0 0.0
    %4519 = vmatprep.mubr.f32.mxu0 0.0
    %4520 = vmatmul.mubr.f32.gmra.mrb[0].mxu0 %v4241
    %v4521 = vpop.f32.mrb[0].mxu0
    %v4522 = vadd.f32 %v4380, %v4521
    %v4523 = vpop.f32.mrb[0].mxu0
    %v4524 = vadd.f32 %v4382, %v4523
    %4525 = vdwg.mxu0
    %v4526 = vadd.f32 %v4451, %v1107
    %v4527 = vadd.f32 %v4453, %v1111
    %v4528 = vadd.f32 %v4522, %v1115
    %v4529 = vadd.f32 %v4524, %v1119
    %v4530 = vxor.u32 %v4526, 2147483648
    %v4531 = vxor.u32 %v4527, 2147483648
    %v4532 = vxor.u32 %v4528, 2147483648
    %v4533 = vmul.f32 %v4530, 1.442695
    %v4534 = vpow.pop %v4533
    %v4535 = vmul.f32 %v4531, 1.442695
    %v4536 = vpow.pop %v4535
    %v4537 = vmul.f32 %v4532, 1.442695
    %v4538 = vpow.pop %v4537
    %v4539 = vadd.f32 %v4534, 1.0
    %v4540 = vadd.f32 %v4536, 1.0
    %v4541 = vadd.f32 %v4538, 1.0
    %v4542 = vrcp.pop %v4539
    %v4543 = vmul.f32 1.0, %v4542
    %v4544 = vrcp.pop %v4540
    %v4545 = vmul.f32 1.0, %v4544
    %v4546 = vrcp.pop %v4541
    %v4547 = vmul.f32 1.0, %v4546
    %v4548 = vtanh.pop %v4529
    %v4549 = vmul.f32 %v4545, %v4065
    %v4550 = vmul.f32 %v4543, %v4548
    %v4551 = vadd.f32 %v4549, %v4550
    %v4552 = vtanh.pop %v4551
    %v4553 = vmul.f32 %v4547, %v4552
    %4554 = vst [vmem:[#allocation15] sm:$0xff] %v4241
    %4555 = vst [vmem:[#allocation17] sm:$0xff] %v4239
    %s4556 = scalar_lea.vmem [#allocation15], 8
    %4557 = vst [vmem:[%s4556] sm:$0xff] %v4553
    %s4558 = scalar_lea.vmem [#allocation17], 8
    %4559 = vst [vmem:[%s4558] sm:$0xff] %v4551
    %v4560 = vld [vmem:[%s9] sm:$0xff]
    %v4561 = vld [vmem:[%s9 + $0x8] sm:$0xff]
    %v4562 = vld [vmem:[%s9 + $0x10] sm:$0xff]
    %v4563 = vld [vmem:[%s9 + $0x18] sm:$0xff]
    %v4564 = vld [vmem:[%s9 + $0x20] sm:$0xff]
    %v4565 = vld [vmem:[%s9 + $0x28] sm:$0xff]
    %v4566 = vld [vmem:[%s9 + $0x30] sm:$0xff]
    %v4567 = vld [vmem:[%s9 + $0x38] sm:$0xff]
    %v4568 = vld [vmem:[%s9 + $0x40] sm:$0xff]
    %v4569 = vld [vmem:[%s9 + $0x48] sm:$0xff]
    %v4570 = vld [vmem:[%s9 + $0x50] sm:$0xff]
    %v4571 = vld [vmem:[%s9 + $0x58] sm:$0xff]
    %v4572 = vld [vmem:[%s9 + $0x60] sm:$0xff]
    %v4573 = vld [vmem:[%s9 + $0x68] sm:$0xff]
    %v4574 = vld [vmem:[%s9 + $0x70] sm:$0xff]
    %v4575 = vld [vmem:[%s9 + $0x78] sm:$0xff]
    %v4576 = vld [vmem:[%s10] sm:$0x1]
    %v4578 = vlaneseq
    %v4579 = vshrl.u32 %v4578, 7
    %v4580 = vsub.s32 0, %v4579
    %v4581 = vrot.slane %v4576, %v4580
    %4583 = vmatprep.subr.mxu0 0.0
    %4584 = vmatpush1.msra.mxu0 %v4560
    %4585 = vmatprep.subr.mxu0 0.0
    %4586 = vmatpush1.msra.mxu0 %v4561
    %4587 = vmatprep.subr.mxu0 0.0
    %4588 = vmatpush1.msra.mxu0 %v4562
    %4589 = vmatprep.subr.mxu0 0.0
    %4590 = vmatpush1.msra.mxu0 %v4563
    %4591 = vmatprep.subr.mxu0 0.0
    %4592 = vmatpush1.msra.mxu0 %v4564
    %4593 = vmatprep.subr.mxu0 0.0
    %4594 = vmatpush1.msra.mxu0 %v4565
    %4595 = vmatprep.subr.mxu0 0.0
    %4596 = vmatpush1.msra.mxu0 %v4566
    %4597 = vmatprep.subr.mxu0 0.0
    %4598 = vmatpush1.msra.mxu0 %v4567
    %4599 = vmatprep.subr.mxu0 0.0
    %4600 = vmatpush1.msra.mxu0 %v4568
    %4601 = vmatprep.subr.mxu0 0.0
    %4602 = vmatpush1.msra.mxu0 %v4569
    %4603 = vmatprep.subr.mxu0 0.0
    %4604 = vmatpush1.msra.mxu0 %v4570
    %4605 = vmatprep.subr.mxu0 0.0
    %4606 = vmatpush1.msra.mxu0 %v4571
    %4607 = vmatprep.subr.mxu0 0.0
    %4608 = vmatpush1.msra.mxu0 %v4572
    %4609 = vmatprep.subr.mxu0 0.0
    %4610 = vmatpush1.msra.mxu0 %v4573
    %4611 = vmatprep.subr.mxu0 0.0
    %4612 = vmatpush1.msra.mxu0 %v4574
    %4613 = vmatprep.subr.mxu0 0.0
    %4614 = vmatpush1.msra.mxu0 %v4575
    %4615 = vmatprep.subr.mxu0 0.0
    %4616 = vmatpush1.msra.mxu0 0.0
    %4617 = vmatprep.subr.mxu0 0.0
    %4618 = vmatpush1.msra.mxu0 0.0
    %4619 = vmatprep.subr.mxu0 0.0
    %4620 = vmatpush1.msra.mxu0 0.0
    %4621 = vmatprep.subr.mxu0 0.0
    %4622 = vmatpush1.msra.mxu0 0.0
    %4623 = vmatprep.subr.mxu0 0.0
    %4624 = vmatpush1.msra.mxu0 0.0
    %4625 = vmatprep.subr.mxu0 0.0
    %4626 = vmatpush1.msra.mxu0 0.0
    %4627 = vmatprep.subr.mxu0 0.0
    %4628 = vmatpush1.msra.mxu0 0.0
    %4629 = vmatprep.subr.mxu0 0.0
    %4630 = vmatpush1.msra.mxu0 0.0
    %4631 = vmatprep.subr.mxu0 0.0
    %4632 = vmatpush1.msra.mxu0 0.0
    %4633 = vmatprep.subr.mxu0 0.0
    %4634 = vmatpush1.msra.mxu0 0.0
    %4635 = vmatprep.subr.mxu0 0.0
    %4636 = vmatpush1.msra.mxu0 0.0
    %4637 = vmatprep.subr.mxu0 0.0
    %4638 = vmatpush1.msra.mxu0 0.0
    %4639 = vmatprep.subr.mxu0 0.0
    %4640 = vmatpush1.msra.mxu0 0.0
    %4641 = vmatprep.subr.mxu0 0.0
    %4642 = vmatpush1.msra.mxu0 0.0
    %4643 = vmatprep.subr.mxu0 0.0
    %4644 = vmatpush1.msra.mxu0 0.0
    %4645 = vmatprep.subr.mxu0 0.0
    %4646 = vmatpush1.msra.mxu0 0.0
    %4647 = vmatprep.mubr.f32.mxu0 0.0
    %4648 = vmatmul.mubr.f32.gmra.mrb[0].mxu0 %v4553
    %v4649 = vpop.f32.mrb[0].mxu0
    %v4650 = vadd.f32 %v4581, %v4649
    %v4651 = vpop.f32.mrb[0].mxu0
    %4652 = vdwg.mxu0
    %4653 = vst [vmem:[#allocation14] sm:$0xff] %v4650
    // Predicated region
    $region70: #{tpu_custom_call.1} parent=1 // pred_check
      _
    $region71: #{tpu_custom_call.1} parent=1 // pred_check_branch
      %4655 = sbr.rel (0) target = $region73
    $region72: #{tpu_custom_call.1} parent=1 // pred_region
      %s4657 = ssub.s32 128, 128
      %4658 = vsyncadd [#allocation5], %s4657
      %s4660 = sshll.u32 [#allocation14], 4
      %s4661 = int_to_ptr.vmem [resolvable:$true] %s4660
      %4663 = dma.vmem_to_hbm [thread:$0]  %s4661, 128, %s11, [#allocation5]
    $region73: #{tpu_custom_call.1} parent=1 // pred_fallthru
      _
    // Predicated region
    $region74: #{tpu_custom_call.1} parent=1 // pred_check
      _
    $region75: #{tpu_custom_call.1} parent=1 // pred_check_branch
      %4665 = sbr.rel (0) target = $region77
    $region76: #{tpu_custom_call.1} parent=1 // pred_region
      %s4667 = ssub.s32 256, 256
      %4668 = vsyncadd [#allocation16], %s4667
      %s4669 = sshll.u32 [#allocation15], 4
      %s4670 = int_to_ptr.vmem [resolvable:$true] %s4669
      %4675 = dma.vmem_to_hbm [thread:$0]  %s4670, 256, %s12, [#allocation16], 128, 128, 8
    $region77: #{tpu_custom_call.1} parent=1 // pred_fallthru
      _
    // Predicated region
    $region78: #{tpu_custom_call.1} parent=1 // pred_check
      _
    $region79: #{tpu_custom_call.1} parent=1 // pred_check_branch
      %4677 = sbr.rel (0) target = $region81
    $region80: #{tpu_custom_call.1} parent=1 // pred_region
      %s4679 = ssub.s32 256, 256
      %4680 = vsyncadd [#allocation16], %s4679
      %s4681 = sshll.u32 [#allocation17], 4
      %s4682 = int_to_ptr.vmem [resolvable:$true] %s4681
      %4687 = dma.vmem_to_hbm [thread:$0]  %s4682, 256, %s13, [#allocation16], 128, 128, 8
    $region81: #{tpu_custom_call.1} parent=1 // pred_fallthru
      _
    // Predicated region
    $region82: #{tpu_custom_call.1} parent=1 // pred_check
      _
    $region83: #{tpu_custom_call.1} parent=1 // pred_check_branch
      %4689 = sbr.rel (0) target = $region85
    $region84: #{tpu_custom_call.1} parent=1 // pred_region
      %4690 = dma.done [#allocation5], 128
    $region85: #{tpu_custom_call.1} parent=1 // pred_fallthru
      _
    // Predicated region
    $region86: #{tpu_custom_call.1} parent=1 // pred_check
      _
    $region87: #{tpu_custom_call.1} parent=1 // pred_check_branch
      %4692 = sbr.rel (0) target = $region89
    $region88: #{tpu_custom_call.1} parent=1 // pred_region
      %4693 = dma.done [#allocation16], 256
    $region89: #{tpu_custom_call.1} parent=1 // pred_fallthru
      _
    // Predicated region
    $region90: #{tpu_custom_call.1} parent=1 // pred_check
      _
    $region91: #{tpu_custom_call.1} parent=1 // pred_check_branch
      %4695 = sbr.rel (0) target = $region93
    $region92: #{tpu_custom_call.1} parent=1 // pred_region
      %4696 = dma.done [#allocation16], 256
    $region93: #{tpu_custom_call.1} parent=1 // pred_fallthru
      _
    %4697 = vsyncpa [#allocation4], 1
    %4698 = vsyncpa [#allocation7], 1
    %4699 = vsyncpa [#allocation10], 1
    %4700 = vsyncpa [#allocation13], 1
    %4701 = vsyncpa [#allocation5], 1
    %4702 = vsyncpa [#allocation16], 1

</llo_original>
